<compile_context>
chip_gen: v7x
topology: tpu7x:2x2x1
jax: 0.10.0
libtpu: 0.0.40
codegen_flags: <defaults>
</compile_context>

<pallas_src>
import functools

import numpy as np
import jax
import jax.numpy as jnp
from jax import lax
from jax.experimental import pallas as pl
from jax.experimental.pallas import tpu as pltpu

FS = 3          # per-pixel filter support (n_classes = 9 = 3 * 3)
FP = FS // 2    # its half width (zero padding used by F.unfold)

LANES_TARGET = 256                     # lane width target per grid program
VMEM_BUDGET = 40 * 1024 * 1024         # conservative per-program budget (fits v7x 64 MiB)


def _round_up(v, m):
    return -(-v // m) * m


def _tree_sum(terms):
    terms = list(terms)
    while len(terms) > 1:
        nxt = [terms[i] + terms[i + 1] for i in range(0, len(terms) - 1, 2)]
        if len(terms) % 2:
            nxt.append(terms[-1])
        terms = nxt
    return terms[0]


@functools.lru_cache(maxsize=None)
def _roll_src_sign():
    """Sign s so that pltpu.roll(v, (s*off) % N, axis=-1)[..., c] == v[..., c + off]."""
    try:
        x = jnp.arange(8 * 128, dtype=jnp.float32).reshape(8, 128)

        def probe(x_ref, o_ref):
            o_ref[...] = pltpu.roll(x_ref[...], 1, 1)

        out = np.asarray(pl.pallas_call(
            probe, out_shape=jax.ShapeDtypeStruct((8, 128), jnp.float32))(x))
        ref = np.asarray(x)
        if np.array_equal(out, np.roll(ref, 1, axis=1)):
            return -1      # jnp.roll convention: out[c] = v[c - shift]
        if np.array_equal(out, np.roll(ref, -1, axis=1)):
            return 1
    except Exception:
        pass
    return -1              # default to the jnp.roll convention


# --------------------------------------------------------------------------- #
#  Pallas kernel: per-pack CG solve of (K^T K + lam L^T L) x = K^T y          #
#  Each grid program handles one lane-pack of images; image p occupies lanes  #
#  [p*WS, (p+1)*WS), WS = W + 2*PB, interior at rows/cols [PB, PB+H/W).       #
#  Phantom 128-alignment lanes have all-zero masks/inputs and stay zero.      #
# --------------------------------------------------------------------------- #
def _make_cg_kernel(H, W, KH, KW, LNS, maxiter, tol, restart, roll_sign):
    assert KH == KW and KH % 2 == 1, "odd square blur kernels only"
    PB = KH // 2
    HS = H + 2 * PB
    T = KH * KW
    MR = max(8, _round_up(2 * PB, 8))      # sublane-aligned row margin for the slab

    def kernel(y_ref, k_ref, fc_ref, fa_ref, cm_ref, p_ref, lam_ref, out_ref, big):
        lam = lam_ref[0, 0]                          # exp(reg_weight), SMEM scalar
        y_val = y_ref[0]                             # (HS, LNS)
        p_mat = p_ref[...]                           # (LNS, LNS) per-slot sum matrix

        # ---------------- loop-invariant values, hoisted out of the CG loop ---
        k_taps = [jnp.broadcast_to(k_ref[0, t:t + 1, :], (HS, LNS)) for t in range(T)]
        f_c = [fc_ref[0, t] for t in range(FS * FS)]              # L filters
        f_a = [fa_ref[0, t] for t in range(FS * FS)]              # L^T (pre-shifted)

        def cmrow(i):
            return jnp.broadcast_to(cm_ref[i:i + 1, :], (HS, LNS))

        cpadL = [cmrow(4 * m + 0) for m in range(PB)]
        cintL = [cmrow(4 * m + 1) for m in range(PB)]
        cintR = [cmrow(4 * m + 2) for m in range(PB)]
        cpadR = [cmrow(4 * m + 3) for m in range(PB)]
        col_int = cmrow(4 * PB)

        row_idx = lax.broadcasted_iota(jnp.int32, (HS, LNS), 0)

        def rowmask(v):
            return (row_idx == v).astype(jnp.float32)

        rpadT = [rowmask(PB - 1 - m) for m in range(PB)]
        rpadB = [rowmask(PB + H + m) for m in range(PB)]
        rintT = [rowmask(PB + m) for m in range(PB)]
        rintB = [rowmask(PB + H - 1 - m) for m in range(PB)]
        row_int = jnp.logical_and(row_idx >= PB, row_idx < PB + H).astype(jnp.float32)
        interior = row_int * col_int                              # (HS, LNS) 0/1

        # zero the row-margined scratch slab once; only the centre window is rewritten
        big[...] = jnp.zeros((HS + 2 * MR, LNS), jnp.float32)

        def put(v):                                   # full-width, sublane-aligned store
            big[MR:MR + HS, :] = v

        def rd(dr):                                   # full-width row-shifted slab read
            return big[MR + dr:MR + dr + HS, :]

        def lroll(v, off):                            # result[..., c] = v[..., c + off]
            s = (roll_sign * off) % LNS
            if s == 0:
                return v
            return pltpu.roll(v, s, 1)                # XLU lane rotate

        # ---------------------------- operators ----------------------------- #
        def correlate(flip):
            """KH row-shifted slab loads, taps folded in, then KW lane rotates."""
            rows = [rd(a - PB) for a in range(KH)]
            cols = []
            for b in range(KW):
                terms = []
                for a in range(KH):
                    if flip:   # true convolution taps (flipped PSF)
                        tap = k_taps[(KH - 1 - a) * KW + (KW - 1 - b)]
                    else:      # plain correlation taps
                        tap = k_taps[a * KW + b]
                    terms.append(tap * rows[a])
                cols.append(lroll(_tree_sum(terms), b - PB))
            return _tree_sum(cols)

        def pixelwise_filter(fs, sgn):
            """per-pixel 3x3 (sgn=+1: L, sgn=-1: L^T) applied to the value in the slab."""
            rows = {dr: rd(dr) for dr in (-1, 0, 1)}
            terms = []
            for t in range(FS * FS):
                ta, tb = t // FS, t % FS
                dr, dc = sgn * (ta - FP), sgn * (tb - FP)
                terms.append(fs[t] * lroll(rows[dr], dc))
            return _tree_sum(terms)

        def K_apply(xv):
            """K x: symmetric pad + true convolution.  xv must already be in the slab."""
            terms = [xv]                              # symmetric extension: rows
            for m in range(PB):
                terms.append(rpadT[m] * rd(2 * m + 1))
                terms.append(rpadB[m] * rd(-(2 * m + 1)))
            e1 = _tree_sum(terms)
            terms = [e1]                              # symmetric extension: columns (rolls)
            for m in range(PB):
                terms.append(cpadL[m] * lroll(e1, 2 * m + 1))
                terms.append(cpadR[m] * lroll(e1, -(2 * m + 1)))
            ext = _tree_sum(terms)
            put(ext)
            return correlate(flip=True)

        def KT_apply(zv):
            """K^T z (adjoint of symmetric pad + conv); zv must be interior-supported."""
            put(zv)
            u = correlate(flip=False)
            terms = [u]                               # fold symmetric column pad (rolls)
            for m in range(PB):
                terms.append(cintL[m] * lroll(u, -(2 * m + 1)))
                terms.append(cintR[m] * lroll(u, 2 * m + 1))
            v = _tree_sum(terms)
            put(v)
            terms = [v]                               # fold symmetric row pad
            for m in range(PB):
                terms.append(rintT[m] * rd(-(2 * m + 1)))
                terms.append(rintB[m] * rd(2 * m + 1))
            return _tree_sum(terms)                   # caller masks to interior

        def A_apply(xv):
            """A x = K^T K x + exp(rw) L^T L x."""
            put(xv)
            lx = pixelwise_filter(f_c, +1)            # L x   (interior supported)
            kx = interior * K_apply(xv)               # K x
            ktk = KT_apply(kx)                        # K^T K x
            put(lx)
            ltl = pixelwise_filter(f_a, -1)           # L^T L x
            return interior * (ktk + lam * ltl)

        def vdot(u, v):
            """Per-image dot product, broadcast back over each image's lane slot."""
            rs = jnp.sum(u * v, axis=0, keepdims=True)                 # (1, LNS)
            return jnp.dot(rs, p_mat, preferred_element_type=jnp.float32)

        # --------------------------- CG solve -------------------------------- #
        b_vec = interior * KT_apply(y_val)            # b = K^T y
        x0 = jnp.zeros((HS, LNS), jnp.float32)
        r0 = b_vec                                    # A(0) == 0
        d0 = r0
        delta0 = vdot(r0, r0)
        thresh = tol * delta0
        conv0 = (delta0 <= thresh).astype(jnp.float32)
        allc0 = jnp.min(conv0)

        def cond_fn(st):
            return jnp.logical_and(st[0] < maxiter, st[2] < 0.5)

        def body_fn(st):
            i, rc, _, x, r, d, delta, conv = st
            q = A_apply(d)
            dq = vdot(d, q)
            # dq == 0 means a stalled (or all-zero padded) image: mark it converged
            conv = jnp.maximum(conv, (dq == 0.0).astype(jnp.float32))
            safe_dq = jnp.where(dq == 0.0, 1.0, dq)
            alpha = jnp.where(conv > 0.5, 0.0, delta / safe_dq)        # (1, LNS)
            x = x + alpha * d
            rc = rc + 1
            do_restart = rc == restart
            rc = jnp.where(do_restart, jnp.int32(0), rc)
            r_new = lax.cond(do_restart,
                             lambda: b_vec - A_apply(x),               # periodic restart
                             lambda: r - alpha * q)
            delta_old = delta
            delta_new = vdot(r_new, r_new)
            conv = jnp.maximum(conv, (delta_new <= thresh).astype(jnp.float32))
            safe_old = jnp.where(delta_old == 0.0, 1.0, delta_old)
            beta = jnp.where(delta_old == 0.0, 0.0, delta_new / safe_old)
            d = r_new + beta * d
            return (i + 1, rc, jnp.min(conv), x, r_new, d, delta_new, conv)

        st0 = (jnp.int32(0), jnp.int32(0), allc0, x0, r0, d0, delta0, conv0)
        st = lax.while_loop(cond_fn, body_fn, st0)
        out_ref[0] = st[3]

    return kernel


# --------------------------------------------------------------------------- #
#  Host-side packing helpers (pure JAX layout plumbing)                        #
# --------------------------------------------------------------------------- #
def _pack_to_slots(arr, B_pack, PB, LNS):
    GB, H, W = arr.shape
    G = GB // B_pack
    HS, WS = H + 2 * PB, W + 2 * PB
    slot = jnp.zeros((G, B_pack, HS, WS), arr.dtype)
    slot = slot.at[:, :, PB:PB + H, PB:PB + W].set(arr.reshape(G, B_pack, H, W))
    slab = slot.transpose(0, 2, 1, 3).reshape(G, HS, B_pack * WS)
    return jnp.pad(slab, ((0, 0), (0, 0), (0, LNS - B_pack * WS)))


def _unpack_from_slots(slab, B, B_pack, H, W, PB):
    G, HS, _ = slab.shape
    WS = W + 2 * PB
    x = slab[:, :, :B_pack * WS].reshape(G, HS, B_pack, WS).transpose(0, 2, 1, 3)
    return x[:, :, PB:PB + H, PB:PB + W].reshape(G * B_pack, H, W)[:B]


def _pack_filters(f, B_pack, PB, LNS):
    """(GB,9,H,W) -> f_center (G,9,HS,LNS) and f_adj (G,9,HS,LNS); f_adj is the host
    pre-shifted copy (offsets FP-ta, FP-tb) so L^T needs no in-kernel filter shifts."""
    GB, Tn, H, W = f.shape
    G = GB // B_pack
    HS, WS = H + 2 * PB, W + 2 * PB
    slot = jnp.zeros((G, B_pack, Tn, HS, WS), f.dtype)
    slot = slot.at[:, :, :, PB:PB + H, PB:PB + W].set(f.reshape(G, B_pack, Tn, H, W))
    fc = slot.transpose(0, 2, 3, 1, 4).reshape(G, Tn, HS, B_pack * WS)
    fc = jnp.pad(fc, ((0, 0), (0, 0), (0, 0), (0, LNS - B_pack * WS)))
    fp = jnp.pad(fc, ((0, 0), (0, 0), (1, 1), (1, 1)))
    parts = []
    for t in range(Tn):
        ta, tb = t // FS, t % FS
        dr, dc = FP - ta, FP - tb
        parts.append(fp[:, t, 1 + dr:1 + dr + HS, 1 + dc:1 + dc + LNS])
    fa = jnp.stack(parts, axis=1)
    return fc, fa


def _pack_taps(k, B_pack, WS, LNS):
    """(GB,KH,KW) -> (G, KH*KW, LNS): per-image tap value on its lane slot."""
    GB, KH, KW = k.shape
    G = GB // B_pack
    kr = k.reshape(G, B_pack, KH * KW).transpose(0, 2, 1)            # (G, T, Bp)
    kl = jnp.broadcast_to(kr[..., None], (G, KH * KW, B_pack, WS))
    kl = kl.reshape(G, KH * KW, B_pack * WS)
    return jnp.pad(kl, ((0, 0), (0, 0), (0, LNS - B_pack * WS)))


def _make_cmasks(B_pack, W, PB, LNS):
    WS = W + 2 * PB
    loc = jnp.arange(B_pack * WS, dtype=jnp.int32) % WS
    rows = []
    for m in range(PB):
        rows.append(loc == (PB - 1 - m))      # symmetric-pad column (left)
        rows.append(loc == (PB + m))          # fold target column (left)
        rows.append(loc == (PB + W - 1 - m))  # fold target column (right)
        rows.append(loc == (PB + W + m))      # symmetric-pad column (right)
    rows.append(jnp.logical_and(loc >= PB, loc < PB + W))
    cm = jnp.stack(rows).astype(jnp.float32)
    # phantom (128-alignment) lanes get all-zero masks so they stay exactly zero
    return jnp.pad(cm, ((0, 0), (0, LNS - B_pack * WS)))


def _make_slot_sum(B_pack, WS, LNS):
    idx = jnp.arange(LNS, dtype=jnp.int32) // WS
    return (idx[:, None] == idx[None, :]).astype(jnp.float32)


def _vmem_estimate(HS, LNS, T, PB, MR):
    per = HS * LNS * 4
    n_hoisted = T + 2 * FS * FS + (4 * PB + 1) + (4 * PB + 2)      # taps, filters, masks
    n_state = 12                                                    # CG vectors + temps
    n_io = 2 * (2 + 2 * FS * FS + T)                                # double-buffered blocks
    return (n_hoisted + n_state + n_io) * per + 2 * LNS * LNS * 4 + (HS + 2 * MR) * LNS * 4


def _choose_pack(B, H, W, PB, T):
    HS, WS = H + 2 * PB, W + 2 * PB
    MR = max(8, _round_up(2 * PB, 8))
    if WS <= 128:
        b_pack = min(B, max(1, (128 // WS) * max(1, LANES_TARGET // 128)))
    else:
        b_pack = 1
    # v7x megacore: prefer >= 2 grid programs when the batch allows it
    if -(-B // b_pack) < 2 and B >= 2:
        b_pack = -(-B // 2)
    # stay inside a conservative per-program VMEM budget (v7x has 64 MiB / TC)
    while b_pack > 1 and _vmem_estimate(HS, _round_up(b_pack * WS, 128), T, PB, MR) > VMEM_BUDGET:
        b_pack -= 1
    return b_pack


# --------------------------------------------------------------------------- #
#  Driver                                                                      #
# --------------------------------------------------------------------------- #
def wiener_cg_solve(y, k, f_norm, lam, *, maxiter, tol, restart):
    """y (B,H,W), k (B,KH,KW), f_norm (B,9,H,W), lam (1,1)  ->  x (B,H,W)."""
    B, H, W = y.shape
    _, KH, KW = k.shape
    assert KH == KW and KH % 2 == 1, "odd square blur kernels only"
    PB = KH // 2
    HS, WS = H + 2 * PB, W + 2 * PB
    T = KH * KW
    MR = max(8, _round_up(2 * PB, 8))

    B_pack = _choose_pack(B, H, W, PB, T)
    G = -(-B // B_pack)
    LNS = _round_up(B_pack * WS, 128)          # lane-dense: every slab is 128-aligned
    pad_n = G * B_pack - B

    y_p = jnp.pad(y, ((0, pad_n), (0, 0), (0, 0))).astype(jnp.float32)
    k_p = jnp.pad(k, ((0, pad_n), (0, 0), (0, 0))).astype(jnp.float32)
    f_p = jnp.pad(f_norm, ((0, pad_n), (0, 0), (0, 0), (0, 0))).astype(jnp.float32)

    y_slab = _pack_to_slots(y_p, B_pack, PB, LNS)                 # (G, HS, LNS)
    k_lanes = _pack_taps(k_p, B_pack, WS, LNS)                    # (G, T, LNS)
    f_ctr, f_adj = _pack_filters(f_p, B_pack, PB, LNS)            # (G, 9, HS, LNS) x 2
    cmasks = _make_cmasks(B_pack, W, PB, LNS)                     # (4*PB+1, LNS)
    pmat = _make_slot_sum(B_pack, WS, LNS)                        # (LNS, LNS)
    NM = cmasks.shape[0]

    try:
        vmem_cap = int(pltpu.get_tpu_info().vmem_capacity_bytes)
    except Exception:
        vmem_cap = 64 * 1024 * 1024
    vmem_limit = max(32 * 1024 * 1024, min(vmem_cap * 3 // 4, 100 * 1024 * 1024))

    kernel = _make_cg_kernel(H, W, KH, KW, LNS, maxiter, tol, restart, _roll_src_sign())

    out = pl.pallas_call(
        kernel,
        out_shape=jax.ShapeDtypeStruct((G, HS, LNS), jnp.float32),
        grid=(G,),
        in_specs=[
            pl.BlockSpec((1, HS, LNS), lambda g: (g, 0, 0)),
            pl.BlockSpec((1, T, LNS), lambda g: (g, 0, 0)),
            pl.BlockSpec((1, FS * FS, HS, LNS), lambda g: (g, 0, 0, 0)),
            pl.BlockSpec((1, FS * FS, HS, LNS), lambda g: (g, 0, 0, 0)),
            pl.BlockSpec((NM, LNS), lambda g: (0, 0)),
            pl.BlockSpec((LNS, LNS), lambda g: (0, 0)),
            pl.BlockSpec(memory_space=pltpu.MemorySpace.SMEM),    # lam scalar
        ],
        out_specs=pl.BlockSpec((1, HS, LNS), lambda g: (g, 0, 0)),
        scratch_shapes=[
            pltpu.VMEM((HS + 2 * MR, LNS), jnp.float32),          # row-margined slab
        ],
        compiler_params=pltpu.CompilerParams(
            dimension_semantics=("parallel",),                    # v7x: 2 TensorCores
            vmem_limit_bytes=vmem_limit,
        ),
    )(y_slab, k_lanes, f_ctr, f_adj, cmasks, pmat, lam.astype(jnp.float32))

    return _unpack_from_slots(out, B, B_pack, H, W, PB)


# --------------------------------------------------------------------------- #
#  Module-level glue (parameters, filter prediction, normalization)           #
# --------------------------------------------------------------------------- #
def init_params(key):
    # reg_weight = nn.Parameter(torch.Tensor([0.0]))
    reg_weight = jnp.zeros((1,), jnp.float32)
    # TODO(synk): the original per-pixel filter predictor is UNet(n_channels=1,
    # n_classes=9) whose architecture is defined outside the reference file; it is
    # substituted here by a single deterministic 3x3 conv (1 -> 9 channels).
    kw_, kb_ = jax.random.split(key)
    filt_w = 0.1 * jax.random.normal(kw_, (9, 1, 3, 3), jnp.float32)
    filt_b = 0.05 * jax.random.normal(kb_, (9,), jnp.float32)
    return {"reg_weight": reg_weight, "filt_w": filt_w, "filt_b": filt_b}


def predict_filters(y_nchw, params):
    out = lax.conv_general_dilated(
        y_nchw, params["filt_w"], window_strides=(1, 1), padding="SAME",
        dimension_numbers=("NCHW", "OIHW", "NCHW"))
    return out + params["filt_b"][None, :, None, None]          # (B, 9, H, W)


def compute_normalized_filters(params, y_nchw):
    # F.normalize(filters.reshape(B, C, 9, H, W), dim=2, p=1)
    f = predict_filters(y_nchw, params)
    l1 = jnp.sum(jnp.abs(f), axis=1, keepdims=True)
    return f / jnp.maximum(l1, 1e-12)


def wiener_kpn_sa_forward(params, y, k, maxiter=300, tol=1e-6, restart=50):
    """y: (B, 1, H, W) NCHW, k: (B, KH, KW) per-image blur PSF."""
    B, C, H, W = y.shape
    assert C == 1, "Wiener_KPN_SA uses a 1-channel filter-prediction net"
    f_norm = compute_normalized_filters(params, y)               # (B, 9, H, W)
    lam = jnp.exp(params["reg_weight"]).reshape(1, 1).astype(jnp.float32)
    x = wiener_cg_solve(y[:, 0].astype(jnp.float32), k.astype(jnp.float32),
                        f_norm.astype(jnp.float32), lam,
                        maxiter=maxiter, tol=tol, restart=restart)
    return x.reshape(B, C, H, W).astype(jnp.float32)


# --------------------------------------------------------------------------- #
#  Pure-JAX reference operators (used only for the correctness check)         #
# --------------------------------------------------------------------------- #
def ref_K(x, k):
    B, H, W = x.shape
    kh, kw = k.shape[1], k.shape[2]
    p = kh // 2
    xp = jnp.pad(x, ((0, 0), (p, p), (p, p)), mode="symmetric")
    kf = k[:, ::-1, ::-1]
    out = jnp.zeros_like(x)
    for a in range(kh):
        for b in range(kw):
            out = out + kf[:, a, b][:, None, None] * xp[:, a:a + H, b:b + W]
    return out


def ref_L(x, f):
    B, H, W = x.shape
    xp = jnp.pad(x, ((0, 0), (1, 1), (1, 1)))
    out = jnp.zeros_like(x)
    for t in range(FS * FS):
        a, b = t // FS, t % FS
        out = out + f[:, t] * xp[:, a:a + H, b:b + W]
    return out


def ref_KT(z, k):
    return jax.vjp(lambda v: ref_K(v, k), jnp.zeros_like(z))[1](z)[0]


def ref_LT(z, f):
    return jax.vjp(lambda v: ref_L(v, f), jnp.zeros_like(z))[1](z)[0]


def ref_A(x, y2, k, f, lam):
    return (ref_KT(ref_K(x, k) - y2, k)
            + lam * ref_LT(ref_L(x, f), f)
            + ref_KT(y2, k))


# --------------------------------------------------------------------------- #
if __name__ == "__main__":
    _ = _roll_src_sign()     # prime the lane-rotate convention probe outside jit

    key = jax.random.PRNGKey(0)
    kp, ky = jax.random.split(key)
    params = init_params(kp)

    B, C, H, W = 2, 1, 16, 16
    y = jax.random.normal(ky, (B, C, H, W), dtype=jnp.float32)

    # Mild 5x5 PSFs (0.5*delta + 0.5*gaussian), one per image, each summing to 1.
    def gauss5(sigma):
        g = jnp.exp(-0.5 * (jnp.arange(5.0) - 2.0) ** 2 / sigma ** 2)
        g2 = jnp.outer(g, g)
        return g2 / jnp.sum(g2)

    delta5 = jnp.zeros((5, 5), jnp.float32).at[2, 2].set(1.0)
    k = jnp.stack([0.5 * delta5 + 0.5 * gauss5(1.2),
                   0.6 * delta5 + 0.4 * gauss5(0.9)]).astype(jnp.float32)

    # tol / restart are the module's __init__ defaults; maxiter (a ctor arg) kept
    # small for the demo.
    maxiter, tol, restart = 60, 1e-6, 50

    fwd = jax.jit(functools.partial(wiener_kpn_sa_forward,
                                    maxiter=maxiter, tol=tol, restart=restart))
    x = jax.block_until_ready(fwd(params, y, k))
    assert x.shape == (B, C, H, W) and x.dtype == jnp.float32
    assert bool(jnp.all(jnp.isfinite(x)))

    # Sanity: x must (approximately) satisfy the normal equations
    #   (K^T K + e^{rw} L^T L) x = K^T y, checked against independent pure-JAX ops.
    f_norm = compute_normalized_filters(params, y)
    lam = float(jnp.exp(params["reg_weight"])[0])
    y2, x2 = y[:, 0], x[:, 0]
    b_ref = ref_KT(y2, k)
    resid = ref_A(x2, y2, k, f_norm, lam) - b_ref
    rel = (jnp.linalg.norm(resid.reshape(B, -1), axis=1)
           / jnp.linalg.norm(b_ref.reshape(B, -1), axis=1))
    assert float(jnp.max(rel)) < 3e-2, f"relative CG residual too large: {rel}"

    print("KERNEL_OK")
</pallas_src>

<mosaic_0001>
module attributes {stable_mosaic.version = 11 : i64} {
  func.func @probe(%arg0: memref<8x128xf32, #tpu.memory_space<vmem>>, %arg1: memref<8x128xf32, #tpu.memory_space<vmem>>) attributes {dimension_semantics = [], scalar_prefetch = 0 : i64, scratch_operands = 0 : i64, tpu.core_type = #tpu.core_type<tc>} {
    %c0 = arith.constant 0 : index
    %c0_0 = arith.constant 0 : index
    %0 = vector.load %arg0[%c0, %c0_0] : memref<8x128xf32, #tpu.memory_space<vmem>>, vector<8x128xf32>
    %c1_i32 = arith.constant 1 : i32
    %1 = tpu.dynamic_rotate %0 by %c1_i32 dim 1 : vector<8x128xf32>, i32 -> vector<8x128xf32>
    %c0_1 = arith.constant 0 : index
    %c0_2 = arith.constant 0 : index
    %2 = vector.load %arg1[%c0_1, %c0_2] : memref<8x128xf32, #tpu.memory_space<vmem>>, vector<8x128xf32>
    tpu.vector_store %arg1[%c0_1, %c0_2], %1 {strides = array<i32>} : memref<8x128xf32, #tpu.memory_space<vmem>>, vector<8x128xf32>,
    return
  }
}

module attributes {stable_mosaic.version = 11 : i64} {
  func.func @kernel(%arg0: i32, %arg1: memref<1x20x128xf32, #tpu.memory_space<vmem>>, %arg2: memref<1x25x128xf32, #tpu.memory_space<vmem>>, %arg3: memref<1x9x20x128xf32, #tpu.memory_space<vmem>>, %arg4: memref<1x9x20x128xf32, #tpu.memory_space<vmem>>, %arg5: memref<9x128xf32, #tpu.memory_space<vmem>>, %arg6: memref<128x128xf32, #tpu.memory_space<vmem>>, %arg7: memref<1x1xf32, #tpu.memory_space<smem>>, %arg8: memref<1x20x128xf32, #tpu.memory_space<vmem>>, %arg9: memref<36x128xf32, #tpu.memory_space<vmem>>) attributes {dimension_semantics = [#tpu.dimension_semantics<parallel>], iteration_bounds = array<i64: 2>, scalar_prefetch = 0 : i64, scratch_operands = 1 : i64, tpu.core_type = #tpu.core_type<tc>, window_params = [{transform_indices = @transform_0, window_bounds = array<i64: 1, 20, 128>}, {transform_indices = @transform_1, window_bounds = array<i64: 1, 25, 128>}, {transform_indices = @transform_2, window_bounds = array<i64: 1, 9, 20, 128>}, {transform_indices = @transform_3, window_bounds = array<i64: 1, 9, 20, 128>}, {pipeline_mode = #tpu.pipeline_mode<synchronous>, transform_indices = @transform_4, window_bounds = array<i64: 9, 128>}, {pipeline_mode = #tpu.pipeline_mode<synchronous>, transform_indices = @transform_5, window_bounds = array<i64: 128, 128>}, {transform_indices = @transform_6, window_bounds = array<i64: 1, 1>}, {transform_indices = @transform_7, window_bounds = array<i64: 1, 20, 128>}]} {
    %c0 = arith.constant 0 : index
    %c0_0 = arith.constant 0 : index
    %0 = memref.load %arg7[%c0, %c0_0] : memref<1x1xf32, #tpu.memory_space<smem>>
    %c0_1 = arith.constant 0 : index
    %c0_2 = arith.constant 0 : index
    %c0_3 = arith.constant 0 : index
    %1 = vector.load %arg1[%c0_1, %c0_2, %c0_3] : memref<1x20x128xf32, #tpu.memory_space<vmem>>, vector<1x20x128xf32>
    %2 = vector.shape_cast %1 : vector<1x20x128xf32> to vector<20x128xf32>
    %c0_4 = arith.constant 0 : index
    %c0_5 = arith.constant 0 : index
    %3 = vector.load %arg6[%c0_4, %c0_5] : memref<128x128xf32, #tpu.memory_space<vmem>>, vector<128x128xf32>
    %c0_6 = arith.constant 0 : index
    %c0_7 = arith.constant 0 : index
    %c0_8 = arith.constant 0 : index
    %4 = vector.load %arg2[%c0_6, %c0_7, %c0_8] : memref<1x25x128xf32, #tpu.memory_space<vmem>>, vector<1x1x128xf32>
    %5 = vector.shape_cast %4 : vector<1x1x128xf32> to vector<1x128xf32>
    %6 = vector.shape_cast %5 : vector<1x128xf32> to vector<1x128xf32>
    %7 = vector.broadcast %6 : vector<1x128xf32> to vector<20x128xf32>
    %c0_9 = arith.constant 0 : index
    %c1 = arith.constant 1 : index
    %c0_10 = arith.constant 0 : index
    %8 = vector.load %arg2[%c0_9, %c1, %c0_10] : memref<1x25x128xf32, #tpu.memory_space<vmem>>, vector<1x1x128xf32>
    %9 = vector.shape_cast %8 : vector<1x1x128xf32> to vector<1x128xf32>
    %10 = vector.shape_cast %9 : vector<1x128xf32> to vector<1x128xf32>
    %11 = vector.broadcast %10 : vector<1x128xf32> to vector<20x128xf32>
    %c0_11 = arith.constant 0 : index
    %c2 = arith.constant 2 : index
    %c0_12 = arith.constant 0 : index
    %12 = vector.load %arg2[%c0_11, %c2, %c0_12] : memref<1x25x128xf32, #tpu.memory_space<vmem>>, vector<1x1x128xf32>
    %13 = vector.shape_cast %12 : vector<1x1x128xf32> to vector<1x128xf32>
    %14 = vector.shape_cast %13 : vector<1x128xf32> to vector<1x128xf32>
    %15 = vector.broadcast %14 : vector<1x128xf32> to vector<20x128xf32>
    %c0_13 = arith.constant 0 : index
    %c3 = arith.constant 3 : index
    %c0_14 = arith.constant 0 : index
    %16 = vector.load %arg2[%c0_13, %c3, %c0_14] : memref<1x25x128xf32, #tpu.memory_space<vmem>>, vector<1x1x128xf32>
    %17 = vector.shape_cast %16 : vector<1x1x128xf32> to vector<1x128xf32>
    %18 = vector.shape_cast %17 : vector<1x128xf32> to vector<1x128xf32>
    %19 = vector.broadcast %18 : vector<1x128xf32> to vector<20x128xf32>
    %c0_15 = arith.constant 0 : index
    %c4 = arith.constant 4 : index
    %c0_16 = arith.constant 0 : index
    %20 = vector.load %arg2[%c0_15, %c4, %c0_16] : memref<1x25x128xf32, #tpu.memory_space<vmem>>, vector<1x1x128xf32>
    %21 = vector.shape_cast %20 : vector<1x1x128xf32> to vector<1x128xf32>
    %22 = vector.shape_cast %21 : vector<1x128xf32> to vector<1x128xf32>
    %23 = vector.broadcast %22 : vector<1x128xf32> to vector<20x128xf32>
    %c0_17 = arith.constant 0 : index
    %c5 = arith.constant 5 : index
    %c0_18 = arith.constant 0 : index
    %24 = vector.load %arg2[%c0_17, %c5, %c0_18] : memref<1x25x128xf32, #tpu.memory_space<vmem>>, vector<1x1x128xf32>
    %25 = vector.shape_cast %24 : vector<1x1x128xf32> to vector<1x128xf32>
    %26 = vector.shape_cast %25 : vector<1x128xf32> to vector<1x128xf32>
    %27 = vector.broadcast %26 : vector<1x128xf32> to vector<20x128xf32>
    %c0_19 = arith.constant 0 : index
    %c6 = arith.constant 6 : index
    %c0_20 = arith.constant 0 : index
    %28 = vector.load %arg2[%c0_19, %c6, %c0_20] : memref<1x25x128xf32, #tpu.memory_space<vmem>>, vector<1x1x128xf32>
    %29 = vector.shape_cast %28 : vector<1x1x128xf32> to vector<1x128xf32>
    %30 = vector.shape_cast %29 : vector<1x128xf32> to vector<1x128xf32>
    %31 = vector.broadcast %30 : vector<1x128xf32> to vector<20x128xf32>
    %c0_21 = arith.constant 0 : index
    %c7 = arith.constant 7 : index
    %c0_22 = arith.constant 0 : index
    %32 = vector.load %arg2[%c0_21, %c7, %c0_22] : memref<1x25x128xf32, #tpu.memory_space<vmem>>, vector<1x1x128xf32>
    %33 = vector.shape_cast %32 : vector<1x1x128xf32> to vector<1x128xf32>
    %34 = vector.shape_cast %33 : vector<1x128xf32> to vector<1x128xf32>
    %35 = vector.broadcast %34 : vector<1x128xf32> to vector<20x128xf32>
    %c0_23 = arith.constant 0 : index
    %c8 = arith.constant 8 : index
    %c0_24 = arith.constant 0 : index
    %36 = vector.load %arg2[%c0_23, %c8, %c0_24] : memref<1x25x128xf32, #tpu.memory_space<vmem>>, vector<1x1x128xf32>
    %37 = vector.shape_cast %36 : vector<1x1x128xf32> to vector<1x128xf32>
    %38 = vector.shape_cast %37 : vector<1x128xf32> to vector<1x128xf32>
    %39 = vector.broadcast %38 : vector<1x128xf32> to vector<20x128xf32>
    %c0_25 = arith.constant 0 : index
    %c9 = arith.constant 9 : index
    %c0_26 = arith.constant 0 : index
    %40 = vector.load %arg2[%c0_25, %c9, %c0_26] : memref<1x25x128xf32, #tpu.memory_space<vmem>>, vector<1x1x128xf32>
    %41 = vector.shape_cast %40 : vector<1x1x128xf32> to vector<1x128xf32>
    %42 = vector.shape_cast %41 : vector<1x128xf32> to vector<1x128xf32>
    %43 = vector.broadcast %42 : vector<1x128xf32> to vector<20x128xf32>
    %c0_27 = arith.constant 0 : index
    %c10 = arith.constant 10 : index
    %c0_28 = arith.constant 0 : index
    %44 = vector.load %arg2[%c0_27, %c10, %c0_28] : memref<1x25x128xf32, #tpu.memory_space<vmem>>, vector<1x1x128xf32>
    %45 = vector.shape_cast %44 : vector<1x1x128xf32> to vector<1x128xf32>
    %46 = vector.shape_cast %45 : vector<1x128xf32> to vector<1x128xf32>
    %47 = vector.broadcast %46 : vector<1x128xf32> to vector<20x128xf32>
    %c0_29 = arith.constant 0 : index
    %c11 = arith.constant 11 : index
    %c0_30 = arith.constant 0 : index
    %48 = vector.load %arg2[%c0_29, %c11, %c0_30] : memref<1x25x128xf32, #tpu.memory_space<vmem>>, vector<1x1x128xf32>
    %49 = vector.shape_cast %48 : vector<1x1x128xf32> to vector<1x128xf32>
    %50 = vector.shape_cast %49 : vector<1x128xf32> to vector<1x128xf32>
    %51 = vector.broadcast %50 : vector<1x128xf32> to vector<20x128xf32>
    %c0_31 = arith.constant 0 : index
    %c12 = arith.constant 12 : index
    %c0_32 = arith.constant 0 : index
    %52 = vector.load %arg2[%c0_31, %c12, %c0_32] : memref<1x25x128xf32, #tpu.memory_space<vmem>>, vector<1x1x128xf32>
    %53 = vector.shape_cast %52 : vector<1x1x128xf32> to vector<1x128xf32>
    %54 = vector.shape_cast %53 : vector<1x128xf32> to vector<1x128xf32>
    %55 = vector.broadcast %54 : vector<1x128xf32> to vector<20x128xf32>
    %c0_33 = arith.constant 0 : index
    %c13 = arith.constant 13 : index
    %c0_34 = arith.constant 0 : index
    %56 = vector.load %arg2[%c0_33, %c13, %c0_34] : memref<1x25x128xf32, #tpu.memory_space<vmem>>, vector<1x1x128xf32>
    %57 = vector.shape_cast %56 : vector<1x1x128xf32> to vector<1x128xf32>
    %58 = vector.shape_cast %57 : vector<1x128xf32> to vector<1x128xf32>
    %59 = vector.broadcast %58 : vector<1x128xf32> to vector<20x128xf32>
    %c0_35 = arith.constant 0 : index
    %c14 = arith.constant 14 : index
    %c0_36 = arith.constant 0 : index
    %60 = vector.load %arg2[%c0_35, %c14, %c0_36] : memref<1x25x128xf32, #tpu.memory_space<vmem>>, vector<1x1x128xf32>
    %61 = vector.shape_cast %60 : vector<1x1x128xf32> to vector<1x128xf32>
    %62 = vector.shape_cast %61 : vector<1x128xf32> to vector<1x128xf32>
    %63 = vector.broadcast %62 : vector<1x128xf32> to vector<20x128xf32>
    %c0_37 = arith.constant 0 : index
    %c15 = arith.constant 15 : index
    %c0_38 = arith.constant 0 : index
    %64 = vector.load %arg2[%c0_37, %c15, %c0_38] : memref<1x25x128xf32, #tpu.memory_space<vmem>>, vector<1x1x128xf32>
    %65 = vector.shape_cast %64 : vector<1x1x128xf32> to vector<1x128xf32>
    %66 = vector.shape_cast %65 : vector<1x128xf32> to vector<1x128xf32>
    %67 = vector.broadcast %66 : vector<1x128xf32> to vector<20x128xf32>
    %c0_39 = arith.constant 0 : index
    %c16 = arith.constant 16 : index
    %c0_40 = arith.constant 0 : index
    %68 = vector.load %arg2[%c0_39, %c16, %c0_40] : memref<1x25x128xf32, #tpu.memory_space<vmem>>, vector<1x1x128xf32>
    %69 = vector.shape_cast %68 : vector<1x1x128xf32> to vector<1x128xf32>
    %70 = vector.shape_cast %69 : vector<1x128xf32> to vector<1x128xf32>
    %71 = vector.broadcast %70 : vector<1x128xf32> to vector<20x128xf32>
    %c0_41 = arith.constant 0 : index
    %c17 = arith.constant 17 : index
    %c0_42 = arith.constant 0 : index
    %72 = vector.load %arg2[%c0_41, %c17, %c0_42] : memref<1x25x128xf32, #tpu.memory_space<vmem>>, vector<1x1x128xf32>
    %73 = vector.shape_cast %72 : vector<1x1x128xf32> to vector<1x128xf32>
    %74 = vector.shape_cast %73 : vector<1x128xf32> to vector<1x128xf32>
    %75 = vector.broadcast %74 : vector<1x128xf32> to vector<20x128xf32>
    %c0_43 = arith.constant 0 : index
    %c18 = arith.constant 18 : index
    %c0_44 = arith.constant 0 : index
    %76 = vector.load %arg2[%c0_43, %c18, %c0_44] : memref<1x25x128xf32, #tpu.memory_space<vmem>>, vector<1x1x128xf32>
    %77 = vector.shape_cast %76 : vector<1x1x128xf32> to vector<1x128xf32>
    %78 = vector.shape_cast %77 : vector<1x128xf32> to vector<1x128xf32>
    %79 = vector.broadcast %78 : vector<1x128xf32> to vector<20x128xf32>
    %c0_45 = arith.constant 0 : index
    %c19 = arith.constant 19 : index
    %c0_46 = arith.constant 0 : index
    %80 = vector.load %arg2[%c0_45, %c19, %c0_46] : memref<1x25x128xf32, #tpu.memory_space<vmem>>, vector<1x1x128xf32>
    %81 = vector.shape_cast %80 : vector<1x1x128xf32> to vector<1x128xf32>
    %82 = vector.shape_cast %81 : vector<1x128xf32> to vector<1x128xf32>
    %83 = vector.broadcast %82 : vector<1x128xf32> to vector<20x128xf32>
    %c0_47 = arith.constant 0 : index
    %c20 = arith.constant 20 : index
    %c0_48 = arith.constant 0 : index
    %84 = vector.load %arg2[%c0_47, %c20, %c0_48] : memref<1x25x128xf32, #tpu.memory_space<vmem>>, vector<1x1x128xf32>
    %85 = vector.shape_cast %84 : vector<1x1x128xf32> to vector<1x128xf32>
    %86 = vector.shape_cast %85 : vector<1x128xf32> to vector<1x128xf32>
    %87 = vector.broadcast %86 : vector<1x128xf32> to vector<20x128xf32>
    %c0_49 = arith.constant 0 : index
    %c21 = arith.constant 21 : index
    %c0_50 = arith.constant 0 : index
    %88 = vector.load %arg2[%c0_49, %c21, %c0_50] : memref<1x25x128xf32, #tpu.memory_space<vmem>>, vector<1x1x128xf32>
    %89 = vector.shape_cast %88 : vector<1x1x128xf32> to vector<1x128xf32>
    %90 = vector.shape_cast %89 : vector<1x128xf32> to vector<1x128xf32>
    %91 = vector.broadcast %90 : vector<1x128xf32> to vector<20x128xf32>
    %c0_51 = arith.constant 0 : index
    %c22 = arith.constant 22 : index
    %c0_52 = arith.constant 0 : index
    %92 = vector.load %arg2[%c0_51, %c22, %c0_52] : memref<1x25x128xf32, #tpu.memory_space<vmem>>, vector<1x1x128xf32>
    %93 = vector.shape_cast %92 : vector<1x1x128xf32> to vector<1x128xf32>
    %94 = vector.shape_cast %93 : vector<1x128xf32> to vector<1x128xf32>
    %95 = vector.broadcast %94 : vector<1x128xf32> to vector<20x128xf32>
    %c0_53 = arith.constant 0 : index
    %c23 = arith.constant 23 : index
    %c0_54 = arith.constant 0 : index
    %96 = vector.load %arg2[%c0_53, %c23, %c0_54] : memref<1x25x128xf32, #tpu.memory_space<vmem>>, vector<1x1x128xf32>
    %97 = vector.shape_cast %96 : vector<1x1x128xf32> to vector<1x128xf32>
    %98 = vector.shape_cast %97 : vector<1x128xf32> to vector<1x128xf32>
    %99 = vector.broadcast %98 : vector<1x128xf32> to vector<20x128xf32>
    %c0_55 = arith.constant 0 : index
    %c24 = arith.constant 24 : index
    %c0_56 = arith.constant 0 : index
    %100 = vector.load %arg2[%c0_55, %c24, %c0_56] : memref<1x25x128xf32, #tpu.memory_space<vmem>>, vector<1x1x128xf32>
    %101 = vector.shape_cast %100 : vector<1x1x128xf32> to vector<1x128xf32>
    %102 = vector.shape_cast %101 : vector<1x128xf32> to vector<1x128xf32>
    %103 = vector.broadcast %102 : vector<1x128xf32> to vector<20x128xf32>
    %c0_57 = arith.constant 0 : index
    %c0_58 = arith.constant 0 : index
    %c0_59 = arith.constant 0 : index
    %c0_60 = arith.constant 0 : index
    %104 = vector.load %arg3[%c0_57, %c0_58, %c0_59, %c0_60] : memref<1x9x20x128xf32, #tpu.memory_space<vmem>>, vector<1x1x20x128xf32>
    %105 = vector.shape_cast %104 : vector<1x1x20x128xf32> to vector<20x128xf32>
    %c0_61 = arith.constant 0 : index
    %c1_62 = arith.constant 1 : index
    %c0_63 = arith.constant 0 : index
    %c0_64 = arith.constant 0 : index
    %106 = vector.load %arg3[%c0_61, %c1_62, %c0_63, %c0_64] : memref<1x9x20x128xf32, #tpu.memory_space<vmem>>, vector<1x1x20x128xf32>
    %107 = vector.shape_cast %106 : vector<1x1x20x128xf32> to vector<20x128xf32>
    %c0_65 = arith.constant 0 : index
    %c2_66 = arith.constant 2 : index
    %c0_67 = arith.constant 0 : index
    %c0_68 = arith.constant 0 : index
    %108 = vector.load %arg3[%c0_65, %c2_66, %c0_67, %c0_68] : memref<1x9x20x128xf32, #tpu.memory_space<vmem>>, vector<1x1x20x128xf32>
    %109 = vector.shape_cast %108 : vector<1x1x20x128xf32> to vector<20x128xf32>
    %c0_69 = arith.constant 0 : index
    %c3_70 = arith.constant 3 : index
    %c0_71 = arith.constant 0 : index
    %c0_72 = arith.constant 0 : index
    %110 = vector.load %arg3[%c0_69, %c3_70, %c0_71, %c0_72] : memref<1x9x20x128xf32, #tpu.memory_space<vmem>>, vector<1x1x20x128xf32>
    %111 = vector.shape_cast %110 : vector<1x1x20x128xf32> to vector<20x128xf32>
    %c0_73 = arith.constant 0 : index
    %c4_74 = arith.constant 4 : index
    %c0_75 = arith.constant 0 : index
    %c0_76 = arith.constant 0 : index
    %112 = vector.load %arg3[%c0_73, %c4_74, %c0_75, %c0_76] : memref<1x9x20x128xf32, #tpu.memory_space<vmem>>, vector<1x1x20x128xf32>
    %113 = vector.shape_cast %112 : vector<1x1x20x128xf32> to vector<20x128xf32>
    %c0_77 = arith.constant 0 : index
    %c5_78 = arith.constant 5 : index
    %c0_79 = arith.constant 0 : index
    %c0_80 = arith.constant 0 : index
    %114 = vector.load %arg3[%c0_77, %c5_78, %c0_79, %c0_80] : memref<1x9x20x128xf32, #tpu.memory_space<vmem>>, vector<1x1x20x128xf32>
    %115 = vector.shape_cast %114 : vector<1x1x20x128xf32> to vector<20x128xf32>
    %c0_81 = arith.constant 0 : index
    %c6_82 = arith.constant 6 : index
    %c0_83 = arith.constant 0 : index
    %c0_84 = arith.constant 0 : index
    %116 = vector.load %arg3[%c0_81, %c6_82, %c0_83, %c0_84] : memref<1x9x20x128xf32, #tpu.memory_space<vmem>>, vector<1x1x20x128xf32>
    %117 = vector.shape_cast %116 : vector<1x1x20x128xf32> to vector<20x128xf32>
    %c0_85 = arith.constant 0 : index
    %c7_86 = arith.constant 7 : index
    %c0_87 = arith.constant 0 : index
    %c0_88 = arith.constant 0 : index
    %118 = vector.load %arg3[%c0_85, %c7_86, %c0_87, %c0_88] : memref<1x9x20x128xf32, #tpu.memory_space<vmem>>, vector<1x1x20x128xf32>
    %119 = vector.shape_cast %118 : vector<1x1x20x128xf32> to vector<20x128xf32>
    %c0_89 = arith.constant 0 : index
    %c8_90 = arith.constant 8 : index
    %c0_91 = arith.constant 0 : index
    %c0_92 = arith.constant 0 : index
    %120 = vector.load %arg3[%c0_89, %c8_90, %c0_91, %c0_92] : memref<1x9x20x128xf32, #tpu.memory_space<vmem>>, vector<1x1x20x128xf32>
    %121 = vector.shape_cast %120 : vector<1x1x20x128xf32> to vector<20x128xf32>
    %c0_93 = arith.constant 0 : index
    %c0_94 = arith.constant 0 : index
    %c0_95 = arith.constant 0 : index
    %c0_96 = arith.constant 0 : index
    %122 = vector.load %arg4[%c0_93, %c0_94, %c0_95, %c0_96] : memref<1x9x20x128xf32, #tpu.memory_space<vmem>>, vector<1x1x20x128xf32>
    %123 = vector.shape_cast %122 : vector<1x1x20x128xf32> to vector<20x128xf32>
    %c0_97 = arith.constant 0 : index
    %c1_98 = arith.constant 1 : index
    %c0_99 = arith.constant 0 : index
    %c0_100 = arith.constant 0 : index
    %124 = vector.load %arg4[%c0_97, %c1_98, %c0_99, %c0_100] : memref<1x9x20x128xf32, #tpu.memory_space<vmem>>, vector<1x1x20x128xf32>
    %125 = vector.shape_cast %124 : vector<1x1x20x128xf32> to vector<20x128xf32>
    %c0_101 = arith.constant 0 : index
    %c2_102 = arith.constant 2 : index
    %c0_103 = arith.constant 0 : index
    %c0_104 = arith.constant 0 : index
    %126 = vector.load %arg4[%c0_101, %c2_102, %c0_103, %c0_104] : memref<1x9x20x128xf32, #tpu.memory_space<vmem>>, vector<1x1x20x128xf32>
    %127 = vector.shape_cast %126 : vector<1x1x20x128xf32> to vector<20x128xf32>
    %c0_105 = arith.constant 0 : index
    %c3_106 = arith.constant 3 : index
    %c0_107 = arith.constant 0 : index
    %c0_108 = arith.constant 0 : index
    %128 = vector.load %arg4[%c0_105, %c3_106, %c0_107, %c0_108] : memref<1x9x20x128xf32, #tpu.memory_space<vmem>>, vector<1x1x20x128xf32>
    %129 = vector.shape_cast %128 : vector<1x1x20x128xf32> to vector<20x128xf32>
    %c0_109 = arith.constant 0 : index
    %c4_110 = arith.constant 4 : index
    %c0_111 = arith.constant 0 : index
    %c0_112 = arith.constant 0 : index
    %130 = vector.load %arg4[%c0_109, %c4_110, %c0_111, %c0_112] : memref<1x9x20x128xf32, #tpu.memory_space<vmem>>, vector<1x1x20x128xf32>
    %131 = vector.shape_cast %130 : vector<1x1x20x128xf32> to vector<20x128xf32>
    %c0_113 = arith.constant 0 : index
    %c5_114 = arith.constant 5 : index
    %c0_115 = arith.constant 0 : index
    %c0_116 = arith.constant 0 : index
    %132 = vector.load %arg4[%c0_113, %c5_114, %c0_115, %c0_116] : memref<1x9x20x128xf32, #tpu.memory_space<vmem>>, vector<1x1x20x128xf32>
    %133 = vector.shape_cast %132 : vector<1x1x20x128xf32> to vector<20x128xf32>
    %c0_117 = arith.constant 0 : index
    %c6_118 = arith.constant 6 : index
    %c0_119 = arith.constant 0 : index
    %c0_120 = arith.constant 0 : index
    %134 = vector.load %arg4[%c0_117, %c6_118, %c0_119, %c0_120] : memref<1x9x20x128xf32, #tpu.memory_space<vmem>>, vector<1x1x20x128xf32>
    %135 = vector.shape_cast %134 : vector<1x1x20x128xf32> to vector<20x128xf32>
    %c0_121 = arith.constant 0 : index
    %c7_122 = arith.constant 7 : index
    %c0_123 = arith.constant 0 : index
    %c0_124 = arith.constant 0 : index
    %136 = vector.load %arg4[%c0_121, %c7_122, %c0_123, %c0_124] : memref<1x9x20x128xf32, #tpu.memory_space<vmem>>, vector<1x1x20x128xf32>
    %137 = vector.shape_cast %136 : vector<1x1x20x128xf32> to vector<20x128xf32>
    %c0_125 = arith.constant 0 : index
    %c8_126 = arith.constant 8 : index
    %c0_127 = arith.constant 0 : index
    %c0_128 = arith.constant 0 : index
    %138 = vector.load %arg4[%c0_125, %c8_126, %c0_127, %c0_128] : memref<1x9x20x128xf32, #tpu.memory_space<vmem>>, vector<1x1x20x128xf32>
    %139 = vector.shape_cast %138 : vector<1x1x20x128xf32> to vector<20x128xf32>
    %c0_129 = arith.constant 0 : index
    %c0_130 = arith.constant 0 : index
    %140 = vector.load %arg5[%c0_129, %c0_130] : memref<9x128xf32, #tpu.memory_space<vmem>>, vector<1x128xf32>
    %141 = vector.shape_cast %140 : vector<1x128xf32> to vector<1x128xf32>
    %142 = vector.broadcast %141 : vector<1x128xf32> to vector<20x128xf32>
    %c4_131 = arith.constant 4 : index
    %c0_132 = arith.constant 0 : index
    %143 = vector.load %arg5[%c4_131, %c0_132] : memref<9x128xf32, #tpu.memory_space<vmem>>, vector<1x128xf32>
    %144 = vector.shape_cast %143 : vector<1x128xf32> to vector<1x128xf32>
    %145 = vector.broadcast %144 : vector<1x128xf32> to vector<20x128xf32>
    %c1_133 = arith.constant 1 : index
    %c0_134 = arith.constant 0 : index
    %146 = vector.load %arg5[%c1_133, %c0_134] : memref<9x128xf32, #tpu.memory_space<vmem>>, vector<1x128xf32>
    %147 = vector.shape_cast %146 : vector<1x128xf32> to vector<1x128xf32>
    %148 = vector.broadcast %147 : vector<1x128xf32> to vector<20x128xf32>
    %c5_135 = arith.constant 5 : index
    %c0_136 = arith.constant 0 : index
    %149 = vector.load %arg5[%c5_135, %c0_136] : memref<9x128xf32, #tpu.memory_space<vmem>>, vector<1x128xf32>
    %150 = vector.shape_cast %149 : vector<1x128xf32> to vector<1x128xf32>
    %151 = vector.broadcast %150 : vector<1x128xf32> to vector<20x128xf32>
    %c2_137 = arith.constant 2 : index
    %c0_138 = arith.constant 0 : index
    %152 = vector.load %arg5[%c2_137, %c0_138] : memref<9x128xf32, #tpu.memory_space<vmem>>, vector<1x128xf32>
    %153 = vector.shape_cast %152 : vector<1x128xf32> to vector<1x128xf32>
    %154 = vector.broadcast %153 : vector<1x128xf32> to vector<20x128xf32>
    %c6_139 = arith.constant 6 : index
    %c0_140 = arith.constant 0 : index
    %155 = vector.load %arg5[%c6_139, %c0_140] : memref<9x128xf32, #tpu.memory_space<vmem>>, vector<1x128xf32>
    %156 = vector.shape_cast %155 : vector<1x128xf32> to vector<1x128xf32>
    %157 = vector.broadcast %156 : vector<1x128xf32> to vector<20x128xf32>
    %c3_141 = arith.constant 3 : index
    %c0_142 = arith.constant 0 : index
    %158 = vector.load %arg5[%c3_141, %c0_142] : memref<9x128xf32, #tpu.memory_space<vmem>>, vector<1x128xf32>
    %159 = vector.shape_cast %158 : vector<1x128xf32> to vector<1x128xf32>
    %160 = vector.broadcast %159 : vector<1x128xf32> to vector<20x128xf32>
    %c7_143 = arith.constant 7 : index
    %c0_144 = arith.constant 0 : index
    %161 = vector.load %arg5[%c7_143, %c0_144] : memref<9x128xf32, #tpu.memory_space<vmem>>, vector<1x128xf32>
    %162 = vector.shape_cast %161 : vector<1x128xf32> to vector<1x128xf32>
    %163 = vector.broadcast %162 : vector<1x128xf32> to vector<20x128xf32>
    %c8_145 = arith.constant 8 : index
    %c0_146 = arith.constant 0 : index
    %164 = vector.load %arg5[%c8_145, %c0_146] : memref<9x128xf32, #tpu.memory_space<vmem>>, vector<1x128xf32>
    %165 = vector.shape_cast %164 : vector<1x128xf32> to vector<1x128xf32>
    %166 = vector.broadcast %165 : vector<1x128xf32> to vector<20x128xf32>
    %167 = tpu.iota {dimensions = array<i32: 0>} : vector<20x128xi32>
    %c1_i32 = arith.constant 1 : i32
    %168 = vector.broadcast %c1_i32 : i32 to vector<20x128xi32>
    %169 = arith.cmpi eq, %167, %168 : vector<20x128xi32>
    %170 = arith.extui %169 : vector<20x128xi1> to vector<20x128xi32>
    %171 = arith.sitofp %170 : vector<20x128xi32> to vector<20x128xf32>
    %c0_i32 = arith.constant 0 : i32
    %172 = vector.broadcast %c0_i32 : i32 to vector<20x128xi32>
    %173 = arith.cmpi eq, %167, %172 : vector<20x128xi32>
    %174 = arith.extui %173 : vector<20x128xi1> to vector<20x128xi32>
    %175 = arith.sitofp %174 : vector<20x128xi32> to vector<20x128xf32>
    %c18_i32 = arith.constant 18 : i32
    %176 = vector.broadcast %c18_i32 : i32 to vector<20x128xi32>
    %177 = arith.cmpi eq, %167, %176 : vector<20x128xi32>
    %178 = arith.extui %177 : vector<20x128xi1> to vector<20x128xi32>
    %179 = arith.sitofp %178 : vector<20x128xi32> to vector<20x128xf32>
    %c19_i32 = arith.constant 19 : i32
    %180 = vector.broadcast %c19_i32 : i32 to vector<20x128xi32>
    %181 = arith.cmpi eq, %167, %180 : vector<20x128xi32>
    %182 = arith.extui %181 : vector<20x128xi1> to vector<20x128xi32>
    %183 = arith.sitofp %182 : vector<20x128xi32> to vector<20x128xf32>
    %c2_i32 = arith.constant 2 : i32
    %184 = vector.broadcast %c2_i32 : i32 to vector<20x128xi32>
    %185 = arith.cmpi eq, %167, %184 : vector<20x128xi32>
    %186 = arith.extui %185 : vector<20x128xi1> to vector<20x128xi32>
    %187 = arith.sitofp %186 : vector<20x128xi32> to vector<20x128xf32>
    %c3_i32 = arith.constant 3 : i32
    %188 = vector.broadcast %c3_i32 : i32 to vector<20x128xi32>
    %189 = arith.cmpi eq, %167, %188 : vector<20x128xi32>
    %190 = arith.extui %189 : vector<20x128xi1> to vector<20x128xi32>
    %191 = arith.sitofp %190 : vector<20x128xi32> to vector<20x128xf32>
    %c17_i32 = arith.constant 17 : i32
    %192 = vector.broadcast %c17_i32 : i32 to vector<20x128xi32>
    %193 = arith.cmpi eq, %167, %192 : vector<20x128xi32>
    %194 = arith.extui %193 : vector<20x128xi1> to vector<20x128xi32>
    %195 = arith.sitofp %194 : vector<20x128xi32> to vector<20x128xf32>
    %c16_i32 = arith.constant 16 : i32
    %196 = vector.broadcast %c16_i32 : i32 to vector<20x128xi32>
    %197 = arith.cmpi eq, %167, %196 : vector<20x128xi32>
    %198 = arith.extui %197 : vector<20x128xi1> to vector<20x128xi32>
    %199 = arith.sitofp %198 : vector<20x128xi32> to vector<20x128xf32>
    %c2_i32_147 = arith.constant 2 : i32
    %200 = vector.broadcast %c2_i32_147 : i32 to vector<20x128xi32>
    %201 = arith.cmpi sge, %167, %200 : vector<20x128xi32>
    %c18_i32_148 = arith.constant 18 : i32
    %202 = vector.broadcast %c18_i32_148 : i32 to vector<20x128xi32>
    %203 = arith.cmpi slt, %167, %202 : vector<20x128xi32>
    %204 = arith.andi %201, %203 : vector<20x128xi1>
    %205 = arith.extui %204 : vector<20x128xi1> to vector<20x128xi32>
    %206 = arith.sitofp %205 : vector<20x128xi32> to vector<20x128xf32>
    %207 = arith.mulf %206, %166 : vector<20x128xf32>
    %cst = arith.constant 0.000000e+00 : f32
    %208 = vector.broadcast %cst : f32 to vector<36x128xf32>
    %c0_149 = arith.constant 0 : index
    %c0_150 = arith.constant 0 : index
    %209 = vector.load %arg9[%c0_149, %c0_150] : memref<36x128xf32, #tpu.memory_space<vmem>>, vector<36x128xf32>
    tpu.vector_store %arg9[%c0_149, %c0_150], %208 {strides = array<i32>} : memref<36x128xf32, #tpu.memory_space<vmem>>, vector<36x128xf32>,
    %c8_151 = arith.constant 8 : index
    %c0_152 = arith.constant 0 : index
    %210 = vector.load %arg9[%c8_151, %c0_152] : memref<36x128xf32, #tpu.memory_space<vmem>>, vector<20x128xf32>
    tpu.vector_store %arg9[%c8_151, %c0_152], %2 {strides = array<i32>} : memref<36x128xf32, #tpu.memory_space<vmem>>, vector<20x128xf32>,
    %c6_153 = arith.constant 6 : index
    %c0_154 = arith.constant 0 : index
    %211 = vector.load %arg9[%c6_153, %c0_154] : memref<36x128xf32, #tpu.memory_space<vmem>>, vector<20x128xf32>
    %c7_155 = arith.constant 7 : index
    %c0_156 = arith.constant 0 : index
    %212 = vector.load %arg9[%c7_155, %c0_156] : memref<36x128xf32, #tpu.memory_space<vmem>>, vector<20x128xf32>
    %c8_157 = arith.constant 8 : index
    %c0_158 = arith.constant 0 : index
    %213 = vector.load %arg9[%c8_157, %c0_158] : memref<36x128xf32, #tpu.memory_space<vmem>>, vector<20x128xf32>
    %c9_159 = arith.constant 9 : index
    %c0_160 = arith.constant 0 : index
    %214 = vector.load %arg9[%c9_159, %c0_160] : memref<36x128xf32, #tpu.memory_space<vmem>>, vector<20x128xf32>
    %c10_161 = arith.constant 10 : index
    %c0_162 = arith.constant 0 : index
    %215 = vector.load %arg9[%c10_161, %c0_162] : memref<36x128xf32, #tpu.memory_space<vmem>>, vector<20x128xf32>
    %216 = arith.mulf %7, %211 : vector<20x128xf32>
    %217 = arith.mulf %27, %212 : vector<20x128xf32>
    %218 = arith.mulf %47, %213 : vector<20x128xf32>
    %219 = arith.mulf %67, %214 : vector<20x128xf32>
    %220 = arith.mulf %87, %215 : vector<20x128xf32>
    %221 = arith.addf %216, %217 : vector<20x128xf32>
    %222 = arith.addf %218, %219 : vector<20x128xf32>
    %223 = arith.addf %221, %222 : vector<20x128xf32>
    %224 = arith.addf %223, %220 : vector<20x128xf32>
    %c2_i32_163 = arith.constant 2 : i32
    %225 = tpu.dynamic_rotate %224 by %c2_i32_163 dim 1 : vector<20x128xf32>, i32 -> vector<20x128xf32>
    %226 = arith.mulf %11, %211 : vector<20x128xf32>
    %227 = arith.mulf %31, %212 : vector<20x128xf32>
    %228 = arith.mulf %51, %213 : vector<20x128xf32>
    %229 = arith.mulf %71, %214 : vector<20x128xf32>
    %230 = arith.mulf %91, %215 : vector<20x128xf32>
    %231 = arith.addf %226, %227 : vector<20x128xf32>
    %232 = arith.addf %228, %229 : vector<20x128xf32>
    %233 = arith.addf %231, %232 : vector<20x128xf32>
    %234 = arith.addf %233, %230 : vector<20x128xf32>
    %c1_i32_164 = arith.constant 1 : i32
    %235 = tpu.dynamic_rotate %234 by %c1_i32_164 dim 1 : vector<20x128xf32>, i32 -> vector<20x128xf32>
    %236 = arith.mulf %15, %211 : vector<20x128xf32>
    %237 = arith.mulf %35, %212 : vector<20x128xf32>
    %238 = arith.mulf %55, %213 : vector<20x128xf32>
    %239 = arith.mulf %75, %214 : vector<20x128xf32>
    %240 = arith.mulf %95, %215 : vector<20x128xf32>
    %241 = arith.addf %236, %237 : vector<20x128xf32>
    %242 = arith.addf %238, %239 : vector<20x128xf32>
    %243 = arith.addf %241, %242 : vector<20x128xf32>
    %244 = arith.addf %243, %240 : vector<20x128xf32>
    %245 = arith.mulf %19, %211 : vector<20x128xf32>
    %246 = arith.mulf %39, %212 : vector<20x128xf32>
    %247 = arith.mulf %59, %213 : vector<20x128xf32>
    %248 = arith.mulf %79, %214 : vector<20x128xf32>
    %249 = arith.mulf %99, %215 : vector<20x128xf32>
    %250 = arith.addf %245, %246 : vector<20x128xf32>
    %251 = arith.addf %247, %248 : vector<20x128xf32>
    %252 = arith.addf %250, %251 : vector<20x128xf32>
    %253 = arith.addf %252, %249 : vector<20x128xf32>
    %c127_i32 = arith.constant 127 : i32
    %254 = tpu.dynamic_rotate %253 by %c127_i32 dim 1 : vector<20x128xf32>, i32 -> vector<20x128xf32>
    %255 = arith.mulf %23, %211 : vector<20x128xf32>
    %256 = arith.mulf %43, %212 : vector<20x128xf32>
    %257 = arith.mulf %63, %213 : vector<20x128xf32>
    %258 = arith.mulf %83, %214 : vector<20x128xf32>
    %259 = arith.mulf %103, %215 : vector<20x128xf32>
    %260 = arith.addf %255, %256 : vector<20x128xf32>
    %261 = arith.addf %257, %258 : vector<20x128xf32>
    %262 = arith.addf %260, %261 : vector<20x128xf32>
    %263 = arith.addf %262, %259 : vector<20x128xf32>
    %c126_i32 = arith.constant 126 : i32
    %264 = tpu.dynamic_rotate %263 by %c126_i32 dim 1 : vector<20x128xf32>, i32 -> vector<20x128xf32>
    %265 = arith.addf %225, %235 : vector<20x128xf32>
    %266 = arith.addf %244, %254 : vector<20x128xf32>
    %267 = arith.addf %265, %266 : vector<20x128xf32>
    %268 = arith.addf %267, %264 : vector<20x128xf32>
    %c1_i32_165 = arith.constant 1 : i32
    %269 = tpu.dynamic_rotate %268 by %c1_i32_165 dim 1 : vector<20x128xf32>, i32 -> vector<20x128xf32>
    %270 = arith.mulf %148, %269 : vector<20x128xf32>
    %c127_i32_166 = arith.constant 127 : i32
    %271 = tpu.dynamic_rotate %268 by %c127_i32_166 dim 1 : vector<20x128xf32>, i32 -> vector<20x128xf32>
    %272 = arith.mulf %154, %271 : vector<20x128xf32>
    %c3_i32_167 = arith.constant 3 : i32
    %273 = tpu.dynamic_rotate %268 by %c3_i32_167 dim 1 : vector<20x128xf32>, i32 -> vector<20x128xf32>
    %274 = arith.mulf %151, %273 : vector<20x128xf32>
    %c125_i32 = arith.constant 125 : i32
    %275 = tpu.dynamic_rotate %268 by %c125_i32 dim 1 : vector<20x128xf32>, i32 -> vector<20x128xf32>
    %276 = arith.mulf %157, %275 : vector<20x128xf32>
    %277 = arith.addf %268, %270 : vector<20x128xf32>
    %278 = arith.addf %272, %274 : vector<20x128xf32>
    %279 = arith.addf %277, %278 : vector<20x128xf32>
    %280 = arith.addf %279, %276 : vector<20x128xf32>
    %c8_168 = arith.constant 8 : index
    %c0_169 = arith.constant 0 : index
    %281 = vector.load %arg9[%c8_168, %c0_169] : memref<36x128xf32, #tpu.memory_space<vmem>>, vector<20x128xf32>
    tpu.vector_store %arg9[%c8_168, %c0_169], %280 {strides = array<i32>} : memref<36x128xf32, #tpu.memory_space<vmem>>, vector<20x128xf32>,
    %c7_170 = arith.constant 7 : index
    %c0_171 = arith.constant 0 : index
    %282 = vector.load %arg9[%c7_170, %c0_171] : memref<36x128xf32, #tpu.memory_space<vmem>>, vector<20x128xf32>
    %283 = arith.mulf %187, %282 : vector<20x128xf32>
    %c9_172 = arith.constant 9 : index
    %c0_173 = arith.constant 0 : index
    %284 = vector.load %arg9[%c9_172, %c0_173] : memref<36x128xf32, #tpu.memory_space<vmem>>, vector<20x128xf32>
    %285 = arith.mulf %195, %284 : vector<20x128xf32>
    %c5_174 = arith.constant 5 : index
    %c0_175 = arith.constant 0 : index
    %286 = vector.load %arg9[%c5_174, %c0_175] : memref<36x128xf32, #tpu.memory_space<vmem>>, vector<20x128xf32>
    %287 = arith.mulf %191, %286 : vector<20x128xf32>
    %c11_176 = arith.constant 11 : index
    %c0_177 = arith.constant 0 : index
    %288 = vector.load %arg9[%c11_176, %c0_177] : memref<36x128xf32, #tpu.memory_space<vmem>>, vector<20x128xf32>
    %289 = arith.mulf %199, %288 : vector<20x128xf32>
    %290 = arith.addf %280, %283 : vector<20x128xf32>
    %291 = arith.addf %285, %287 : vector<20x128xf32>
    %292 = arith.addf %290, %291 : vector<20x128xf32>
    %293 = arith.addf %292, %289 : vector<20x128xf32>
    %294 = arith.mulf %207, %293 : vector<20x128xf32>
    %cst_178 = arith.constant 0.000000e+00 : f32
    %295 = vector.broadcast %cst_178 : f32 to vector<20x128xf32>
    %296 = arith.mulf %294, %294 : vector<20x128xf32>
    %cst_179 = arith.constant dense<0.000000e+00> : vector<128xf32>
    %297 = vector.multi_reduction <add>, %296, %cst_179 [0] : vector<20x128xf32> to vector<128xf32>
    %298 = vector.shape_cast %297 : vector<128xf32> to vector<1x128xf32>
    %cst_180 = arith.constant dense<0.000000e+00> : vector<1x128xf32>
    %299 = tpu.matmul %298, %3, %cst_180 {dimension_numbers = #tpu.dot_dimension_numbers<[1], [0], [0], [1], [0, 0, 1, 1], [], []>} : vector<1x128xf32>, vector<128x128xf32>, vector<1x128xf32> -> vector<1x128xf32>
    %cst_181 = arith.constant 9.99999997E-7 : f32
    %300 = vector.broadcast %cst_181 : f32 to vector<1x128xf32>
    %301 = arith.mulf %300, %299 : vector<1x128xf32>
    %302 = arith.cmpf ole, %299, %301 : vector<1x128xf32>
    %303 = arith.extui %302 : vector<1x128xi1> to vector<1x128xi32>
    %304 = arith.sitofp %303 : vector<1x128xi32> to vector<1x128xf32>
    %305 = vector.shape_cast %304 : vector<1x128xf32> to vector<1x1x128xf32>
    %cst_182 = arith.constant dense<0x7F800000> : vector<1xf32>
    %306 = vector.multi_reduction <minimumf>, %305, %cst_182 [1, 2] : vector<1x1x128xf32> to vector<1xf32>
    %307 = vector.shape_cast %306 : vector<1xf32> to vector<1x1x1xf32>
    %308 = vector.extract %307[0, 0, 0] : f32 from vector<1x1x1xf32>
    %c0_i32_183 = arith.constant 0 : i32
    %c0_i32_184 = arith.constant 0 : i32
    %309:8 = scf.while (%arg10 = %c0_i32_183, %arg11 = %c0_i32_184, %arg12 = %308, %arg13 = %295, %arg14 = %294, %arg15 = %294, %arg16 = %299, %arg17 = %304) : (i32, i32, f32, vector<20x128xf32>, vector<20x128xf32>, vector<20x128xf32>, vector<1x128xf32>, vector<1x128xf32>) -> (i32, i32, f32, vector<20x128xf32>, vector<20x128xf32>, vector<20x128xf32>, vector<1x128xf32>, vector<1x128xf32>) {
      %c60_i32 = arith.constant 60 : i32
      %313 = arith.cmpi slt, %arg10, %c60_i32 : i32
      %cst_188 = arith.constant 5.000000e-01 : f32
      %314 = arith.cmpf olt, %arg12, %cst_188 : f32
      %315 = arith.andi %313, %314 : i1
      scf.condition(%315) %arg10, %arg11, %arg12, %arg13, %arg14, %arg15, %arg16, %arg17 : i32, i32, f32, vector<20x128xf32>, vector<20x128xf32>, vector<20x128xf32>, vector<1x128xf32>, vector<1x128xf32>
    } do {
    ^bb0(%arg10: i32, %arg11: i32, %arg12: f32, %arg13: vector<20x128xf32>, %arg14: vector<20x128xf32>, %arg15: vector<20x128xf32>, %arg16: vector<1x128xf32>, %arg17: vector<1x128xf32>):
      %c8_188 = arith.constant 8 : index
      %c0_189 = arith.constant 0 : index
      %313 = vector.load %arg9[%c8_188, %c0_189] : memref<36x128xf32, #tpu.memory_space<vmem>>, vector<20x128xf32>
      tpu.vector_store %arg9[%c8_188, %c0_189], %arg15 {strides = array<i32>} : memref<36x128xf32, #tpu.memory_space<vmem>>, vector<20x128xf32>,
      %c7_190 = arith.constant 7 : index
      %c0_191 = arith.constant 0 : index
      %314 = vector.load %arg9[%c7_190, %c0_191] : memref<36x128xf32, #tpu.memory_space<vmem>>, vector<20x128xf32>
      %c8_192 = arith.constant 8 : index
      %c0_193 = arith.constant 0 : index
      %315 = vector.load %arg9[%c8_192, %c0_193] : memref<36x128xf32, #tpu.memory_space<vmem>>, vector<20x128xf32>
      %c9_194 = arith.constant 9 : index
      %c0_195 = arith.constant 0 : index
      %316 = vector.load %arg9[%c9_194, %c0_195] : memref<36x128xf32, #tpu.memory_space<vmem>>, vector<20x128xf32>
      %c1_i32_196 = arith.constant 1 : i32
      %317 = tpu.dynamic_rotate %314 by %c1_i32_196 dim 1 : vector<20x128xf32>, i32 -> vector<20x128xf32>
      %318 = arith.mulf %105, %317 : vector<20x128xf32>
      %319 = arith.mulf %107, %314 : vector<20x128xf32>
      %c127_i32_197 = arith.constant 127 : i32
      %320 = tpu.dynamic_rotate %314 by %c127_i32_197 dim 1 : vector<20x128xf32>, i32 -> vector<20x128xf32>
      %321 = arith.mulf %109, %320 : vector<20x128xf32>
      %c1_i32_198 = arith.constant 1 : i32
      %322 = tpu.dynamic_rotate %315 by %c1_i32_198 dim 1 : vector<20x128xf32>, i32 -> vector<20x128xf32>
      %323 = arith.mulf %111, %322 : vector<20x128xf32>
      %324 = arith.mulf %113, %315 : vector<20x128xf32>
      %c127_i32_199 = arith.constant 127 : i32
      %325 = tpu.dynamic_rotate %315 by %c127_i32_199 dim 1 : vector<20x128xf32>, i32 -> vector<20x128xf32>
      %326 = arith.mulf %115, %325 : vector<20x128xf32>
      %c1_i32_200 = arith.constant 1 : i32
      %327 = tpu.dynamic_rotate %316 by %c1_i32_200 dim 1 : vector<20x128xf32>, i32 -> vector<20x128xf32>
      %328 = arith.mulf %117, %327 : vector<20x128xf32>
      %329 = arith.mulf %119, %316 : vector<20x128xf32>
      %c127_i32_201 = arith.constant 127 : i32
      %330 = tpu.dynamic_rotate %316 by %c127_i32_201 dim 1 : vector<20x128xf32>, i32 -> vector<20x128xf32>
      %331 = arith.mulf %121, %330 : vector<20x128xf32>
      %332 = arith.addf %318, %319 : vector<20x128xf32>
      %333 = arith.addf %321, %323 : vector<20x128xf32>
      %334 = arith.addf %324, %326 : vector<20x128xf32>
      %335 = arith.addf %328, %329 : vector<20x128xf32>
      %336 = arith.addf %332, %333 : vector<20x128xf32>
      %337 = arith.addf %334, %335 : vector<20x128xf32>
      %338 = arith.addf %336, %337 : vector<20x128xf32>
      %339 = arith.addf %338, %331 : vector<20x128xf32>
      %c9_202 = arith.constant 9 : index
      %c0_203 = arith.constant 0 : index
      %340 = vector.load %arg9[%c9_202, %c0_203] : memref<36x128xf32, #tpu.memory_space<vmem>>, vector<20x128xf32>
      %341 = arith.mulf %171, %340 : vector<20x128xf32>
      %c7_204 = arith.constant 7 : index
      %c0_205 = arith.constant 0 : index
      %342 = vector.load %arg9[%c7_204, %c0_205] : memref<36x128xf32, #tpu.memory_space<vmem>>, vector<20x128xf32>
      %343 = arith.mulf %179, %342 : vector<20x128xf32>
      %c11_206 = arith.constant 11 : index
      %c0_207 = arith.constant 0 : index
      %344 = vector.load %arg9[%c11_206, %c0_207] : memref<36x128xf32, #tpu.memory_space<vmem>>, vector<20x128xf32>
      %345 = arith.mulf %175, %344 : vector<20x128xf32>
      %c5_208 = arith.constant 5 : index
      %c0_209 = arith.constant 0 : index
      %346 = vector.load %arg9[%c5_208, %c0_209] : memref<36x128xf32, #tpu.memory_space<vmem>>, vector<20x128xf32>
      %347 = arith.mulf %183, %346 : vector<20x128xf32>
      %348 = arith.addf %arg15, %341 : vector<20x128xf32>
      %349 = arith.addf %343, %345 : vector<20x128xf32>
      %350 = arith.addf %348, %349 : vector<20x128xf32>
      %351 = arith.addf %350, %347 : vector<20x128xf32>
      %c127_i32_210 = arith.constant 127 : i32
      %352 = tpu.dynamic_rotate %351 by %c127_i32_210 dim 1 : vector<20x128xf32>, i32 -> vector<20x128xf32>
      %353 = arith.mulf %142, %352 : vector<20x128xf32>
      %c1_i32_211 = arith.constant 1 : i32
      %354 = tpu.dynamic_rotate %351 by %c1_i32_211 dim 1 : vector<20x128xf32>, i32 -> vector<20x128xf32>
      %355 = arith.mulf %160, %354 : vector<20x128xf32>
      %c125_i32_212 = arith.constant 125 : i32
      %356 = tpu.dynamic_rotate %351 by %c125_i32_212 dim 1 : vector<20x128xf32>, i32 -> vector<20x128xf32>
      %357 = arith.mulf %145, %356 : vector<20x128xf32>
      %c3_i32_213 = arith.constant 3 : i32
      %358 = tpu.dynamic_rotate %351 by %c3_i32_213 dim 1 : vector<20x128xf32>, i32 -> vector<20x128xf32>
      %359 = arith.mulf %163, %358 : vector<20x128xf32>
      %360 = arith.addf %351, %353 : vector<20x128xf32>
      %361 = arith.addf %355, %357 : vector<20x128xf32>
      %362 = arith.addf %360, %361 : vector<20x128xf32>
      %363 = arith.addf %362, %359 : vector<20x128xf32>
      %c8_214 = arith.constant 8 : index
      %c0_215 = arith.constant 0 : index
      %364 = vector.load %arg9[%c8_214, %c0_215] : memref<36x128xf32, #tpu.memory_space<vmem>>, vector<20x128xf32>
      tpu.vector_store %arg9[%c8_214, %c0_215], %363 {strides = array<i32>} : memref<36x128xf32, #tpu.memory_space<vmem>>, vector<20x128xf32>,
      %c6_216 = arith.constant 6 : index
      %c0_217 = arith.constant 0 : index
      %365 = vector.load %arg9[%c6_216, %c0_217] : memref<36x128xf32, #tpu.memory_space<vmem>>, vector<20x128xf32>
      %c7_218 = arith.constant 7 : index
      %c0_219 = arith.constant 0 : index
      %366 = vector.load %arg9[%c7_218, %c0_219] : memref<36x128xf32, #tpu.memory_space<vmem>>, vector<20x128xf32>
      %c8_220 = arith.constant 8 : index
      %c0_221 = arith.constant 0 : index
      %367 = vector.load %arg9[%c8_220, %c0_221] : memref<36x128xf32, #tpu.memory_space<vmem>>, vector<20x128xf32>
      %c9_222 = arith.constant 9 : index
      %c0_223 = arith.constant 0 : index
      %368 = vector.load %arg9[%c9_222, %c0_223] : memref<36x128xf32, #tpu.memory_space<vmem>>, vector<20x128xf32>
      %c10_224 = arith.constant 10 : index
      %c0_225 = arith.constant 0 : index
      %369 = vector.load %arg9[%c10_224, %c0_225] : memref<36x128xf32, #tpu.memory_space<vmem>>, vector<20x128xf32>
      %370 = arith.mulf %103, %365 : vector<20x128xf32>
      %371 = arith.mulf %83, %366 : vector<20x128xf32>
      %372 = arith.mulf %63, %367 : vector<20x128xf32>
      %373 = arith.mulf %43, %368 : vector<20x128xf32>
      %374 = arith.mulf %23, %369 : vector<20x128xf32>
      %375 = arith.addf %370, %371 : vector<20x128xf32>
      %376 = arith.addf %372, %373 : vector<20x128xf32>
      %377 = arith.addf %375, %376 : vector<20x128xf32>
      %378 = arith.addf %377, %374 : vector<20x128xf32>
      %c2_i32_226 = arith.constant 2 : i32
      %379 = tpu.dynamic_rotate %378 by %c2_i32_226 dim 1 : vector<20x128xf32>, i32 -> vector<20x128xf32>
      %380 = arith.mulf %99, %365 : vector<20x128xf32>
      %381 = arith.mulf %79, %366 : vector<20x128xf32>
      %382 = arith.mulf %59, %367 : vector<20x128xf32>
      %383 = arith.mulf %39, %368 : vector<20x128xf32>
      %384 = arith.mulf %19, %369 : vector<20x128xf32>
      %385 = arith.addf %380, %381 : vector<20x128xf32>
      %386 = arith.addf %382, %383 : vector<20x128xf32>
      %387 = arith.addf %385, %386 : vector<20x128xf32>
      %388 = arith.addf %387, %384 : vector<20x128xf32>
      %c1_i32_227 = arith.constant 1 : i32
      %389 = tpu.dynamic_rotate %388 by %c1_i32_227 dim 1 : vector<20x128xf32>, i32 -> vector<20x128xf32>
      %390 = arith.mulf %95, %365 : vector<20x128xf32>
      %391 = arith.mulf %75, %366 : vector<20x128xf32>
      %392 = arith.mulf %55, %367 : vector<20x128xf32>
      %393 = arith.mulf %35, %368 : vector<20x128xf32>
      %394 = arith.mulf %15, %369 : vector<20x128xf32>
      %395 = arith.addf %390, %391 : vector<20x128xf32>
      %396 = arith.addf %392, %393 : vector<20x128xf32>
      %397 = arith.addf %395, %396 : vector<20x128xf32>
      %398 = arith.addf %397, %394 : vector<20x128xf32>
      %399 = arith.mulf %91, %365 : vector<20x128xf32>
      %400 = arith.mulf %71, %366 : vector<20x128xf32>
      %401 = arith.mulf %51, %367 : vector<20x128xf32>
      %402 = arith.mulf %31, %368 : vector<20x128xf32>
      %403 = arith.mulf %11, %369 : vector<20x128xf32>
      %404 = arith.addf %399, %400 : vector<20x128xf32>
      %405 = arith.addf %401, %402 : vector<20x128xf32>
      %406 = arith.addf %404, %405 : vector<20x128xf32>
      %407 = arith.addf %406, %403 : vector<20x128xf32>
      %c127_i32_228 = arith.constant 127 : i32
      %408 = tpu.dynamic_rotate %407 by %c127_i32_228 dim 1 : vector<20x128xf32>, i32 -> vector<20x128xf32>
      %409 = arith.mulf %87, %365 : vector<20x128xf32>
      %410 = arith.mulf %67, %366 : vector<20x128xf32>
      %411 = arith.mulf %47, %367 : vector<20x128xf32>
      %412 = arith.mulf %27, %368 : vector<20x128xf32>
      %413 = arith.mulf %7, %369 : vector<20x128xf32>
      %414 = arith.addf %409, %410 : vector<20x128xf32>
      %415 = arith.addf %411, %412 : vector<20x128xf32>
      %416 = arith.addf %414, %415 : vector<20x128xf32>
      %417 = arith.addf %416, %413 : vector<20x128xf32>
      %c126_i32_229 = arith.constant 126 : i32
      %418 = tpu.dynamic_rotate %417 by %c126_i32_229 dim 1 : vector<20x128xf32>, i32 -> vector<20x128xf32>
      %419 = arith.addf %379, %389 : vector<20x128xf32>
      %420 = arith.addf %398, %408 : vector<20x128xf32>
      %421 = arith.addf %419, %420 : vector<20x128xf32>
      %422 = arith.addf %421, %418 : vector<20x128xf32>
      %423 = arith.mulf %207, %422 : vector<20x128xf32>
      %c8_230 = arith.constant 8 : index
      %c0_231 = arith.constant 0 : index
      %424 = vector.load %arg9[%c8_230, %c0_231] : memref<36x128xf32, #tpu.memory_space<vmem>>, vector<20x128xf32>
      tpu.vector_store %arg9[%c8_230, %c0_231], %423 {strides = array<i32>} : memref<36x128xf32, #tpu.memory_space<vmem>>, vector<20x128xf32>,
      %c6_232 = arith.constant 6 : index
      %c0_233 = arith.constant 0 : index
      %425 = vector.load %arg9[%c6_232, %c0_233] : memref<36x128xf32, #tpu.memory_space<vmem>>, vector<20x128xf32>
      %c7_234 = arith.constant 7 : index
      %c0_235 = arith.constant 0 : index
      %426 = vector.load %arg9[%c7_234, %c0_235] : memref<36x128xf32, #tpu.memory_space<vmem>>, vector<20x128xf32>
      %c8_236 = arith.constant 8 : index
      %c0_237 = arith.constant 0 : index
      %427 = vector.load %arg9[%c8_236, %c0_237] : memref<36x128xf32, #tpu.memory_space<vmem>>, vector<20x128xf32>
      %c9_238 = arith.constant 9 : index
      %c0_239 = arith.constant 0 : index
      %428 = vector.load %arg9[%c9_238, %c0_239] : memref<36x128xf32, #tpu.memory_space<vmem>>, vector<20x128xf32>
      %c10_240 = arith.constant 10 : index
      %c0_241 = arith.constant 0 : index
      %429 = vector.load %arg9[%c10_240, %c0_241] : memref<36x128xf32, #tpu.memory_space<vmem>>, vector<20x128xf32>
      %430 = arith.mulf %7, %425 : vector<20x128xf32>
      %431 = arith.mulf %27, %426 : vector<20x128xf32>
      %432 = arith.mulf %47, %427 : vector<20x128xf32>
      %433 = arith.mulf %67, %428 : vector<20x128xf32>
      %434 = arith.mulf %87, %429 : vector<20x128xf32>
      %435 = arith.addf %430, %431 : vector<20x128xf32>
      %436 = arith.addf %432, %433 : vector<20x128xf32>
      %437 = arith.addf %435, %436 : vector<20x128xf32>
      %438 = arith.addf %437, %434 : vector<20x128xf32>
      %c2_i32_242 = arith.constant 2 : i32
      %439 = tpu.dynamic_rotate %438 by %c2_i32_242 dim 1 : vector<20x128xf32>, i32 -> vector<20x128xf32>
      %440 = arith.mulf %11, %425 : vector<20x128xf32>
      %441 = arith.mulf %31, %426 : vector<20x128xf32>
      %442 = arith.mulf %51, %427 : vector<20x128xf32>
      %443 = arith.mulf %71, %428 : vector<20x128xf32>
      %444 = arith.mulf %91, %429 : vector<20x128xf32>
      %445 = arith.addf %440, %441 : vector<20x128xf32>
      %446 = arith.addf %442, %443 : vector<20x128xf32>
      %447 = arith.addf %445, %446 : vector<20x128xf32>
      %448 = arith.addf %447, %444 : vector<20x128xf32>
      %c1_i32_243 = arith.constant 1 : i32
      %449 = tpu.dynamic_rotate %448 by %c1_i32_243 dim 1 : vector<20x128xf32>, i32 -> vector<20x128xf32>
      %450 = arith.mulf %15, %425 : vector<20x128xf32>
      %451 = arith.mulf %35, %426 : vector<20x128xf32>
      %452 = arith.mulf %55, %427 : vector<20x128xf32>
      %453 = arith.mulf %75, %428 : vector<20x128xf32>
      %454 = arith.mulf %95, %429 : vector<20x128xf32>
      %455 = arith.addf %450, %451 : vector<20x128xf32>
      %456 = arith.addf %452, %453 : vector<20x128xf32>
      %457 = arith.addf %455, %456 : vector<20x128xf32>
      %458 = arith.addf %457, %454 : vector<20x128xf32>
      %459 = arith.mulf %19, %425 : vector<20x128xf32>
      %460 = arith.mulf %39, %426 : vector<20x128xf32>
      %461 = arith.mulf %59, %427 : vector<20x128xf32>
      %462 = arith.mulf %79, %428 : vector<20x128xf32>
      %463 = arith.mulf %99, %429 : vector<20x128xf32>
      %464 = arith.addf %459, %460 : vector<20x128xf32>
      %465 = arith.addf %461, %462 : vector<20x128xf32>
      %466 = arith.addf %464, %465 : vector<20x128xf32>
      %467 = arith.addf %466, %463 : vector<20x128xf32>
      %c127_i32_244 = arith.constant 127 : i32
      %468 = tpu.dynamic_rotate %467 by %c127_i32_244 dim 1 : vector<20x128xf32>, i32 -> vector<20x128xf32>
      %469 = arith.mulf %23, %425 : vector<20x128xf32>
      %470 = arith.mulf %43, %426 : vector<20x128xf32>
      %471 = arith.mulf %63, %427 : vector<20x128xf32>
      %472 = arith.mulf %83, %428 : vector<20x128xf32>
      %473 = arith.mulf %103, %429 : vector<20x128xf32>
      %474 = arith.addf %469, %470 : vector<20x128xf32>
      %475 = arith.addf %471, %472 : vector<20x128xf32>
      %476 = arith.addf %474, %475 : vector<20x128xf32>
      %477 = arith.addf %476, %473 : vector<20x128xf32>
      %c126_i32_245 = arith.constant 126 : i32
      %478 = tpu.dynamic_rotate %477 by %c126_i32_245 dim 1 : vector<20x128xf32>, i32 -> vector<20x128xf32>
      %479 = arith.addf %439, %449 : vector<20x128xf32>
      %480 = arith.addf %458, %468 : vector<20x128xf32>
      %481 = arith.addf %479, %480 : vector<20x128xf32>
      %482 = arith.addf %481, %478 : vector<20x128xf32>
      %c1_i32_246 = arith.constant 1 : i32
      %483 = tpu.dynamic_rotate %482 by %c1_i32_246 dim 1 : vector<20x128xf32>, i32 -> vector<20x128xf32>
      %484 = arith.mulf %148, %483 : vector<20x128xf32>
      %c127_i32_247 = arith.constant 127 : i32
      %485 = tpu.dynamic_rotate %482 by %c127_i32_247 dim 1 : vector<20x128xf32>, i32 -> vector<20x128xf32>
      %486 = arith.mulf %154, %485 : vector<20x128xf32>
      %c3_i32_248 = arith.constant 3 : i32
      %487 = tpu.dynamic_rotate %482 by %c3_i32_248 dim 1 : vector<20x128xf32>, i32 -> vector<20x128xf32>
      %488 = arith.mulf %151, %487 : vector<20x128xf32>
      %c125_i32_249 = arith.constant 125 : i32
      %489 = tpu.dynamic_rotate %482 by %c125_i32_249 dim 1 : vector<20x128xf32>, i32 -> vector<20x128xf32>
      %490 = arith.mulf %157, %489 : vector<20x128xf32>
      %491 = arith.addf %482, %484 : vector<20x128xf32>
      %492 = arith.addf %486, %488 : vector<20x128xf32>
      %493 = arith.addf %491, %492 : vector<20x128xf32>
      %494 = arith.addf %493, %490 : vector<20x128xf32>
      %c8_250 = arith.constant 8 : index
      %c0_251 = arith.constant 0 : index
      %495 = vector.load %arg9[%c8_250, %c0_251] : memref<36x128xf32, #tpu.memory_space<vmem>>, vector<20x128xf32>
      tpu.vector_store %arg9[%c8_250, %c0_251], %494 {strides = array<i32>} : memref<36x128xf32, #tpu.memory_space<vmem>>, vector<20x128xf32>,
      %c7_252 = arith.constant 7 : index
      %c0_253 = arith.constant 0 : index
      %496 = vector.load %arg9[%c7_252, %c0_253] : memref<36x128xf32, #tpu.memory_space<vmem>>, vector<20x128xf32>
      %497 = arith.mulf %187, %496 : vector<20x128xf32>
      %c9_254 = arith.constant 9 : index
      %c0_255 = arith.constant 0 : index
      %498 = vector.load %arg9[%c9_254, %c0_255] : memref<36x128xf32, #tpu.memory_space<vmem>>, vector<20x128xf32>
      %499 = arith.mulf %195, %498 : vector<20x128xf32>
      %c5_256 = arith.constant 5 : index
      %c0_257 = arith.constant 0 : index
      %500 = vector.load %arg9[%c5_256, %c0_257] : memref<36x128xf32, #tpu.memory_space<vmem>>, vector<20x128xf32>
      %501 = arith.mulf %191, %500 : vector<20x128xf32>
      %c11_258 = arith.constant 11 : index
      %c0_259 = arith.constant 0 : index
      %502 = vector.load %arg9[%c11_258, %c0_259] : memref<36x128xf32, #tpu.memory_space<vmem>>, vector<20x128xf32>
      %503 = arith.mulf %199, %502 : vector<20x128xf32>
      %504 = arith.addf %494, %497 : vector<20x128xf32>
      %505 = arith.addf %499, %501 : vector<20x128xf32>
      %506 = arith.addf %504, %505 : vector<20x128xf32>
      %507 = arith.addf %506, %503 : vector<20x128xf32>
      %c8_260 = arith.constant 8 : index
      %c0_261 = arith.constant 0 : index
      %508 = vector.load %arg9[%c8_260, %c0_261] : memref<36x128xf32, #tpu.memory_space<vmem>>, vector<20x128xf32>
      tpu.vector_store %arg9[%c8_260, %c0_261], %339 {strides = array<i32>} : memref<36x128xf32, #tpu.memory_space<vmem>>, vector<20x128xf32>,
      %c7_262 = arith.constant 7 : index
      %c0_263 = arith.constant 0 : index
      %509 = vector.load %arg9[%c7_262, %c0_263] : memref<36x128xf32, #tpu.memory_space<vmem>>, vector<20x128xf32>
      %c8_264 = arith.constant 8 : index
      %c0_265 = arith.constant 0 : index
      %510 = vector.load %arg9[%c8_264, %c0_265] : memref<36x128xf32, #tpu.memory_space<vmem>>, vector<20x128xf32>
      %c9_266 = arith.constant 9 : index
      %c0_267 = arith.constant 0 : index
      %511 = vector.load %arg9[%c9_266, %c0_267] : memref<36x128xf32, #tpu.memory_space<vmem>>, vector<20x128xf32>
      %c127_i32_268 = arith.constant 127 : i32
      %512 = tpu.dynamic_rotate %511 by %c127_i32_268 dim 1 : vector<20x128xf32>, i32 -> vector<20x128xf32>
      %513 = arith.mulf %123, %512 : vector<20x128xf32>
      %514 = arith.mulf %125, %511 : vector<20x128xf32>
      %c1_i32_269 = arith.constant 1 : i32
      %515 = tpu.dynamic_rotate %511 by %c1_i32_269 dim 1 : vector<20x128xf32>, i32 -> vector<20x128xf32>
      %516 = arith.mulf %127, %515 : vector<20x128xf32>
      %c127_i32_270 = arith.constant 127 : i32
      %517 = tpu.dynamic_rotate %510 by %c127_i32_270 dim 1 : vector<20x128xf32>, i32 -> vector<20x128xf32>
      %518 = arith.mulf %129, %517 : vector<20x128xf32>
      %519 = arith.mulf %131, %510 : vector<20x128xf32>
      %c1_i32_271 = arith.constant 1 : i32
      %520 = tpu.dynamic_rotate %510 by %c1_i32_271 dim 1 : vector<20x128xf32>, i32 -> vector<20x128xf32>
      %521 = arith.mulf %133, %520 : vector<20x128xf32>
      %c127_i32_272 = arith.constant 127 : i32
      %522 = tpu.dynamic_rotate %509 by %c127_i32_272 dim 1 : vector<20x128xf32>, i32 -> vector<20x128xf32>
      %523 = arith.mulf %135, %522 : vector<20x128xf32>
      %524 = arith.mulf %137, %509 : vector<20x128xf32>
      %c1_i32_273 = arith.constant 1 : i32
      %525 = tpu.dynamic_rotate %509 by %c1_i32_273 dim 1 : vector<20x128xf32>, i32 -> vector<20x128xf32>
      %526 = arith.mulf %139, %525 : vector<20x128xf32>
      %527 = arith.addf %513, %514 : vector<20x128xf32>
      %528 = arith.addf %516, %518 : vector<20x128xf32>
      %529 = arith.addf %519, %521 : vector<20x128xf32>
      %530 = arith.addf %523, %524 : vector<20x128xf32>
      %531 = arith.addf %527, %528 : vector<20x128xf32>
      %532 = arith.addf %529, %530 : vector<20x128xf32>
      %533 = arith.addf %531, %532 : vector<20x128xf32>
      %534 = arith.addf %533, %526 : vector<20x128xf32>
      %535 = vector.broadcast %0 : f32 to vector<20x128xf32>
      %536 = arith.mulf %535, %534 : vector<20x128xf32>
      %537 = arith.addf %507, %536 : vector<20x128xf32>
      %538 = arith.mulf %207, %537 : vector<20x128xf32>
      %539 = arith.mulf %arg15, %538 : vector<20x128xf32>
      %cst_274 = arith.constant dense<0.000000e+00> : vector<128xf32>
      %540 = vector.multi_reduction <add>, %539, %cst_274 [0] : vector<20x128xf32> to vector<128xf32>
      %541 = vector.shape_cast %540 : vector<128xf32> to vector<1x128xf32>
      %cst_275 = arith.constant dense<0.000000e+00> : vector<1x128xf32>
      %542 = tpu.matmul %541, %3, %cst_275 {dimension_numbers = #tpu.dot_dimension_numbers<[1], [0], [0], [1], [0, 0, 1, 1], [], []>} : vector<1x128xf32>, vector<128x128xf32>, vector<1x128xf32> -> vector<1x128xf32>
      %cst_276 = arith.constant 0.000000e+00 : f32
      %543 = vector.broadcast %cst_276 : f32 to vector<1x128xf32>
      %544 = arith.cmpf oeq, %542, %543 : vector<1x128xf32>
      %545 = arith.extui %544 : vector<1x128xi1> to vector<1x128xi32>
      %546 = arith.sitofp %545 : vector<1x128xi32> to vector<1x128xf32>
      %547 = arith.maximumf %arg17, %546 : vector<1x128xf32>
      %cst_277 = arith.constant 0.000000e+00 : f32
      %548 = vector.broadcast %cst_277 : f32 to vector<1x128xf32>
      %549 = arith.cmpf oeq, %542, %548 : vector<1x128xf32>
      %cst_278 = arith.constant 1.000000e+00 : f32
      %550 = vector.broadcast %cst_278 : f32 to vector<1x128xf32>
      %551 = arith.select %549, %550, %542 : vector<1x128xi1>, vector<1x128xf32>
      %cst_279 = arith.constant 5.000000e-01 : f32
      %552 = vector.broadcast %cst_279 : f32 to vector<1x128xf32>
      %553 = arith.cmpf ogt, %547, %552 : vector<1x128xf32>
      %554 = arith.divf %arg16, %551 : vector<1x128xf32>
      %cst_280 = arith.constant 0.000000e+00 : f32
      %555 = vector.broadcast %cst_280 : f32 to vector<1x128xf32>
      %556 = arith.select %553, %555, %554 : vector<1x128xi1>, vector<1x128xf32>
      %557 = vector.broadcast %556 : vector<1x128xf32> to vector<20x128xf32>
      %558 = arith.mulf %557, %arg15 : vector<20x128xf32>
      %559 = arith.addf %arg13, %558 : vector<20x128xf32>
      %c1_i32_281 = arith.constant 1 : i32
      %560 = arith.addi %arg11, %c1_i32_281 : i32
      %c50_i32 = arith.constant 50 : i32
      %561 = arith.cmpi eq, %560, %c50_i32 : i32
      %c0_i32_282 = arith.constant 0 : i32
      %562 = arith.select %561, %c0_i32_282, %560 : i32
      %563 = arith.extui %561 : i1 to i32
      %c0_i32_283 = arith.constant 0 : i32
      %564 = arith.cmpi ne, %563, %c0_i32_283 : i32
      %565 = scf.if %564 -> (vector<20x128xf32>) {
        %c8_292 = arith.constant 8 : index
        %c0_293 = arith.constant 0 : index
        %591 = vector.load %arg9[%c8_292, %c0_293] : memref<36x128xf32, #tpu.memory_space<vmem>>, vector<20x128xf32>
        tpu.vector_store %arg9[%c8_292, %c0_293], %559 {strides = array<i32>} : memref<36x128xf32, #tpu.memory_space<vmem>>, vector<20x128xf32>,
        %c7_294 = arith.constant 7 : index
        %c0_295 = arith.constant 0 : index
        %592 = vector.load %arg9[%c7_294, %c0_295] : memref<36x128xf32, #tpu.memory_space<vmem>>, vector<20x128xf32>
        %c8_296 = arith.constant 8 : index
        %c0_297 = arith.constant 0 : index
        %593 = vector.load %arg9[%c8_296, %c0_297] : memref<36x128xf32, #tpu.memory_space<vmem>>, vector<20x128xf32>
        %c9_298 = arith.constant 9 : index
        %c0_299 = arith.constant 0 : index
        %594 = vector.load %arg9[%c9_298, %c0_299] : memref<36x128xf32, #tpu.memory_space<vmem>>, vector<20x128xf32>
        %c1_i32_300 = arith.constant 1 : i32
        %595 = tpu.dynamic_rotate %592 by %c1_i32_300 dim 1 : vector<20x128xf32>, i32 -> vector<20x128xf32>
        %596 = arith.mulf %105, %595 : vector<20x128xf32>
        %597 = arith.mulf %107, %592 : vector<20x128xf32>
        %c127_i32_301 = arith.constant 127 : i32
        %598 = tpu.dynamic_rotate %592 by %c127_i32_301 dim 1 : vector<20x128xf32>, i32 -> vector<20x128xf32>
        %599 = arith.mulf %109, %598 : vector<20x128xf32>
        %c1_i32_302 = arith.constant 1 : i32
        %600 = tpu.dynamic_rotate %593 by %c1_i32_302 dim 1 : vector<20x128xf32>, i32 -> vector<20x128xf32>
        %601 = arith.mulf %111, %600 : vector<20x128xf32>
        %602 = arith.mulf %113, %593 : vector<20x128xf32>
        %c127_i32_303 = arith.constant 127 : i32
        %603 = tpu.dynamic_rotate %593 by %c127_i32_303 dim 1 : vector<20x128xf32>, i32 -> vector<20x128xf32>
        %604 = arith.mulf %115, %603 : vector<20x128xf32>
        %c1_i32_304 = arith.constant 1 : i32
        %605 = tpu.dynamic_rotate %594 by %c1_i32_304 dim 1 : vector<20x128xf32>, i32 -> vector<20x128xf32>
        %606 = arith.mulf %117, %605 : vector<20x128xf32>
        %607 = arith.mulf %119, %594 : vector<20x128xf32>
        %c127_i32_305 = arith.constant 127 : i32
        %608 = tpu.dynamic_rotate %594 by %c127_i32_305 dim 1 : vector<20x128xf32>, i32 -> vector<20x128xf32>
        %609 = arith.mulf %121, %608 : vector<20x128xf32>
        %610 = arith.addf %596, %597 : vector<20x128xf32>
        %611 = arith.addf %599, %601 : vector<20x128xf32>
        %612 = arith.addf %602, %604 : vector<20x128xf32>
        %613 = arith.addf %606, %607 : vector<20x128xf32>
        %614 = arith.addf %610, %611 : vector<20x128xf32>
        %615 = arith.addf %612, %613 : vector<20x128xf32>
        %616 = arith.addf %614, %615 : vector<20x128xf32>
        %617 = arith.addf %616, %609 : vector<20x128xf32>
        %c9_306 = arith.constant 9 : index
        %c0_307 = arith.constant 0 : index
        %618 = vector.load %arg9[%c9_306, %c0_307] : memref<36x128xf32, #tpu.memory_space<vmem>>, vector<20x128xf32>
        %619 = arith.mulf %171, %618 : vector<20x128xf32>
        %c7_308 = arith.constant 7 : index
        %c0_309 = arith.constant 0 : index
        %620 = vector.load %arg9[%c7_308, %c0_309] : memref<36x128xf32, #tpu.memory_space<vmem>>, vector<20x128xf32>
        %621 = arith.mulf %179, %620 : vector<20x128xf32>
        %c11_310 = arith.constant 11 : index
        %c0_311 = arith.constant 0 : index
        %622 = vector.load %arg9[%c11_310, %c0_311] : memref<36x128xf32, #tpu.memory_space<vmem>>, vector<20x128xf32>
        %623 = arith.mulf %175, %622 : vector<20x128xf32>
        %c5_312 = arith.constant 5 : index
        %c0_313 = arith.constant 0 : index
        %624 = vector.load %arg9[%c5_312, %c0_313] : memref<36x128xf32, #tpu.memory_space<vmem>>, vector<20x128xf32>
        %625 = arith.mulf %183, %624 : vector<20x128xf32>
        %626 = arith.addf %559, %619 : vector<20x128xf32>
        %627 = arith.addf %621, %623 : vector<20x128xf32>
        %628 = arith.addf %626, %627 : vector<20x128xf32>
        %629 = arith.addf %628, %625 : vector<20x128xf32>
        %c127_i32_314 = arith.constant 127 : i32
        %630 = tpu.dynamic_rotate %629 by %c127_i32_314 dim 1 : vector<20x128xf32>, i32 -> vector<20x128xf32>
        %631 = arith.mulf %142, %630 : vector<20x128xf32>
        %c1_i32_315 = arith.constant 1 : i32
        %632 = tpu.dynamic_rotate %629 by %c1_i32_315 dim 1 : vector<20x128xf32>, i32 -> vector<20x128xf32>
        %633 = arith.mulf %160, %632 : vector<20x128xf32>
        %c125_i32_316 = arith.constant 125 : i32
        %634 = tpu.dynamic_rotate %629 by %c125_i32_316 dim 1 : vector<20x128xf32>, i32 -> vector<20x128xf32>
        %635 = arith.mulf %145, %634 : vector<20x128xf32>
        %c3_i32_317 = arith.constant 3 : i32
        %636 = tpu.dynamic_rotate %629 by %c3_i32_317 dim 1 : vector<20x128xf32>, i32 -> vector<20x128xf32>
        %637 = arith.mulf %163, %636 : vector<20x128xf32>
        %638 = arith.addf %629, %631 : vector<20x128xf32>
        %639 = arith.addf %633, %635 : vector<20x128xf32>
        %640 = arith.addf %638, %639 : vector<20x128xf32>
        %641 = arith.addf %640, %637 : vector<20x128xf32>
        %c8_318 = arith.constant 8 : index
        %c0_319 = arith.constant 0 : index
        %642 = vector.load %arg9[%c8_318, %c0_319] : memref<36x128xf32, #tpu.memory_space<vmem>>, vector<20x128xf32>
        tpu.vector_store %arg9[%c8_318, %c0_319], %641 {strides = array<i32>} : memref<36x128xf32, #tpu.memory_space<vmem>>, vector<20x128xf32>,
        %c6_320 = arith.constant 6 : index
        %c0_321 = arith.constant 0 : index
        %643 = vector.load %arg9[%c6_320, %c0_321] : memref<36x128xf32, #tpu.memory_space<vmem>>, vector<20x128xf32>
        %c7_322 = arith.constant 7 : index
        %c0_323 = arith.constant 0 : index
        %644 = vector.load %arg9[%c7_322, %c0_323] : memref<36x128xf32, #tpu.memory_space<vmem>>, vector<20x128xf32>
        %c8_324 = arith.constant 8 : index
        %c0_325 = arith.constant 0 : index
        %645 = vector.load %arg9[%c8_324, %c0_325] : memref<36x128xf32, #tpu.memory_space<vmem>>, vector<20x128xf32>
        %c9_326 = arith.constant 9 : index
        %c0_327 = arith.constant 0 : index
        %646 = vector.load %arg9[%c9_326, %c0_327] : memref<36x128xf32, #tpu.memory_space<vmem>>, vector<20x128xf32>
        %c10_328 = arith.constant 10 : index
        %c0_329 = arith.constant 0 : index
        %647 = vector.load %arg9[%c10_328, %c0_329] : memref<36x128xf32, #tpu.memory_space<vmem>>, vector<20x128xf32>
        %648 = arith.mulf %103, %643 : vector<20x128xf32>
        %649 = arith.mulf %83, %644 : vector<20x128xf32>
        %650 = arith.mulf %63, %645 : vector<20x128xf32>
        %651 = arith.mulf %43, %646 : vector<20x128xf32>
        %652 = arith.mulf %23, %647 : vector<20x128xf32>
        %653 = arith.addf %648, %649 : vector<20x128xf32>
        %654 = arith.addf %650, %651 : vector<20x128xf32>
        %655 = arith.addf %653, %654 : vector<20x128xf32>
        %656 = arith.addf %655, %652 : vector<20x128xf32>
        %c2_i32_330 = arith.constant 2 : i32
        %657 = tpu.dynamic_rotate %656 by %c2_i32_330 dim 1 : vector<20x128xf32>, i32 -> vector<20x128xf32>
        %658 = arith.mulf %99, %643 : vector<20x128xf32>
        %659 = arith.mulf %79, %644 : vector<20x128xf32>
        %660 = arith.mulf %59, %645 : vector<20x128xf32>
        %661 = arith.mulf %39, %646 : vector<20x128xf32>
        %662 = arith.mulf %19, %647 : vector<20x128xf32>
        %663 = arith.addf %658, %659 : vector<20x128xf32>
        %664 = arith.addf %660, %661 : vector<20x128xf32>
        %665 = arith.addf %663, %664 : vector<20x128xf32>
        %666 = arith.addf %665, %662 : vector<20x128xf32>
        %c1_i32_331 = arith.constant 1 : i32
        %667 = tpu.dynamic_rotate %666 by %c1_i32_331 dim 1 : vector<20x128xf32>, i32 -> vector<20x128xf32>
        %668 = arith.mulf %95, %643 : vector<20x128xf32>
        %669 = arith.mulf %75, %644 : vector<20x128xf32>
        %670 = arith.mulf %55, %645 : vector<20x128xf32>
        %671 = arith.mulf %35, %646 : vector<20x128xf32>
        %672 = arith.mulf %15, %647 : vector<20x128xf32>
        %673 = arith.addf %668, %669 : vector<20x128xf32>
        %674 = arith.addf %670, %671 : vector<20x128xf32>
        %675 = arith.addf %673, %674 : vector<20x128xf32>
        %676 = arith.addf %675, %672 : vector<20x128xf32>
        %677 = arith.mulf %91, %643 : vector<20x128xf32>
        %678 = arith.mulf %71, %644 : vector<20x128xf32>
        %679 = arith.mulf %51, %645 : vector<20x128xf32>
        %680 = arith.mulf %31, %646 : vector<20x128xf32>
        %681 = arith.mulf %11, %647 : vector<20x128xf32>
        %682 = arith.addf %677, %678 : vector<20x128xf32>
        %683 = arith.addf %679, %680 : vector<20x128xf32>
        %684 = arith.addf %682, %683 : vector<20x128xf32>
        %685 = arith.addf %684, %681 : vector<20x128xf32>
        %c127_i32_332 = arith.constant 127 : i32
        %686 = tpu.dynamic_rotate %685 by %c127_i32_332 dim 1 : vector<20x128xf32>, i32 -> vector<20x128xf32>
        %687 = arith.mulf %87, %643 : vector<20x128xf32>
        %688 = arith.mulf %67, %644 : vector<20x128xf32>
        %689 = arith.mulf %47, %645 : vector<20x128xf32>
        %690 = arith.mulf %27, %646 : vector<20x128xf32>
        %691 = arith.mulf %7, %647 : vector<20x128xf32>
        %692 = arith.addf %687, %688 : vector<20x128xf32>
        %693 = arith.addf %689, %690 : vector<20x128xf32>
        %694 = arith.addf %692, %693 : vector<20x128xf32>
        %695 = arith.addf %694, %691 : vector<20x128xf32>
        %c126_i32_333 = arith.constant 126 : i32
        %696 = tpu.dynamic_rotate %695 by %c126_i32_333 dim 1 : vector<20x128xf32>, i32 -> vector<20x128xf32>
        %697 = arith.addf %657, %667 : vector<20x128xf32>
        %698 = arith.addf %676, %686 : vector<20x128xf32>
        %699 = arith.addf %697, %698 : vector<20x128xf32>
        %700 = arith.addf %699, %696 : vector<20x128xf32>
        %701 = arith.mulf %207, %700 : vector<20x128xf32>
        %c8_334 = arith.constant 8 : index
        %c0_335 = arith.constant 0 : index
        %702 = vector.load %arg9[%c8_334, %c0_335] : memref<36x128xf32, #tpu.memory_space<vmem>>, vector<20x128xf32>
        tpu.vector_store %arg9[%c8_334, %c0_335], %701 {strides = array<i32>} : memref<36x128xf32, #tpu.memory_space<vmem>>, vector<20x128xf32>,
        %c6_336 = arith.constant 6 : index
        %c0_337 = arith.constant 0 : index
        %703 = vector.load %arg9[%c6_336, %c0_337] : memref<36x128xf32, #tpu.memory_space<vmem>>, vector<20x128xf32>
        %c7_338 = arith.constant 7 : index
        %c0_339 = arith.constant 0 : index
        %704 = vector.load %arg9[%c7_338, %c0_339] : memref<36x128xf32, #tpu.memory_space<vmem>>, vector<20x128xf32>
        %c8_340 = arith.constant 8 : index
        %c0_341 = arith.constant 0 : index
        %705 = vector.load %arg9[%c8_340, %c0_341] : memref<36x128xf32, #tpu.memory_space<vmem>>, vector<20x128xf32>
        %c9_342 = arith.constant 9 : index
        %c0_343 = arith.constant 0 : index
        %706 = vector.load %arg9[%c9_342, %c0_343] : memref<36x128xf32, #tpu.memory_space<vmem>>, vector<20x128xf32>
        %c10_344 = arith.constant 10 : index
        %c0_345 = arith.constant 0 : index
        %707 = vector.load %arg9[%c10_344, %c0_345] : memref<36x128xf32, #tpu.memory_space<vmem>>, vector<20x128xf32>
        %708 = arith.mulf %7, %703 : vector<20x128xf32>
        %709 = arith.mulf %27, %704 : vector<20x128xf32>
        %710 = arith.mulf %47, %705 : vector<20x128xf32>
        %711 = arith.mulf %67, %706 : vector<20x128xf32>
        %712 = arith.mulf %87, %707 : vector<20x128xf32>
        %713 = arith.addf %708, %709 : vector<20x128xf32>
        %714 = arith.addf %710, %711 : vector<20x128xf32>
        %715 = arith.addf %713, %714 : vector<20x128xf32>
        %716 = arith.addf %715, %712 : vector<20x128xf32>
        %c2_i32_346 = arith.constant 2 : i32
        %717 = tpu.dynamic_rotate %716 by %c2_i32_346 dim 1 : vector<20x128xf32>, i32 -> vector<20x128xf32>
        %718 = arith.mulf %11, %703 : vector<20x128xf32>
        %719 = arith.mulf %31, %704 : vector<20x128xf32>
        %720 = arith.mulf %51, %705 : vector<20x128xf32>
        %721 = arith.mulf %71, %706 : vector<20x128xf32>
        %722 = arith.mulf %91, %707 : vector<20x128xf32>
        %723 = arith.addf %718, %719 : vector<20x128xf32>
        %724 = arith.addf %720, %721 : vector<20x128xf32>
        %725 = arith.addf %723, %724 : vector<20x128xf32>
        %726 = arith.addf %725, %722 : vector<20x128xf32>
        %c1_i32_347 = arith.constant 1 : i32
        %727 = tpu.dynamic_rotate %726 by %c1_i32_347 dim 1 : vector<20x128xf32>, i32 -> vector<20x128xf32>
        %728 = arith.mulf %15, %703 : vector<20x128xf32>
        %729 = arith.mulf %35, %704 : vector<20x128xf32>
        %730 = arith.mulf %55, %705 : vector<20x128xf32>
        %731 = arith.mulf %75, %706 : vector<20x128xf32>
        %732 = arith.mulf %95, %707 : vector<20x128xf32>
        %733 = arith.addf %728, %729 : vector<20x128xf32>
        %734 = arith.addf %730, %731 : vector<20x128xf32>
        %735 = arith.addf %733, %734 : vector<20x128xf32>
        %736 = arith.addf %735, %732 : vector<20x128xf32>
        %737 = arith.mulf %19, %703 : vector<20x128xf32>
        %738 = arith.mulf %39, %704 : vector<20x128xf32>
        %739 = arith.mulf %59, %705 : vector<20x128xf32>
        %740 = arith.mulf %79, %706 : vector<20x128xf32>
        %741 = arith.mulf %99, %707 : vector<20x128xf32>
        %742 = arith.addf %737, %738 : vector<20x128xf32>
        %743 = arith.addf %739, %740 : vector<20x128xf32>
        %744 = arith.addf %742, %743 : vector<20x128xf32>
        %745 = arith.addf %744, %741 : vector<20x128xf32>
        %c127_i32_348 = arith.constant 127 : i32
        %746 = tpu.dynamic_rotate %745 by %c127_i32_348 dim 1 : vector<20x128xf32>, i32 -> vector<20x128xf32>
        %747 = arith.mulf %23, %703 : vector<20x128xf32>
        %748 = arith.mulf %43, %704 : vector<20x128xf32>
        %749 = arith.mulf %63, %705 : vector<20x128xf32>
        %750 = arith.mulf %83, %706 : vector<20x128xf32>
        %751 = arith.mulf %103, %707 : vector<20x128xf32>
        %752 = arith.addf %747, %748 : vector<20x128xf32>
        %753 = arith.addf %749, %750 : vector<20x128xf32>
        %754 = arith.addf %752, %753 : vector<20x128xf32>
        %755 = arith.addf %754, %751 : vector<20x128xf32>
        %c126_i32_349 = arith.constant 126 : i32
        %756 = tpu.dynamic_rotate %755 by %c126_i32_349 dim 1 : vector<20x128xf32>, i32 -> vector<20x128xf32>
        %757 = arith.addf %717, %727 : vector<20x128xf32>
        %758 = arith.addf %736, %746 : vector<20x128xf32>
        %759 = arith.addf %757, %758 : vector<20x128xf32>
        %760 = arith.addf %759, %756 : vector<20x128xf32>
        %c1_i32_350 = arith.constant 1 : i32
        %761 = tpu.dynamic_rotate %760 by %c1_i32_350 dim 1 : vector<20x128xf32>, i32 -> vector<20x128xf32>
        %762 = arith.mulf %148, %761 : vector<20x128xf32>
        %c127_i32_351 = arith.constant 127 : i32
        %763 = tpu.dynamic_rotate %760 by %c127_i32_351 dim 1 : vector<20x128xf32>, i32 -> vector<20x128xf32>
        %764 = arith.mulf %154, %763 : vector<20x128xf32>
        %c3_i32_352 = arith.constant 3 : i32
        %765 = tpu.dynamic_rotate %760 by %c3_i32_352 dim 1 : vector<20x128xf32>, i32 -> vector<20x128xf32>
        %766 = arith.mulf %151, %765 : vector<20x128xf32>
        %c125_i32_353 = arith.constant 125 : i32
        %767 = tpu.dynamic_rotate %760 by %c125_i32_353 dim 1 : vector<20x128xf32>, i32 -> vector<20x128xf32>
        %768 = arith.mulf %157, %767 : vector<20x128xf32>
        %769 = arith.addf %760, %762 : vector<20x128xf32>
        %770 = arith.addf %764, %766 : vector<20x128xf32>
        %771 = arith.addf %769, %770 : vector<20x128xf32>
        %772 = arith.addf %771, %768 : vector<20x128xf32>
        %c8_354 = arith.constant 8 : index
        %c0_355 = arith.constant 0 : index
        %773 = vector.load %arg9[%c8_354, %c0_355] : memref<36x128xf32, #tpu.memory_space<vmem>>, vector<20x128xf32>
        tpu.vector_store %arg9[%c8_354, %c0_355], %772 {strides = array<i32>} : memref<36x128xf32, #tpu.memory_space<vmem>>, vector<20x128xf32>,
        %c7_356 = arith.constant 7 : index
        %c0_357 = arith.constant 0 : index
        %774 = vector.load %arg9[%c7_356, %c0_357] : memref<36x128xf32, #tpu.memory_space<vmem>>, vector<20x128xf32>
        %775 = arith.mulf %187, %774 : vector<20x128xf32>
        %c9_358 = arith.constant 9 : index
        %c0_359 = arith.constant 0 : index
        %776 = vector.load %arg9[%c9_358, %c0_359] : memref<36x128xf32, #tpu.memory_space<vmem>>, vector<20x128xf32>
        %777 = arith.mulf %195, %776 : vector<20x128xf32>
        %c5_360 = arith.constant 5 : index
        %c0_361 = arith.constant 0 : index
        %778 = vector.load %arg9[%c5_360, %c0_361] : memref<36x128xf32, #tpu.memory_space<vmem>>, vector<20x128xf32>
        %779 = arith.mulf %191, %778 : vector<20x128xf32>
        %c11_362 = arith.constant 11 : index
        %c0_363 = arith.constant 0 : index
        %780 = vector.load %arg9[%c11_362, %c0_363] : memref<36x128xf32, #tpu.memory_space<vmem>>, vector<20x128xf32>
        %781 = arith.mulf %199, %780 : vector<20x128xf32>
        %782 = arith.addf %772, %775 : vector<20x128xf32>
        %783 = arith.addf %777, %779 : vector<20x128xf32>
        %784 = arith.addf %782, %783 : vector<20x128xf32>
        %785 = arith.addf %784, %781 : vector<20x128xf32>
        %c8_364 = arith.constant 8 : index
        %c0_365 = arith.constant 0 : index
        %786 = vector.load %arg9[%c8_364, %c0_365] : memref<36x128xf32, #tpu.memory_space<vmem>>, vector<20x128xf32>
        tpu.vector_store %arg9[%c8_364, %c0_365], %617 {strides = array<i32>} : memref<36x128xf32, #tpu.memory_space<vmem>>, vector<20x128xf32>,
        %c7_366 = arith.constant 7 : index
        %c0_367 = arith.constant 0 : index
        %787 = vector.load %arg9[%c7_366, %c0_367] : memref<36x128xf32, #tpu.memory_space<vmem>>, vector<20x128xf32>
        %c8_368 = arith.constant 8 : index
        %c0_369 = arith.constant 0 : index
        %788 = vector.load %arg9[%c8_368, %c0_369] : memref<36x128xf32, #tpu.memory_space<vmem>>, vector<20x128xf32>
        %c9_370 = arith.constant 9 : index
        %c0_371 = arith.constant 0 : index
        %789 = vector.load %arg9[%c9_370, %c0_371] : memref<36x128xf32, #tpu.memory_space<vmem>>, vector<20x128xf32>
        %c127_i32_372 = arith.constant 127 : i32
        %790 = tpu.dynamic_rotate %789 by %c127_i32_372 dim 1 : vector<20x128xf32>, i32 -> vector<20x128xf32>
        %791 = arith.mulf %123, %790 : vector<20x128xf32>
        %792 = arith.mulf %125, %789 : vector<20x128xf32>
        %c1_i32_373 = arith.constant 1 : i32
        %793 = tpu.dynamic_rotate %789 by %c1_i32_373 dim 1 : vector<20x128xf32>, i32 -> vector<20x128xf32>
        %794 = arith.mulf %127, %793 : vector<20x128xf32>
        %c127_i32_374 = arith.constant 127 : i32
        %795 = tpu.dynamic_rotate %788 by %c127_i32_374 dim 1 : vector<20x128xf32>, i32 -> vector<20x128xf32>
        %796 = arith.mulf %129, %795 : vector<20x128xf32>
        %797 = arith.mulf %131, %788 : vector<20x128xf32>
        %c1_i32_375 = arith.constant 1 : i32
        %798 = tpu.dynamic_rotate %788 by %c1_i32_375 dim 1 : vector<20x128xf32>, i32 -> vector<20x128xf32>
        %799 = arith.mulf %133, %798 : vector<20x128xf32>
        %c127_i32_376 = arith.constant 127 : i32
        %800 = tpu.dynamic_rotate %787 by %c127_i32_376 dim 1 : vector<20x128xf32>, i32 -> vector<20x128xf32>
        %801 = arith.mulf %135, %800 : vector<20x128xf32>
        %802 = arith.mulf %137, %787 : vector<20x128xf32>
        %c1_i32_377 = arith.constant 1 : i32
        %803 = tpu.dynamic_rotate %787 by %c1_i32_377 dim 1 : vector<20x128xf32>, i32 -> vector<20x128xf32>
        %804 = arith.mulf %139, %803 : vector<20x128xf32>
        %805 = arith.addf %791, %792 : vector<20x128xf32>
        %806 = arith.addf %794, %796 : vector<20x128xf32>
        %807 = arith.addf %797, %799 : vector<20x128xf32>
        %808 = arith.addf %801, %802 : vector<20x128xf32>
        %809 = arith.addf %805, %806 : vector<20x128xf32>
        %810 = arith.addf %807, %808 : vector<20x128xf32>
        %811 = arith.addf %809, %810 : vector<20x128xf32>
        %812 = arith.addf %811, %804 : vector<20x128xf32>
        %813 = vector.broadcast %0 : f32 to vector<20x128xf32>
        %814 = arith.mulf %813, %812 : vector<20x128xf32>
        %815 = arith.addf %785, %814 : vector<20x128xf32>
        %816 = arith.mulf %207, %815 : vector<20x128xf32>
        %817 = arith.subf %294, %816 : vector<20x128xf32>
        scf.yield %817 : vector<20x128xf32>
      } else {
        %591 = vector.broadcast %556 : vector<1x128xf32> to vector<20x128xf32>
        %592 = arith.mulf %591, %538 : vector<20x128xf32>
        %593 = arith.subf %arg14, %592 : vector<20x128xf32>
        scf.yield %593 : vector<20x128xf32>
      }
      %566 = arith.mulf %565, %565 : vector<20x128xf32>
      %cst_284 = arith.constant dense<0.000000e+00> : vector<128xf32>
      %567 = vector.multi_reduction <add>, %566, %cst_284 [0] : vector<20x128xf32> to vector<128xf32>
      %568 = vector.shape_cast %567 : vector<128xf32> to vector<1x128xf32>
      %cst_285 = arith.constant dense<0.000000e+00> : vector<1x128xf32>
      %569 = tpu.matmul %568, %3, %cst_285 {dimension_numbers = #tpu.dot_dimension_numbers<[1], [0], [0], [1], [0, 0, 1, 1], [], []>} : vector<1x128xf32>, vector<128x128xf32>, vector<1x128xf32> -> vector<1x128xf32>
      %570 = arith.cmpf ole, %569, %301 : vector<1x128xf32>
      %571 = arith.extui %570 : vector<1x128xi1> to vector<1x128xi32>
      %572 = arith.sitofp %571 : vector<1x128xi32> to vector<1x128xf32>
      %573 = arith.maximumf %547, %572 : vector<1x128xf32>
      %cst_286 = arith.constant 0.000000e+00 : f32
      %574 = vector.broadcast %cst_286 : f32 to vector<1x128xf32>
      %575 = arith.cmpf oeq, %arg16, %574 : vector<1x128xf32>
      %cst_287 = arith.constant 1.000000e+00 : f32
      %576 = vector.broadcast %cst_287 : f32 to vector<1x128xf32>
      %577 = arith.select %575, %576, %arg16 : vector<1x128xi1>, vector<1x128xf32>
      %cst_288 = arith.constant 0.000000e+00 : f32
      %578 = vector.broadcast %cst_288 : f32 to vector<1x128xf32>
      %579 = arith.cmpf oeq, %arg16, %578 : vector<1x128xf32>
      %580 = arith.divf %569, %577 : vector<1x128xf32>
      %cst_289 = arith.constant 0.000000e+00 : f32
      %581 = vector.broadcast %cst_289 : f32 to vector<1x128xf32>
      %582 = arith.select %579, %581, %580 : vector<1x128xi1>, vector<1x128xf32>
      %583 = vector.broadcast %582 : vector<1x128xf32> to vector<20x128xf32>
      %584 = arith.mulf %583, %arg15 : vector<20x128xf32>
      %585 = arith.addf %565, %584 : vector<20x128xf32>
      %c1_i32_290 = arith.constant 1 : i32
      %586 = arith.addi %arg10, %c1_i32_290 : i32
      %587 = vector.shape_cast %573 : vector<1x128xf32> to vector<1x1x128xf32>
      %cst_291 = arith.constant dense<0x7F800000> : vector<1xf32>
      %588 = vector.multi_reduction <minimumf>, %587, %cst_291 [1, 2] : vector<1x1x128xf32> to vector<1xf32>
      %589 = vector.shape_cast %588 : vector<1xf32> to vector<1x1x1xf32>
      %590 = vector.extract %589[0, 0, 0] : f32 from vector<1x1x1xf32>
      scf.yield %586, %562, %590, %559, %565, %585, %569, %573 : i32, i32, f32, vector<20x128xf32>, vector<20x128xf32>, vector<20x128xf32>, vector<1x128xf32>, vector<1x128xf32>
    }
    %c0_185 = arith.constant 0 : index
    %c0_186 = arith.constant 0 : index
    %c0_187 = arith.constant 0 : index
    %310 = vector.load %arg8[%c0_185, %c0_186, %c0_187] : memref<1x20x128xf32, #tpu.memory_space<vmem>>, vector<1x20x128xf32>
    %311 = vector.shape_cast %310 : vector<1x20x128xf32> to vector<20x128xf32>
    %312 = vector.shape_cast %309#3 : vector<20x128xf32> to vector<1x20x128xf32>
    tpu.vector_store %arg8[%c0_185, %c0_186, %c0_187], %312 {strides = array<i32>} : memref<1x20x128xf32, #tpu.memory_space<vmem>>, vector<1x20x128xf32>,
    return
  }
  func.func @transform_0(%arg0: i32) -> (i32, i32, i32) {
    %c0_i32 = arith.constant 0 : i32
    %c0_i32_0 = arith.constant 0 : i32
    %c0_i32_1 = arith.constant 0 : i32
    return %arg0, %c0_i32, %c0_i32_0 : i32, i32, i32
  }
  func.func @transform_1(%arg0: i32) -> (i32, i32, i32) {
    %c0_i32 = arith.constant 0 : i32
    %c0_i32_0 = arith.constant 0 : i32
    %c0_i32_1 = arith.constant 0 : i32
    return %arg0, %c0_i32, %c0_i32_0 : i32, i32, i32
  }
  func.func @transform_2(%arg0: i32) -> (i32, i32, i32, i32) {
    %c0_i32 = arith.constant 0 : i32
    %c0_i32_0 = arith.constant 0 : i32
    %c0_i32_1 = arith.constant 0 : i32
    %c0_i32_2 = arith.constant 0 : i32
    return %arg0, %c0_i32, %c0_i32_0, %c0_i32_1 : i32, i32, i32, i32
  }
  func.func @transform_3(%arg0: i32) -> (i32, i32, i32, i32) {
    %c0_i32 = arith.constant 0 : i32
    %c0_i32_0 = arith.constant 0 : i32
    %c0_i32_1 = arith.constant 0 : i32
    %c0_i32_2 = arith.constant 0 : i32
    return %arg0, %c0_i32, %c0_i32_0, %c0_i32_1 : i32, i32, i32, i32
  }
  func.func @transform_4(%arg0: i32) -> (i32, i32) {
    %c0_i32 = arith.constant 0 : i32
    %c0_i32_0 = arith.constant 0 : i32
    %c0_i32_1 = arith.constant 0 : i32
    return %c0_i32, %c0_i32_0 : i32, i32
  }
  func.func @transform_5(%arg0: i32) -> (i32, i32) {
    %c0_i32 = arith.constant 0 : i32
    %c0_i32_0 = arith.constant 0 : i32
    %c0_i32_1 = arith.constant 0 : i32
    return %c0_i32, %c0_i32_0 : i32, i32
  }
  func.func @transform_6(%arg0: i32) -> (i32, i32) {
    %c0_i32 = arith.constant 0 : i32
    %c0_i32_0 = arith.constant 0 : i32
    %c0_i32_1 = arith.constant 0 : i32
    return %c0_i32, %c0_i32_0 : i32, i32
  }
  func.func @transform_7(%arg0: i32) -> (i32, i32, i32) {
    %c0_i32 = arith.constant 0 : i32
    %c0_i32_0 = arith.constant 0 : i32
    %c0_i32_1 = arith.constant 0 : i32
    return %arg0, %c0_i32, %c0_i32_0 : i32, i32, i32
  }
}

</mosaic_0001>

<llo_original>
// kernel: tpu_custom_call.1
$region0: #{tpu_custom_call.1}
  #allocation0 [shape = 'u32[]', space=smem, size = 0x4, offset = 0x4, fixed_abs, tag = 'smem constant byte address 0x4 - core index']
  #allocation1 [shape = 'u32[144,128]{1,0:T(1,128)}', space=vmem, size = 0x12000, scoped, tag = 'internal scratch']
  %s0 = inlined_call_operand.hbm [shape: f32[8,128], index: 0, kind: input, shape index: {}]
  %s1 = inlined_call_operand.hbm [shape: f32[8,128], index: 1, kind: output, shape index: {}]
  %s2 = sld [smem:[#allocation0]]
  $region18: #{tpu_custom_call.1} parent=0
    _
  %s4 = ssub.s32 1, %s2
  %s5 = scalar_select 0, %s4, %s2
  $region1: #{tpu_custom_call.1} parent=0
    #allocation2 [shape = 'u8[4096]{0}', space=vmem, size = 0x1000, scoped, tag = 'input window, operand 0, single buffered']
    #allocation3 [shape = 's32[1]{0}', space=sflag, size = 0x4, scoped, tag = 'scoped memory for tpu_custom_call.1']
    #allocation4 [shape = 's32[1]{0}', space=sflag, size = 0x4, scoped, tag = 'scoped memory for tpu_custom_call.1']
    #allocation5 [shape = 'u8[4096]{0}', space=vmem, size = 0x1000, scoped, tag = 'output window, operand 0, single buffered']
    %6 = vsyncpa [#allocation3], 0
    %7 = vsyncpa [#allocation4], 0
    // Predicated region
    $region2: #{tpu_custom_call.1} parent=1 // pred_check
      _
    $region3: #{tpu_custom_call.1} parent=1 // pred_check_branch
      %9 = sbr.rel (0) target = $region5
    $region4: #{tpu_custom_call.1} parent=1 // pred_region
      %s11 = ssub.s32 128, 128
      %12 = vsyncadd [#allocation3], %s11
      %s14 = sshll.u32 [#allocation2], 4
      %s15 = int_to_ptr.vmem [resolvable:$true] %s14
      %17 = dma.hbm_to_vmem [thread:$0]  %s0, 128, %s15, [#allocation3]
    $region5: #{tpu_custom_call.1} parent=1 // pred_fallthru
      _
    // Predicated region
    $region6: #{tpu_custom_call.1} parent=1 // pred_check
      _
    $region7: #{tpu_custom_call.1} parent=1 // pred_check_branch
      %19 = sbr.rel (0) target = $region9
    $region8: #{tpu_custom_call.1} parent=1 // pred_region
      %20 = dma.done [#allocation3], 128
    $region9: #{tpu_custom_call.1} parent=1 // pred_fallthru
      _
    %v21 = vld [vmem:[#allocation2] sm:$0xff]
    %22 = vrot.lane.b32.xlu0 %v21, 1
    %v23 = vpop.permute.xlu0 %22
    %24 = vst [vmem:[#allocation5] sm:$0xff] %v23
    // Predicated region
    $region10: #{tpu_custom_call.1} parent=1 // pred_check
      _
    $region11: #{tpu_custom_call.1} parent=1 // pred_check_branch
      %26 = sbr.rel (0) target = $region13
    $region12: #{tpu_custom_call.1} parent=1 // pred_region
      %s28 = ssub.s32 128, 128
      %29 = vsyncadd [#allocation4], %s28
      %s31 = sshll.u32 [#allocation5], 4
      %s32 = int_to_ptr.vmem [resolvable:$true] %s31
      %34 = dma.vmem_to_hbm [thread:$0]  %s32, 128, %s1, [#allocation4]
    $region13: #{tpu_custom_call.1} parent=1 // pred_fallthru
      _
    // Predicated region
    $region14: #{tpu_custom_call.1} parent=1 // pred_check
      _
    $region15: #{tpu_custom_call.1} parent=1 // pred_check_branch
      %36 = sbr.rel (0) target = $region17
    $region16: #{tpu_custom_call.1} parent=1 // pred_region
      %37 = dma.done [#allocation4], 128
    $region17: #{tpu_custom_call.1} parent=1 // pred_fallthru
      _
    %38 = vsyncpa [#allocation3], 1
    %39 = vsyncpa [#allocation4], 1

// kernel: wiener_kpn_sa_forward.1
$region0: #{wiener_kpn_sa_forward.1}
  #allocation0 [shape = 'u32[]', space=smem, size = 0x4, offset = 0x4, fixed_abs, tag = 'smem constant byte address 0x4 - core index']
  #allocation1 [shape = 'u32[144,128]{1,0:T(1,128)}', space=vmem, size = 0x12000, scoped, tag = 'internal scratch']
  #allocation2 [shape = 'f32[36,128]{1,0:T(8,128)}', space=vmem, size = 0x5000, scoped, tag = 'scratch operand']
  #allocation3 [shape = 'f32[1,1]{1,0:T(1,128)S(6)}', space=smem, size = 0x200, scoped, tag = 'scoped memory for wiener_kpn_sa_forward.1']
  %s0 = inlined_call_operand.vmem [shape: f32[2,20,128], index: 0, kind: input, shape index: {}]
  %s1 = inlined_call_operand.vmem [shape: f32[2,25,128], index: 1, kind: input, shape index: {}]
  %s2 = inlined_call_operand.vmem [shape: f32[2,9,20,128], index: 2, kind: input, shape index: {}]
  %s3 = inlined_call_operand.vmem [shape: f32[2,9,20,128], index: 3, kind: input, shape index: {}]
  %s4 = inlined_call_operand.vmem [shape: f32[9,128], index: 4, kind: input, shape index: {}]
  %s5 = inlined_call_operand.vmem [shape: f32[128,128], index: 5, kind: input, shape index: {}]
  %s6 = inlined_call_operand.<no memory space> [shape: f32[1,1], index: 6, kind: input, shape index: {}]
  %s7 = inlined_call_operand.vmem [shape: f32[2,20,128], index: 7, kind: output, shape index: {}]
  %s8 = sld [smem:[#allocation0]]
  $region76: #{wiener_kpn_sa_forward.1} parent=0
    _
  %s10 = ssub.s32 1, %s8
  %s11 = scalar_select 0, %s10, %s8
  %12 = sst [smem:[#allocation3]] %s6
  loop: start=0, step=1, limit=4
  $region2: #{wiener_kpn_sa_forward.1} parent=0 // loop_pre_header
    _
  $region3: #{wiener_kpn_sa_forward.1} parent=0 // loop_header
    %s14 = sphi 0, %s18
    %p15 = scmp.ge.s32.totalorder %s14, 4
    %s24 = sphi 0, %s26
    %s27 = sphi 0, %s24
    %s28 = sphi 0, %s27
    %s44 = sphi 0, %s28
    %s50 = sphi 0, %s52
    %s53 = sphi 0, %s50
    %s54 = sphi 0, %s53
    %s70 = sphi 0, %s54
    %s76 = sphi 0, %s78
    %s79 = sphi 0, %s76
    %s80 = sphi 0, %s79
    %s96 = sphi 0, %s80
    %s102 = sphi 0, %s104
    %s105 = sphi 0, %s102
    %s106 = sphi 0, %s105
    %s122 = sphi 0, %s106
    %s126 = sphi 0, %s126
    %s128 = sphi 0, %s126
    %s129 = sphi 0, %s128
    %s143 = sphi 0, %s129
    %s147 = sphi 0, %s147
    %s149 = sphi 0, %s147
    %s150 = sphi 0, %s149
    %s164 = sphi 0, %s150
    %s168 = sphi 0, %s168
    %s170 = sphi 0, %s168
    %s171 = sphi 0, %s170
    %s185 = sphi 0, %s171
    %s191 = sphi 0, %s193
    %s194 = sphi 0, %s191
    %s195 = sphi 0, %s194
    %s211 = sphi 0, %s195
  $region4: #{wiener_kpn_sa_forward.1} parent=0 // loop_header_branch
    %17 = sbr.rel (%p15) target = $region8
  $region5: #{wiener_kpn_sa_forward.1} parent=0 // loop_body
    %s19 = ssub.s32 %s14, 1
    %s20 = ssub.s32 %s14, 2
    %s21 = sadd.s32 %s14, 1
    %s22 = ssub.s32 %s14, %s21
    %p23 = scmp.eq.s32.totalorder %s22, 0
    %s25 = sadd.s32 %s24, 1
    %s26 = scalar_select %p23, %s24, %s25
    %p29 = pneg %p23
    %p30 = scmp.eq.s32.totalorder %s14, 1
    %p31 = por %p29, %p30
    %p32 = scmp.ne.s32.totalorder %s24, %s27
    %p33 = scmp.eq.s32.totalorder %s14, 0
    %p34 = por %p32, %p33
    %p35 = scmp.ne.s32.totalorder %s24, %s27
    %p36 = scmp.eq.s32.totalorder %s19, 1
    %p37 = por %p35, %p36
    %p38 = scmp.ne.s32.totalorder %s27, %s28
    %p39 = scmp.eq.s32.totalorder %s19, 0
    %p40 = por %p38, %p39
    %p41 = scmp.ne.s32.totalorder %s27, %s28
    %p42 = scmp.eq.s32.totalorder %s20, 1
    %p43 = por %p41, %p42
    %p45 = scmp.ne.s32.totalorder %s28, %s44
    %p46 = scmp.eq.s32.totalorder %s20, 0
    %p47 = por %p45, %p46
    %s48 = ssub.s32 %s14, %s21
    %p49 = scmp.eq.s32.totalorder %s48, 0
    %s51 = sadd.s32 %s50, 1
    %s52 = scalar_select %p49, %s50, %s51
    %p55 = pneg %p49
    %p56 = scmp.eq.s32.totalorder %s14, 1
    %p57 = por %p55, %p56
    %p58 = scmp.ne.s32.totalorder %s50, %s53
    %p59 = scmp.eq.s32.totalorder %s14, 0
    %p60 = por %p58, %p59
    %p61 = scmp.ne.s32.totalorder %s50, %s53
    %p62 = scmp.eq.s32.totalorder %s19, 1
    %p63 = por %p61, %p62
    %p64 = scmp.ne.s32.totalorder %s53, %s54
    %p65 = scmp.eq.s32.totalorder %s19, 0
    %p66 = por %p64, %p65
    %p67 = scmp.ne.s32.totalorder %s53, %s54
    %p68 = scmp.eq.s32.totalorder %s20, 1
    %p69 = por %p67, %p68
    %p71 = scmp.ne.s32.totalorder %s54, %s70
    %p72 = scmp.eq.s32.totalorder %s20, 0
    %p73 = por %p71, %p72
    %s74 = ssub.s32 %s14, %s21
    %p75 = scmp.eq.s32.totalorder %s74, 0
    %s77 = sadd.s32 %s76, 1
    %s78 = scalar_select %p75, %s76, %s77
    %p81 = pneg %p75
    %p82 = scmp.eq.s32.totalorder %s14, 1
    %p83 = por %p81, %p82
    %p84 = scmp.ne.s32.totalorder %s76, %s79
    %p85 = scmp.eq.s32.totalorder %s14, 0
    %p86 = por %p84, %p85
    %p87 = scmp.ne.s32.totalorder %s76, %s79
    %p88 = scmp.eq.s32.totalorder %s19, 1
    %p89 = por %p87, %p88
    %p90 = scmp.ne.s32.totalorder %s79, %s80
    %p91 = scmp.eq.s32.totalorder %s19, 0
    %p92 = por %p90, %p91
    %p93 = scmp.ne.s32.totalorder %s79, %s80
    %p94 = scmp.eq.s32.totalorder %s20, 1
    %p95 = por %p93, %p94
    %p97 = scmp.ne.s32.totalorder %s80, %s96
    %p98 = scmp.eq.s32.totalorder %s20, 0
    %p99 = por %p97, %p98
    %s100 = ssub.s32 %s14, %s21
    %p101 = scmp.eq.s32.totalorder %s100, 0
    %s103 = sadd.s32 %s102, 1
    %s104 = scalar_select %p101, %s102, %s103
    %p107 = pneg %p101
    %p108 = scmp.eq.s32.totalorder %s14, 1
    %p109 = por %p107, %p108
    %p110 = scmp.ne.s32.totalorder %s102, %s105
    %p111 = scmp.eq.s32.totalorder %s14, 0
    %p112 = por %p110, %p111
    %p113 = scmp.ne.s32.totalorder %s102, %s105
    %p114 = scmp.eq.s32.totalorder %s19, 1
    %p115 = por %p113, %p114
    %p116 = scmp.ne.s32.totalorder %s105, %s106
    %p117 = scmp.eq.s32.totalorder %s19, 0
    %p118 = por %p116, %p117
    %p119 = scmp.ne.s32.totalorder %s105, %s106
    %p120 = scmp.eq.s32.totalorder %s20, 1
    %p121 = por %p119, %p120
    %p123 = scmp.ne.s32.totalorder %s106, %s122
    %p124 = scmp.eq.s32.totalorder %s20, 0
    %p125 = por %p123, %p124
    %s127 = sadd.s32 %s126, 1
    %p130 = scmp.eq.s32.totalorder %s14, 1
    %p131 = scmp.ne.s32.totalorder %s126, %s128
    %p132 = scmp.eq.s32.totalorder %s14, 0
    %p133 = por %p131, %p132
    %p134 = scmp.ne.s32.totalorder %s126, %s128
    %p135 = scmp.eq.s32.totalorder %s19, 1
    %p136 = por %p134, %p135
    %p137 = scmp.ne.s32.totalorder %s128, %s129
    %p138 = scmp.eq.s32.totalorder %s19, 0
    %p139 = por %p137, %p138
    %p140 = scmp.ne.s32.totalorder %s128, %s129
    %p141 = scmp.eq.s32.totalorder %s20, 1
    %p142 = por %p140, %p141
    %p144 = scmp.ne.s32.totalorder %s129, %s143
    %p145 = scmp.eq.s32.totalorder %s20, 0
    %p146 = por %p144, %p145
    %s148 = sadd.s32 %s147, 1
    %p151 = scmp.eq.s32.totalorder %s14, 1
    %p152 = scmp.ne.s32.totalorder %s147, %s149
    %p153 = scmp.eq.s32.totalorder %s14, 0
    %p154 = por %p152, %p153
    %p155 = scmp.ne.s32.totalorder %s147, %s149
    %p156 = scmp.eq.s32.totalorder %s19, 1
    %p157 = por %p155, %p156
    %p158 = scmp.ne.s32.totalorder %s149, %s150
    %p159 = scmp.eq.s32.totalorder %s19, 0
    %p160 = por %p158, %p159
    %p161 = scmp.ne.s32.totalorder %s149, %s150
    %p162 = scmp.eq.s32.totalorder %s20, 1
    %p163 = por %p161, %p162
    %p165 = scmp.ne.s32.totalorder %s150, %s164
    %p166 = scmp.eq.s32.totalorder %s20, 0
    %p167 = por %p165, %p166
    %s169 = sadd.s32 %s168, 1
    %p172 = scmp.eq.s32.totalorder %s14, 1
    %p173 = scmp.ne.s32.totalorder %s168, %s170
    %p174 = scmp.eq.s32.totalorder %s14, 0
    %p175 = por %p173, %p174
    %p176 = scmp.ne.s32.totalorder %s168, %s170
    %p177 = scmp.eq.s32.totalorder %s19, 1
    %p178 = por %p176, %p177
    %p179 = scmp.ne.s32.totalorder %s170, %s171
    %p180 = scmp.eq.s32.totalorder %s19, 0
    %p181 = por %p179, %p180
    %p182 = scmp.ne.s32.totalorder %s170, %s171
    %p183 = scmp.eq.s32.totalorder %s20, 1
    %p184 = por %p182, %p183
    %p186 = scmp.ne.s32.totalorder %s171, %s185
    %p187 = scmp.eq.s32.totalorder %s20, 0
    %p188 = por %p186, %p187
    %s189 = ssub.s32 %s14, %s21
    %p190 = scmp.eq.s32.totalorder %s189, 0
    %s192 = sadd.s32 %s191, 1
    %s193 = scalar_select %p190, %s191, %s192
    %p196 = pneg %p190
    %p197 = scmp.eq.s32.totalorder %s14, 1
    %p198 = por %p196, %p197
    %p199 = scmp.ne.s32.totalorder %s191, %s194
    %p200 = scmp.eq.s32.totalorder %s14, 0
    %p201 = por %p199, %p200
    %p202 = scmp.ne.s32.totalorder %s191, %s194
    %p203 = scmp.eq.s32.totalorder %s19, 1
    %p204 = por %p202, %p203
    %p205 = scmp.ne.s32.totalorder %s194, %s195
    %p206 = scmp.eq.s32.totalorder %s19, 0
    %p207 = por %p205, %p206
    %p208 = scmp.ne.s32.totalorder %s194, %s195
    %p209 = scmp.eq.s32.totalorder %s20, 1
    %p210 = por %p208, %p209
    %p212 = scmp.ne.s32.totalorder %s195, %s211
    %p213 = scmp.eq.s32.totalorder %s20, 0
    %p214 = por %p212, %p213
    %p215 = scmp.le.s32.totalorder 1, %s14
    %p216 = scmp.lt.s32.totalorder %s14, 3
    %p217 = pnand %p215, %p216
    %p218 = pneg %p217
    // Predicated region
    $region9: #{wiener_kpn_sa_forward.1} parent=5 // pred_check
      _
    $region10: #{wiener_kpn_sa_forward.1} parent=5 // pred_check_branch
      %220 = sbr.rel (%p217) target = $region12
    $region11: #{wiener_kpn_sa_forward.1} parent=5 // pred_region
      %s221 = ssub.s32 %s14, 1
      // Predicated region
      $region13: #{wiener_kpn_sa_forward.1} parent=11 // pred_check
        %p222 = pneg %p139
      $region14: #{wiener_kpn_sa_forward.1} parent=11 // pred_check_branch
        %224 = sbr.rel (%p222) target = $region16
      $region15: #{wiener_kpn_sa_forward.1} parent=11 // pred_region
        _
      $region16: #{wiener_kpn_sa_forward.1} parent=11 // pred_fallthru
        _
      // Predicated region
      $region17: #{wiener_kpn_sa_forward.1} parent=11 // pred_check
        %p225 = pneg %p160
      $region18: #{wiener_kpn_sa_forward.1} parent=11 // pred_check_branch
        %227 = sbr.rel (%p225) target = $region20
      $region19: #{wiener_kpn_sa_forward.1} parent=11 // pred_region
        _
      $region20: #{wiener_kpn_sa_forward.1} parent=11 // pred_fallthru
        _
      // Predicated region
      $region21: #{wiener_kpn_sa_forward.1} parent=11 // pred_check
        %p228 = pneg %p181
      $region22: #{wiener_kpn_sa_forward.1} parent=11 // pred_check_branch
        %230 = sbr.rel (%p228) target = $region24
      $region23: #{wiener_kpn_sa_forward.1} parent=11 // pred_region
        _
      $region24: #{wiener_kpn_sa_forward.1} parent=11 // pred_fallthru
        _
    $region12: #{wiener_kpn_sa_forward.1} parent=5 // pred_fallthru
      _
    %p231 = scmp.lt.s32.totalorder %s14, 2
    // Predicated region
    $region25: #{wiener_kpn_sa_forward.1} parent=5 // pred_check
      %p232 = pneg %p231
    $region26: #{wiener_kpn_sa_forward.1} parent=5 // pred_check_branch
      %234 = sbr.rel (%p232) target = $region28
    $region27: #{wiener_kpn_sa_forward.1} parent=5 // pred_region
      // Predicated region
      $region29: #{wiener_kpn_sa_forward.1} parent=27 // pred_check
        %p235 = pneg %p34
      $region30: #{wiener_kpn_sa_forward.1} parent=27 // pred_check_branch
        %237 = sbr.rel (%p235) target = $region32
      $region31: #{wiener_kpn_sa_forward.1} parent=27 // pred_region
        %p238 = scmp.lt.s32.totalorder %s14, 1
        %s239 = scalar_select %p238, %s14, 1
        %s240 = smul.addr %s239, 3
        %s241 = smul.addr %s240, 8
        %s242 = scalar_lea.vmem %s0, %s241
      $region32: #{wiener_kpn_sa_forward.1} parent=27 // pred_fallthru
        _
      // Predicated region
      $region33: #{wiener_kpn_sa_forward.1} parent=27 // pred_check
        %p243 = pneg %p60
      $region34: #{wiener_kpn_sa_forward.1} parent=27 // pred_check_branch
        %245 = sbr.rel (%p243) target = $region36
      $region35: #{wiener_kpn_sa_forward.1} parent=27 // pred_region
        %p246 = scmp.lt.s32.totalorder %s14, 1
        %s247 = scalar_select %p246, %s14, 1
        %s248 = smul.addr %s247, 4
        %s249 = smul.addr %s248, 8
        %s250 = scalar_lea.vmem %s1, %s249
      $region36: #{wiener_kpn_sa_forward.1} parent=27 // pred_fallthru
        _
      // Predicated region
      $region37: #{wiener_kpn_sa_forward.1} parent=27 // pred_check
        %p251 = pneg %p86
      $region38: #{wiener_kpn_sa_forward.1} parent=27 // pred_check_branch
        %253 = sbr.rel (%p251) target = $region40
      $region39: #{wiener_kpn_sa_forward.1} parent=27 // pred_region
        %p254 = scmp.lt.s32.totalorder %s14, 1
        %s255 = scalar_select %p254, %s14, 1
        %s256 = smul.addr %s255, 27
        %s257 = smul.addr %s256, 8
        %s258 = scalar_lea.vmem %s2, %s257
      $region40: #{wiener_kpn_sa_forward.1} parent=27 // pred_fallthru
        _
      // Predicated region
      $region41: #{wiener_kpn_sa_forward.1} parent=27 // pred_check
        %p259 = pneg %p112
      $region42: #{wiener_kpn_sa_forward.1} parent=27 // pred_check_branch
        %261 = sbr.rel (%p259) target = $region44
      $region43: #{wiener_kpn_sa_forward.1} parent=27 // pred_region
        %p262 = scmp.lt.s32.totalorder %s14, 1
        %s263 = scalar_select %p262, %s14, 1
        %s264 = smul.addr %s263, 27
        %s265 = smul.addr %s264, 8
        %s266 = scalar_lea.vmem %s3, %s265
      $region44: #{wiener_kpn_sa_forward.1} parent=27 // pred_fallthru
        _
    $region28: #{wiener_kpn_sa_forward.1} parent=5 // pred_fallthru
      _
    %p267 = scmp.le.s32.totalorder 1, %s14
    %p268 = scmp.lt.s32.totalorder %s14, 3
    %p269 = pnand %p267, %p268
    %p270 = pneg %p269
    // Predicated region
    $region45: #{wiener_kpn_sa_forward.1} parent=5 // pred_check
      _
    $region46: #{wiener_kpn_sa_forward.1} parent=5 // pred_check_branch
      %272 = sbr.rel (%p269) target = $region48
    $region47: #{wiener_kpn_sa_forward.1} parent=5 // pred_region
      %s273 = ssub.s32 %s14, 1
      %p274 = scmp.lt.s32.totalorder %s19, 1
      %s275 = scalar_select %p274, %s19, 1
      %s276 = smul.addr %s275, 3
      %s277 = smul.addr %s276, 8
      %s278 = scalar_lea.vmem %s0, %s277
      %p279 = pneg %p40
      %p280 = pneg %p37
      %p281 = scmp.lt.s32.totalorder %s19, 1
      %s282 = scalar_select %p281, %s19, 1
      %s283 = smul.addr %s282, 4
      %s284 = smul.addr %s283, 8
      %s285 = scalar_lea.vmem %s1, %s284
      %p286 = pneg %p66
      %p287 = pneg %p63
      %p288 = scmp.lt.s32.totalorder %s19, 1
      %s289 = scalar_select %p288, %s19, 1
      %s290 = smul.addr %s289, 27
      %s291 = smul.addr %s290, 8
      %s292 = scalar_lea.vmem %s2, %s291
      %p293 = pneg %p92
      %p294 = pneg %p89
      %p295 = scmp.lt.s32.totalorder %s19, 1
      %s296 = scalar_select %p295, %s19, 1
      %s297 = smul.addr %s296, 27
      %s298 = smul.addr %s297, 8
      %s299 = scalar_lea.vmem %s3, %s298
      %p300 = pneg %p118
      %p301 = pneg %p115
      %p302 = pneg %p139
      %p303 = pneg %p136
      %p304 = pneg %p160
      %p305 = pneg %p157
      %p306 = pneg %p181
      %p307 = pneg %p178
      %p308 = pneg %p207
      %p309 = pneg %p204
      %p310 = scmp.lt.s32.totalorder %s19, 1
      %s311 = scalar_select %p310, %s19, 1
      %s312 = smul.addr %s311, 3
      %s313 = smul.addr %s312, 8
      %s314 = scalar_lea.vmem %s7, %s313
      %p315 = scmp.lt.s32.totalorder %s19, 1
      %s316 = scalar_select %p315, %s19, 1
      %s317 = smul.addr %s316, 3
      %s318 = smul.addr %s317, 8
      %s319 = scalar_lea.vmem %s0, %s318
      %p320 = scmp.lt.s32.totalorder %s19, 1
      %s321 = scalar_select %p320, %s19, 1
      %s322 = smul.addr %s321, 4
      %s323 = smul.addr %s322, 8
      %s324 = scalar_lea.vmem %s1, %s323
      %p325 = scmp.lt.s32.totalorder %s19, 1
      %s326 = scalar_select %p325, %s19, 1
      %s327 = smul.addr %s326, 27
      %s328 = smul.addr %s327, 8
      %s329 = scalar_lea.vmem %s2, %s328
      %p330 = scmp.lt.s32.totalorder %s19, 1
      %s331 = scalar_select %p330, %s19, 1
      %s332 = smul.addr %s331, 27
      %s333 = smul.addr %s332, 8
      %s334 = scalar_lea.vmem %s3, %s333
      %p335 = scmp.lt.s32.totalorder %s19, 1
      %s336 = scalar_select %p335, %s19, 1
      %s337 = smul.addr %s336, 3
      %s338 = smul.addr %s337, 8
      %s339 = scalar_lea.vmem %s7, %s338
      %s340 = sld [smem:[#allocation3]]
      %v341 = vld [vmem:[%s319] sm:$0xff]
      %v342 = vld [vmem:[%s319 + $0x8] sm:$0xff]
      %v343 = vld [vmem:[%s319 + $0x10] sm:$0xf]
      %v344 = vld [vmem:[%s5] sm:$0xff]
      %v345 = vld [vmem:[%s5 + $0x8] sm:$0xff]
      %v346 = vld [vmem:[%s5 + $0x10] sm:$0xff]
      %v347 = vld [vmem:[%s5 + $0x18] sm:$0xff]
      %v348 = vld [vmem:[%s5 + $0x20] sm:$0xff]
      %v349 = vld [vmem:[%s5 + $0x28] sm:$0xff]
      %v350 = vld [vmem:[%s5 + $0x30] sm:$0xff]
      %v351 = vld [vmem:[%s5 + $0x38] sm:$0xff]
      %v352 = vld [vmem:[%s5 + $0x40] sm:$0xff]
      %v353 = vld [vmem:[%s5 + $0x48] sm:$0xff]
      %v354 = vld [vmem:[%s5 + $0x50] sm:$0xff]
      %v355 = vld [vmem:[%s5 + $0x58] sm:$0xff]
      %v356 = vld [vmem:[%s5 + $0x60] sm:$0xff]
      %v357 = vld [vmem:[%s5 + $0x68] sm:$0xff]
      %v358 = vld [vmem:[%s5 + $0x70] sm:$0xff]
      %v359 = vld [vmem:[%s5 + $0x78] sm:$0xff]
      %v360 = vld [vmem:[%s324] sm:$0x1]
      %v361 = vlaneseq
      %v362 = vshrl.u32 %v361, 7
      %v363 = vsub.s32 0, %v362
      %v364 = vrot.slane %v360, %v363
      %v365 = vld [vmem:[%s324 + $0x1] sm:$0x1]
      %v366 = vlaneseq
      %v367 = vshrl.u32 %v366, 7
      %v368 = vsub.s32 0, %v367
      %v369 = vrot.slane %v365, %v368
      %v370 = vld [vmem:[%s324 + $0x2] sm:$0x1]
      %v371 = vlaneseq
      %v372 = vshrl.u32 %v371, 7
      %v373 = vsub.s32 0, %v372
      %v374 = vrot.slane %v370, %v373
      %v375 = vld [vmem:[%s324 + $0x3] sm:$0x1]
      %v376 = vlaneseq
      %v377 = vshrl.u32 %v376, 7
      %v378 = vsub.s32 0, %v377
      %v379 = vrot.slane %v375, %v378
      %v380 = vld [vmem:[%s324 + $0x4] sm:$0x1]
      %v381 = vlaneseq
      %v382 = vshrl.u32 %v381, 7
      %v383 = vsub.s32 0, %v382
      %v384 = vrot.slane %v380, %v383
      %v385 = vld [vmem:[%s324 + $0x5] sm:$0x1]
      %v386 = vlaneseq
      %v387 = vshrl.u32 %v386, 7
      %v388 = vsub.s32 0, %v387
      %v389 = vrot.slane %v385, %v388
      %v390 = vld [vmem:[%s324 + $0x6] sm:$0x1]
      %v391 = vlaneseq
      %v392 = vshrl.u32 %v391, 7
      %v393 = vsub.s32 0, %v392
      %v394 = vrot.slane %v390, %v393
      %v395 = vld [vmem:[%s324 + $0x7] sm:$0x1]
      %v396 = vlaneseq
      %v397 = vshrl.u32 %v396, 7
      %v398 = vsub.s32 0, %v397
      %v399 = vrot.slane %v395, %v398
      %v400 = vld [vmem:[%s324 + $0x8] sm:$0x1]
      %v401 = vlaneseq
      %v402 = vshrl.u32 %v401, 7
      %v403 = vsub.s32 0, %v402
      %v404 = vrot.slane %v400, %v403
      %v405 = vld [vmem:[%s324 + $0x9] sm:$0x1]
      %v406 = vlaneseq
      %v407 = vshrl.u32 %v406, 7
      %v408 = vsub.s32 0, %v407
      %v409 = vrot.slane %v405, %v408
      %v410 = vld [vmem:[%s324 + $0xa] sm:$0x1]
      %v411 = vlaneseq
      %v412 = vshrl.u32 %v411, 7
      %v413 = vsub.s32 0, %v412
      %v414 = vrot.slane %v410, %v413
      %v415 = vld [vmem:[%s324 + $0xb] sm:$0x1]
      %v416 = vlaneseq
      %v417 = vshrl.u32 %v416, 7
      %v418 = vsub.s32 0, %v417
      %v419 = vrot.slane %v415, %v418
      %v420 = vld [vmem:[%s324 + $0xc] sm:$0x1]
      %v421 = vlaneseq
      %v422 = vshrl.u32 %v421, 7
      %v423 = vsub.s32 0, %v422
      %v424 = vrot.slane %v420, %v423
      %v425 = vld [vmem:[%s324 + $0xd] sm:$0x1]
      %v426 = vlaneseq
      %v427 = vshrl.u32 %v426, 7
      %v428 = vsub.s32 0, %v427
      %v429 = vrot.slane %v425, %v428
      %v430 = vld [vmem:[%s324 + $0xe] sm:$0x1]
      %v431 = vlaneseq
      %v432 = vshrl.u32 %v431, 7
      %v433 = vsub.s32 0, %v432
      %v434 = vrot.slane %v430, %v433
      %v435 = vld [vmem:[%s324 + $0xf] sm:$0x1]
      %v436 = vlaneseq
      %v437 = vshrl.u32 %v436, 7
      %v438 = vsub.s32 0, %v437
      %v439 = vrot.slane %v435, %v438
      %v440 = vld [vmem:[%s324 + $0x10] sm:$0x1]
      %v441 = vlaneseq
      %v442 = vshrl.u32 %v441, 7
      %v443 = vsub.s32 0, %v442
      %v444 = vrot.slane %v440, %v443
      %v445 = vld [vmem:[%s324 + $0x11] sm:$0x1]
      %v446 = vlaneseq
      %v447 = vshrl.u32 %v446, 7
      %v448 = vsub.s32 0, %v447
      %v449 = vrot.slane %v445, %v448
      %v450 = vld [vmem:[%s324 + $0x12] sm:$0x1]
      %v451 = vlaneseq
      %v452 = vshrl.u32 %v451, 7
      %v453 = vsub.s32 0, %v452
      %v454 = vrot.slane %v450, %v453
      %v455 = vld [vmem:[%s324 + $0x13] sm:$0x1]
      %v456 = vlaneseq
      %v457 = vshrl.u32 %v456, 7
      %v458 = vsub.s32 0, %v457
      %v459 = vrot.slane %v455, %v458
      %v460 = vld [vmem:[%s324 + $0x14] sm:$0x1]
      %v461 = vlaneseq
      %v462 = vshrl.u32 %v461, 7
      %v463 = vsub.s32 0, %v462
      %v464 = vrot.slane %v460, %v463
      %v465 = vld [vmem:[%s324 + $0x15] sm:$0x1]
      %v466 = vlaneseq
      %v467 = vshrl.u32 %v466, 7
      %v468 = vsub.s32 0, %v467
      %v469 = vrot.slane %v465, %v468
      %v470 = vld [vmem:[%s324 + $0x16] sm:$0x1]
      %v471 = vlaneseq
      %v472 = vshrl.u32 %v471, 7
      %v473 = vsub.s32 0, %v472
      %v474 = vrot.slane %v470, %v473
      %v475 = vld [vmem:[%s324 + $0x17] sm:$0x1]
      %v476 = vlaneseq
      %v477 = vshrl.u32 %v476, 7
      %v478 = vsub.s32 0, %v477
      %v479 = vrot.slane %v475, %v478
      %v480 = vld [vmem:[%s324 + $0x18] sm:$0x1]
      %v481 = vlaneseq
      %v482 = vshrl.u32 %v481, 7
      %v483 = vsub.s32 0, %v482
      %v484 = vrot.slane %v480, %v483
      %v485 = vld [vmem:[%s329] sm:$0xff]
      %v486 = vld [vmem:[%s329 + $0x8] sm:$0xff]
      %v487 = vld [vmem:[%s329 + $0x10] sm:$0xf]
      %s488 = scalar_lea.vmem %s329, 24
      %v489 = vld [vmem:[%s488] sm:$0xff]
      %v490 = vld [vmem:[%s488 + $0x8] sm:$0xff]
      %v491 = vld [vmem:[%s488 + $0x10] sm:$0xf]
      %s492 = scalar_lea.vmem %s329, 48
      %v493 = vld [vmem:[%s492] sm:$0xff]
      %v494 = vld [vmem:[%s492 + $0x8] sm:$0xff]
      %v495 = vld [vmem:[%s492 + $0x10] sm:$0xf]
      %s496 = scalar_lea.vmem %s329, 72
      %v497 = vld [vmem:[%s496] sm:$0xff]
      %v498 = vld [vmem:[%s496 + $0x8] sm:$0xff]
      %v499 = vld [vmem:[%s496 + $0x10] sm:$0xf]
      %s500 = scalar_lea.vmem %s329, 96
      %v501 = vld [vmem:[%s500] sm:$0xff]
      %v502 = vld [vmem:[%s500 + $0x8] sm:$0xff]
      %v503 = vld [vmem:[%s500 + $0x10] sm:$0xf]
      %s504 = scalar_lea.vmem %s329, 120
      %v505 = vld [vmem:[%s504] sm:$0xff]
      %v506 = vld [vmem:[%s504 + $0x8] sm:$0xff]
      %v507 = vld [vmem:[%s504 + $0x10] sm:$0xf]
      %s508 = scalar_lea.vmem %s329, 144
      %v509 = vld [vmem:[%s508] sm:$0xff]
      %v510 = vld [vmem:[%s508 + $0x8] sm:$0xff]
      %v511 = vld [vmem:[%s508 + $0x10] sm:$0xf]
      %s512 = scalar_lea.vmem %s329, 168
      %v513 = vld [vmem:[%s512] sm:$0xff]
      %v514 = vld [vmem:[%s512 + $0x8] sm:$0xff]
      %v515 = vld [vmem:[%s512 + $0x10] sm:$0xf]
      %s516 = scalar_lea.vmem %s329, 192
      %v517 = vld [vmem:[%s516] sm:$0xff]
      %v518 = vld [vmem:[%s516 + $0x8] sm:$0xff]
      %v519 = vld [vmem:[%s516 + $0x10] sm:$0xf]
      %v520 = vld [vmem:[%s334] sm:$0xff]
      %v521 = vld [vmem:[%s334 + $0x8] sm:$0xff]
      %v522 = vld [vmem:[%s334 + $0x10] sm:$0xf]
      %s523 = scalar_lea.vmem %s334, 24
      %v524 = vld [vmem:[%s523] sm:$0xff]
      %v525 = vld [vmem:[%s523 + $0x8] sm:$0xff]
      %v526 = vld [vmem:[%s523 + $0x10] sm:$0xf]
      %s527 = scalar_lea.vmem %s334, 48
      %v528 = vld [vmem:[%s527] sm:$0xff]
      %v529 = vld [vmem:[%s527 + $0x8] sm:$0xff]
      %v530 = vld [vmem:[%s527 + $0x10] sm:$0xf]
      %s531 = scalar_lea.vmem %s334, 72
      %v532 = vld [vmem:[%s531] sm:$0xff]
      %v533 = vld [vmem:[%s531 + $0x8] sm:$0xff]
      %v534 = vld [vmem:[%s531 + $0x10] sm:$0xf]
      %s535 = scalar_lea.vmem %s334, 96
      %v536 = vld [vmem:[%s535] sm:$0xff]
      %v537 = vld [vmem:[%s535 + $0x8] sm:$0xff]
      %v538 = vld [vmem:[%s535 + $0x10] sm:$0xf]
      %s539 = scalar_lea.vmem %s334, 120
      %v540 = vld [vmem:[%s539] sm:$0xff]
      %v541 = vld [vmem:[%s539 + $0x8] sm:$0xff]
      %v542 = vld [vmem:[%s539 + $0x10] sm:$0xf]
      %s543 = scalar_lea.vmem %s334, 144
      %v544 = vld [vmem:[%s543] sm:$0xff]
      %v545 = vld [vmem:[%s543 + $0x8] sm:$0xff]
      %v546 = vld [vmem:[%s543 + $0x10] sm:$0xf]
      %s547 = scalar_lea.vmem %s334, 168
      %v548 = vld [vmem:[%s547] sm:$0xff]
      %v549 = vld [vmem:[%s547 + $0x8] sm:$0xff]
      %v550 = vld [vmem:[%s547 + $0x10] sm:$0xf]
      %s551 = scalar_lea.vmem %s334, 192
      %v552 = vld [vmem:[%s551] sm:$0xff]
      %v553 = vld [vmem:[%s551 + $0x8] sm:$0xff]
      %v554 = vld [vmem:[%s551 + $0x10] sm:$0xf]
      %v555 = vld [vmem:[%s4] sm:$0x1]
      %v556 = vlaneseq
      %v557 = vshrl.u32 %v556, 7
      %v558 = vsub.s32 0, %v557
      %v559 = vrot.slane %v555, %v558
      %v560 = vld [vmem:[%s4 + $0x4] sm:$0x1]
      %v561 = vlaneseq
      %v562 = vshrl.u32 %v561, 7
      %v563 = vsub.s32 0, %v562
      %v564 = vrot.slane %v560, %v563
      %v565 = vld [vmem:[%s4 + $0x1] sm:$0x1]
      %v566 = vlaneseq
      %v567 = vshrl.u32 %v566, 7
      %v568 = vsub.s32 0, %v567
      %v569 = vrot.slane %v565, %v568
      %v570 = vld [vmem:[%s4 + $0x5] sm:$0x1]
      %v571 = vlaneseq
      %v572 = vshrl.u32 %v571, 7
      %v573 = vsub.s32 0, %v572
      %v574 = vrot.slane %v570, %v573
      %v575 = vld [vmem:[%s4 + $0x2] sm:$0x1]
      %v576 = vlaneseq
      %v577 = vshrl.u32 %v576, 7
      %v578 = vsub.s32 0, %v577
      %v579 = vrot.slane %v575, %v578
      %v580 = vld [vmem:[%s4 + $0x6] sm:$0x1]
      %v581 = vlaneseq
      %v582 = vshrl.u32 %v581, 7
      %v583 = vsub.s32 0, %v582
      %v584 = vrot.slane %v580, %v583
      %v585 = vld [vmem:[%s4 + $0x3] sm:$0x1]
      %v586 = vlaneseq
      %v587 = vshrl.u32 %v586, 7
      %v588 = vsub.s32 0, %v587
      %v589 = vrot.slane %v585, %v588
      %v590 = vld [vmem:[%s4 + $0x7] sm:$0x1]
      %v591 = vlaneseq
      %v592 = vshrl.u32 %v591, 7
      %v593 = vsub.s32 0, %v592
      %v594 = vrot.slane %v590, %v593
      %v595 = vld [vmem:[%s4 + $0x8] sm:$0x1]
      %v596 = vlaneseq
      %v597 = vshrl.u32 %v596, 7
      %v598 = vsub.s32 0, %v597
      %v599 = vrot.slane %v595, %v598
      %v600 = vlaneseq
      %v601 = vshrl.u32 %v600, 7
      %v602 = vadd.s32 %v601, 8
      %v603 = vadd.s32 %v601, 16
      %vm604 = vcmp.eq.s32.totalorder %v601, 1
      %vm605 = vcmp.eq.s32.totalorder %v602, 1
      %vm606 = vcmp.eq.s32.totalorder %v603, 1
      %v607 = vsel %vm604, 1, 0
      %v608 = vsel %vm605, 1, 0
      %v609 = vsel %vm606, 1, 0
      %v610 = vcvt.s32.f32 %v607
      %v611 = vcvt.s32.f32 %v608
      %v612 = vcvt.s32.f32 %v609
      %vm613 = vcmp.eq.s32.totalorder %v601, 0
      %vm614 = vcmp.eq.s32.totalorder %v602, 0
      %vm615 = vcmp.eq.s32.totalorder %v603, 0
      %v616 = vsel %vm613, 1, 0
      %v617 = vsel %vm614, 1, 0
      %v618 = vsel %vm615, 1, 0
      %v619 = vcvt.s32.f32 %v616
      %v620 = vcvt.s32.f32 %v617
      %v621 = vcvt.s32.f32 %v618
      %vm622 = vcmp.eq.s32.totalorder %v601, 18
      %vm623 = vcmp.eq.s32.totalorder %v602, 18
      %vm624 = vcmp.eq.s32.totalorder %v603, 18
      %v625 = vsel %vm622, 1, 0
      %v626 = vsel %vm623, 1, 0
      %v627 = vsel %vm624, 1, 0
      %v628 = vcvt.s32.f32 %v625
      %v629 = vcvt.s32.f32 %v626
      %v630 = vcvt.s32.f32 %v627
      %vm631 = vcmp.eq.s32.totalorder %v601, 19
      %vm632 = vcmp.eq.s32.totalorder %v602, 19
      %vm633 = vcmp.eq.s32.totalorder %v603, 19
      %v634 = vsel %vm631, 1, 0
      %v635 = vsel %vm632, 1, 0
      %v636 = vsel %vm633, 1, 0
      %v637 = vcvt.s32.f32 %v634
      %v638 = vcvt.s32.f32 %v635
      %v639 = vcvt.s32.f32 %v636
      %vm640 = vcmp.eq.s32.totalorder %v601, 2
      %vm641 = vcmp.eq.s32.totalorder %v602, 2
      %vm642 = vcmp.eq.s32.totalorder %v603, 2
      %v643 = vsel %vm640, 1, 0
      %v644 = vsel %vm641, 1, 0
      %v645 = vsel %vm642, 1, 0
      %v646 = vcvt.s32.f32 %v643
      %v647 = vcvt.s32.f32 %v644
      %v648 = vcvt.s32.f32 %v645
      %vm649 = vcmp.eq.s32.totalorder %v601, 3
      %vm650 = vcmp.eq.s32.totalorder %v602, 3
      %vm651 = vcmp.eq.s32.totalorder %v603, 3
      %v652 = vsel %vm649, 1, 0
      %v653 = vsel %vm650, 1, 0
      %v654 = vsel %vm651, 1, 0
      %v655 = vcvt.s32.f32 %v652
      %v656 = vcvt.s32.f32 %v653
      %v657 = vcvt.s32.f32 %v654
      %vm658 = vcmp.eq.s32.totalorder %v601, 17
      %vm659 = vcmp.eq.s32.totalorder %v602, 17
      %vm660 = vcmp.eq.s32.totalorder %v603, 17
      %v661 = vsel %vm658, 1, 0
      %v662 = vsel %vm659, 1, 0
      %v663 = vsel %vm660, 1, 0
      %v664 = vcvt.s32.f32 %v661
      %v665 = vcvt.s32.f32 %v662
      %v666 = vcvt.s32.f32 %v663
      %vm667 = vcmp.eq.s32.totalorder %v601, 16
      %vm668 = vcmp.eq.s32.totalorder %v602, 16
      %vm669 = vcmp.eq.s32.totalorder %v603, 16
      %v670 = vsel %vm667, 1, 0
      %v671 = vsel %vm668, 1, 0
      %v672 = vsel %vm669, 1, 0
      %v673 = vcvt.s32.f32 %v670
      %v674 = vcvt.s32.f32 %v671
      %v675 = vcvt.s32.f32 %v672
      %vm676 = vcmp.ge.s32.totalorder %v601, 2
      %vm677 = vcmp.ge.s32.totalorder %v602, 2
      %vm678 = vcmp.ge.s32.totalorder %v603, 2
      %vm679 = vcmp.lt.s32.totalorder %v601, 18
      %vm680 = vcmp.lt.s32.totalorder %v602, 18
      %vm681 = vcmp.lt.s32.totalorder %v603, 18
      %vm682 = vmand %vm676, %vm679
      %vm683 = vmand %vm677, %vm680
      %vm684 = vmand %vm678, %vm681
      %v685 = vsel %vm682, 1, 0
      %v686 = vsel %vm683, 1, 0
      %v687 = vsel %vm684, 1, 0
      %v688 = vcvt.s32.f32 %v685
      %v689 = vcvt.s32.f32 %v686
      %v690 = vcvt.s32.f32 %v687
      %v691 = vmul.f32 %v688, %v599
      %v692 = vmul.f32 %v689, %v599
      %v693 = vmul.f32 %v690, %v599
      %694 = vst [vmem:[#allocation2] sm:$0xff] 0.0
      %695 = vst [vmem:[#allocation2 + $0x8] sm:$0xff] 0.0
      %696 = vst [vmem:[#allocation2 + $0x10] sm:$0xff] 0.0
      %697 = vst [vmem:[#allocation2 + $0x18] sm:$0xff] 0.0
      %698 = vst [vmem:[#allocation2 + $0x20] sm:$0xf] 0.0
      %699 = vst [vmem:[#allocation2 + $0x8] sm:$0xff] %v341
      %700 = vst [vmem:[#allocation2 + $0x10] sm:$0xff] %v342
      %701 = vst [vmem:[#allocation2 + $0x18] sm:$0xf] %v343
      %v702 = vld [vmem:[#allocation2 + $0x6] sm:$0xff]
      %v703 = vld [vmem:[#allocation2 + $0xe] sm:$0xff]
      %v704 = vld [vmem:[#allocation2 + $0x16] sm:$0xf]
      %v705 = vld [vmem:[#allocation2 + $0x7] sm:$0xff]
      %v706 = vld [vmem:[#allocation2 + $0xf] sm:$0xff]
      %v707 = vld [vmem:[#allocation2 + $0x17] sm:$0xf]
      %v708 = vld [vmem:[#allocation2 + $0x8] sm:$0xff]
      %v709 = vld [vmem:[#allocation2 + $0x10] sm:$0xff]
      %v710 = vld [vmem:[#allocation2 + $0x18] sm:$0xf]
      %v711 = vld [vmem:[#allocation2 + $0x9] sm:$0xff]
      %v712 = vld [vmem:[#allocation2 + $0x11] sm:$0xff]
      %v713 = vld [vmem:[#allocation2 + $0x19] sm:$0xf]
      %v714 = vld [vmem:[#allocation2 + $0xa] sm:$0xff]
      %v715 = vld [vmem:[#allocation2 + $0x12] sm:$0xff]
      %v716 = vld [vmem:[#allocation2 + $0x1a] sm:$0xf]
      %v717 = vmul.f32 %v364, %v702
      %v718 = vmul.f32 %v364, %v703
      %v719 = vmul.f32 %v364, %v704
      %v720 = vmul.f32 %v389, %v705
      %v721 = vmul.f32 %v389, %v706
      %v722 = vmul.f32 %v389, %v707
      %v723 = vmul.f32 %v414, %v708
      %v724 = vmul.f32 %v414, %v709
      %v725 = vmul.f32 %v414, %v710
      %v726 = vmul.f32 %v439, %v711
      %v727 = vmul.f32 %v439, %v712
      %v728 = vmul.f32 %v439, %v713
      %v729 = vmul.f32 %v464, %v714
      %v730 = vmul.f32 %v464, %v715
      %v731 = vmul.f32 %v464, %v716
      %v732 = vadd.f32 %v717, %v720
      %v733 = vadd.f32 %v718, %v721
      %v734 = vadd.f32 %v719, %v722
      %v735 = vadd.f32 %v723, %v726
      %v736 = vadd.f32 %v724, %v727
      %v737 = vadd.f32 %v725, %v728
      %v738 = vadd.f32 %v732, %v735
      %v739 = vadd.f32 %v733, %v736
      %v740 = vadd.f32 %v734, %v737
      %v741 = vadd.f32 %v738, %v729
      %v742 = vadd.f32 %v739, %v730
      %v743 = vadd.f32 %v740, %v731
      %744 = vrot.lane.b32.xlu0 %v741, 2
      %v745 = vpop.permute.xlu0 %744
      %746 = vrot.lane.b32.xlu0 %v742, 2
      %v747 = vpop.permute.xlu0 %746
      %748 = vrot.lane.b32.xlu0 %v743, 2
      %v749 = vpop.permute.xlu0 %748
      %v750 = vmul.f32 %v369, %v702
      %v751 = vmul.f32 %v369, %v703
      %v752 = vmul.f32 %v369, %v704
      %v753 = vmul.f32 %v394, %v705
      %v754 = vmul.f32 %v394, %v706
      %v755 = vmul.f32 %v394, %v707
      %v756 = vmul.f32 %v419, %v708
      %v757 = vmul.f32 %v419, %v709
      %v758 = vmul.f32 %v419, %v710
      %v759 = vmul.f32 %v444, %v711
      %v760 = vmul.f32 %v444, %v712
      %v761 = vmul.f32 %v444, %v713
      %v762 = vmul.f32 %v469, %v714
      %v763 = vmul.f32 %v469, %v715
      %v764 = vmul.f32 %v469, %v716
      %v765 = vadd.f32 %v750, %v753
      %v766 = vadd.f32 %v751, %v754
      %v767 = vadd.f32 %v752, %v755
      %v768 = vadd.f32 %v756, %v759
      %v769 = vadd.f32 %v757, %v760
      %v770 = vadd.f32 %v758, %v761
      %v771 = vadd.f32 %v765, %v768
      %v772 = vadd.f32 %v766, %v769
      %v773 = vadd.f32 %v767, %v770
      %v774 = vadd.f32 %v771, %v762
      %v775 = vadd.f32 %v772, %v763
      %v776 = vadd.f32 %v773, %v764
      %777 = vrot.lane.b32.xlu0 %v774, 1
      %v778 = vpop.permute.xlu0 %777
      %779 = vrot.lane.b32.xlu0 %v775, 1
      %v780 = vpop.permute.xlu0 %779
      %781 = vrot.lane.b32.xlu0 %v776, 1
      %v782 = vpop.permute.xlu0 %781
      %v783 = vmul.f32 %v374, %v702
      %v784 = vmul.f32 %v374, %v703
      %v785 = vmul.f32 %v374, %v704
      %v786 = vmul.f32 %v399, %v705
      %v787 = vmul.f32 %v399, %v706
      %v788 = vmul.f32 %v399, %v707
      %v789 = vmul.f32 %v424, %v708
      %v790 = vmul.f32 %v424, %v709
      %v791 = vmul.f32 %v424, %v710
      %v792 = vmul.f32 %v449, %v711
      %v793 = vmul.f32 %v449, %v712
      %v794 = vmul.f32 %v449, %v713
      %v795 = vmul.f32 %v474, %v714
      %v796 = vmul.f32 %v474, %v715
      %v797 = vmul.f32 %v474, %v716
      %v798 = vadd.f32 %v783, %v786
      %v799 = vadd.f32 %v784, %v787
      %v800 = vadd.f32 %v785, %v788
      %v801 = vadd.f32 %v789, %v792
      %v802 = vadd.f32 %v790, %v793
      %v803 = vadd.f32 %v791, %v794
      %v804 = vadd.f32 %v798, %v801
      %v805 = vadd.f32 %v799, %v802
      %v806 = vadd.f32 %v800, %v803
      %v807 = vadd.f32 %v804, %v795
      %v808 = vadd.f32 %v805, %v796
      %v809 = vadd.f32 %v806, %v797
      %v810 = vmul.f32 %v379, %v702
      %v811 = vmul.f32 %v379, %v703
      %v812 = vmul.f32 %v379, %v704
      %v813 = vmul.f32 %v404, %v705
      %v814 = vmul.f32 %v404, %v706
      %v815 = vmul.f32 %v404, %v707
      %v816 = vmul.f32 %v429, %v708
      %v817 = vmul.f32 %v429, %v709
      %v818 = vmul.f32 %v429, %v710
      %v819 = vmul.f32 %v454, %v711
      %v820 = vmul.f32 %v454, %v712
      %v821 = vmul.f32 %v454, %v713
      %v822 = vmul.f32 %v479, %v714
      %v823 = vmul.f32 %v479, %v715
      %v824 = vmul.f32 %v479, %v716
      %v825 = vadd.f32 %v810, %v813
      %v826 = vadd.f32 %v811, %v814
      %v827 = vadd.f32 %v812, %v815
      %v828 = vadd.f32 %v816, %v819
      %v829 = vadd.f32 %v817, %v820
      %v830 = vadd.f32 %v818, %v821
      %v831 = vadd.f32 %v825, %v828
      %v832 = vadd.f32 %v826, %v829
      %v833 = vadd.f32 %v827, %v830
      %v834 = vadd.f32 %v831, %v822
      %v835 = vadd.f32 %v832, %v823
      %v836 = vadd.f32 %v833, %v824
      %837 = vrot.lane.b32.xlu0 %v834, 127
      %v838 = vpop.permute.xlu0 %837
      %839 = vrot.lane.b32.xlu0 %v835, 127
      %v840 = vpop.permute.xlu0 %839
      %841 = vrot.lane.b32.xlu0 %v836, 127
      %v842 = vpop.permute.xlu0 %841
      %v843 = vmul.f32 %v384, %v702
      %v844 = vmul.f32 %v384, %v703
      %v845 = vmul.f32 %v384, %v704
      %v846 = vmul.f32 %v409, %v705
      %v847 = vmul.f32 %v409, %v706
      %v848 = vmul.f32 %v409, %v707
      %v849 = vmul.f32 %v434, %v708
      %v850 = vmul.f32 %v434, %v709
      %v851 = vmul.f32 %v434, %v710
      %v852 = vmul.f32 %v459, %v711
      %v853 = vmul.f32 %v459, %v712
      %v854 = vmul.f32 %v459, %v713
      %v855 = vmul.f32 %v484, %v714
      %v856 = vmul.f32 %v484, %v715
      %v857 = vmul.f32 %v484, %v716
      %v858 = vadd.f32 %v843, %v846
      %v859 = vadd.f32 %v844, %v847
      %v860 = vadd.f32 %v845, %v848
      %v861 = vadd.f32 %v849, %v852
      %v862 = vadd.f32 %v850, %v853
      %v863 = vadd.f32 %v851, %v854
      %v864 = vadd.f32 %v858, %v861
      %v865 = vadd.f32 %v859, %v862
      %v866 = vadd.f32 %v860, %v863
      %v867 = vadd.f32 %v864, %v855
      %v868 = vadd.f32 %v865, %v856
      %v869 = vadd.f32 %v866, %v857
      %870 = vrot.lane.b32.xlu0 %v867, 126
      %v871 = vpop.permute.xlu0 %870
      %872 = vrot.lane.b32.xlu0 %v868, 126
      %v873 = vpop.permute.xlu0 %872
      %874 = vrot.lane.b32.xlu0 %v869, 126
      %v875 = vpop.permute.xlu0 %874
      %v876 = vadd.f32 %v745, %v778
      %v877 = vadd.f32 %v747, %v780
      %v878 = vadd.f32 %v749, %v782
      %v879 = vadd.f32 %v807, %v838
      %v880 = vadd.f32 %v808, %v840
      %v881 = vadd.f32 %v809, %v842
      %v882 = vadd.f32 %v876, %v879
      %v883 = vadd.f32 %v877, %v880
      %v884 = vadd.f32 %v878, %v881
      %v885 = vadd.f32 %v882, %v871
      %v886 = vadd.f32 %v883, %v873
      %v887 = vadd.f32 %v884, %v875
      %888 = vrot.lane.b32.xlu0 %v885, 1
      %v889 = vpop.permute.xlu0 %888
      %890 = vrot.lane.b32.xlu0 %v886, 1
      %v891 = vpop.permute.xlu0 %890
      %892 = vrot.lane.b32.xlu0 %v887, 1
      %v893 = vpop.permute.xlu0 %892
      %v894 = vmul.f32 %v569, %v889
      %v895 = vmul.f32 %v569, %v891
      %v896 = vmul.f32 %v569, %v893
      %897 = vrot.lane.b32.xlu0 %v885, 127
      %v898 = vpop.permute.xlu0 %897
      %899 = vrot.lane.b32.xlu0 %v886, 127
      %v900 = vpop.permute.xlu0 %899
      %901 = vrot.lane.b32.xlu0 %v887, 127
      %v902 = vpop.permute.xlu0 %901
      %v903 = vmul.f32 %v579, %v898
      %v904 = vmul.f32 %v579, %v900
      %v905 = vmul.f32 %v579, %v902
      %906 = vrot.lane.b32.xlu0 %v885, 3
      %v907 = vpop.permute.xlu0 %906
      %908 = vrot.lane.b32.xlu0 %v886, 3
      %v909 = vpop.permute.xlu0 %908
      %910 = vrot.lane.b32.xlu0 %v887, 3
      %v911 = vpop.permute.xlu0 %910
      %v912 = vmul.f32 %v574, %v907
      %v913 = vmul.f32 %v574, %v909
      %v914 = vmul.f32 %v574, %v911
      %915 = vrot.lane.b32.xlu0 %v885, 125
      %v916 = vpop.permute.xlu0 %915
      %917 = vrot.lane.b32.xlu0 %v886, 125
      %v918 = vpop.permute.xlu0 %917
      %919 = vrot.lane.b32.xlu0 %v887, 125
      %v920 = vpop.permute.xlu0 %919
      %v921 = vmul.f32 %v584, %v916
      %v922 = vmul.f32 %v584, %v918
      %v923 = vmul.f32 %v584, %v920
      %v924 = vadd.f32 %v885, %v894
      %v925 = vadd.f32 %v886, %v895
      %v926 = vadd.f32 %v887, %v896
      %v927 = vadd.f32 %v903, %v912
      %v928 = vadd.f32 %v904, %v913
      %v929 = vadd.f32 %v905, %v914
      %v930 = vadd.f32 %v924, %v927
      %v931 = vadd.f32 %v925, %v928
      %v932 = vadd.f32 %v926, %v929
      %v933 = vadd.f32 %v930, %v921
      %v934 = vadd.f32 %v931, %v922
      %v935 = vadd.f32 %v932, %v923
      %936 = vst [vmem:[#allocation2 + $0x8] sm:$0xff] %v933
      %937 = vst [vmem:[#allocation2 + $0x10] sm:$0xff] %v934
      %938 = vst [vmem:[#allocation2 + $0x18] sm:$0xf] %v935
      %v939 = vld [vmem:[#allocation2 + $0x7] sm:$0xff]
      %v940 = vld [vmem:[#allocation2 + $0xf] sm:$0xff]
      %v941 = vld [vmem:[#allocation2 + $0x17] sm:$0xf]
      %v942 = vmul.f32 %v646, %v939
      %v943 = vmul.f32 %v647, %v940
      %v944 = vmul.f32 %v648, %v941
      %v945 = vld [vmem:[#allocation2 + $0x9] sm:$0xff]
      %v946 = vld [vmem:[#allocation2 + $0x11] sm:$0xff]
      %v947 = vld [vmem:[#allocation2 + $0x19] sm:$0xf]
      %v948 = vmul.f32 %v664, %v945
      %v949 = vmul.f32 %v665, %v946
      %v950 = vmul.f32 %v666, %v947
      %v951 = vld [vmem:[#allocation2 + $0x5] sm:$0xff]
      %v952 = vld [vmem:[#allocation2 + $0xd] sm:$0xff]
      %v953 = vld [vmem:[#allocation2 + $0x15] sm:$0xf]
      %v954 = vmul.f32 %v655, %v951
      %v955 = vmul.f32 %v656, %v952
      %v956 = vmul.f32 %v657, %v953
      %v957 = vld [vmem:[#allocation2 + $0xb] sm:$0xff]
      %v958 = vld [vmem:[#allocation2 + $0x13] sm:$0xff]
      %v959 = vld [vmem:[#allocation2 + $0x1b] sm:$0xf]
      %v960 = vmul.f32 %v673, %v957
      %v961 = vmul.f32 %v674, %v958
      %v962 = vmul.f32 %v675, %v959
      %v963 = vadd.f32 %v933, %v942
      %v964 = vadd.f32 %v934, %v943
      %v965 = vadd.f32 %v935, %v944
      %v966 = vadd.f32 %v948, %v954
      %v967 = vadd.f32 %v949, %v955
      %v968 = vadd.f32 %v950, %v956
      %v969 = vadd.f32 %v963, %v966
      %v970 = vadd.f32 %v964, %v967
      %v971 = vadd.f32 %v965, %v968
      %v972 = vadd.f32 %v969, %v960
      %v973 = vadd.f32 %v970, %v961
      %v974 = vadd.f32 %v971, %v962
      %v975 = vmul.f32 %v691, %v972
      %v976 = vmul.f32 %v692, %v973
      %v977 = vmul.f32 %v693, %v974
      %v978 = vmul.f32 %v975, %v975
      %v979 = vmul.f32 %v976, %v976
      %v980 = vmul.f32 %v977, %v977
      %v981 = vadd.f32 %v978, %v979
      %vm982 = vcmask 1043456
      %v983 = vsel %vm982, %v980, 0.0
      %v984 = vadd.f32 %v981, %v983
      %v985 = vrot.slane %v984, 4
      %v986 = vadd.f32 %v984, %v985
      %v987 = vrot.slane %v986, 2
      %v988 = vadd.f32 %v986, %v987
      %v989 = vrot.slane %v988, 1
      %v990 = vadd.f32 %v988, %v989
      %991 = vmatprep.subr.mxu0 0.0
      %992 = vmatpush1.msra.mxu0 %v344
      %993 = vmatprep.subr.mxu0 0.0
      %994 = vmatpush1.msra.mxu0 %v345
      %995 = vmatprep.subr.mxu0 0.0
      %996 = vmatpush1.msra.mxu0 %v346
      %997 = vmatprep.subr.mxu0 0.0
      %998 = vmatpush1.msra.mxu0 %v347
      %999 = vmatprep.subr.mxu0 0.0
      %1000 = vmatpush1.msra.mxu0 %v348
      %1001 = vmatprep.subr.mxu0 0.0
      %1002 = vmatpush1.msra.mxu0 %v349
      %1003 = vmatprep.subr.mxu0 0.0
      %1004 = vmatpush1.msra.mxu0 %v350
      %1005 = vmatprep.subr.mxu0 0.0
      %1006 = vmatpush1.msra.mxu0 %v351
      %1007 = vmatprep.subr.mxu0 0.0
      %1008 = vmatpush1.msra.mxu0 %v352
      %1009 = vmatprep.subr.mxu0 0.0
      %1010 = vmatpush1.msra.mxu0 %v353
      %1011 = vmatprep.subr.mxu0 0.0
      %1012 = vmatpush1.msra.mxu0 %v354
      %1013 = vmatprep.subr.mxu0 0.0
      %1014 = vmatpush1.msra.mxu0 %v355
      %1015 = vmatprep.subr.mxu0 0.0
      %1016 = vmatpush1.msra.mxu0 %v356
      %1017 = vmatprep.subr.mxu0 0.0
      %1018 = vmatpush1.msra.mxu0 %v357
      %1019 = vmatprep.subr.mxu0 0.0
      %1020 = vmatpush1.msra.mxu0 %v358
      %1021 = vmatprep.subr.mxu0 0.0
      %1022 = vmatpush1.msra.mxu0 %v359
      %1023 = vmatprep.subr.mxu0 0.0
      %1024 = vmatpush1.msra.mxu0 0.0
      %1025 = vmatprep.subr.mxu0 0.0
      %1026 = vmatpush1.msra.mxu0 0.0
      %1027 = vmatprep.subr.mxu0 0.0
      %1028 = vmatpush1.msra.mxu0 0.0
      %1029 = vmatprep.subr.mxu0 0.0
      %1030 = vmatpush1.msra.mxu0 0.0
      %1031 = vmatprep.subr.mxu0 0.0
      %1032 = vmatpush1.msra.mxu0 0.0
      %1033 = vmatprep.subr.mxu0 0.0
      %1034 = vmatpush1.msra.mxu0 0.0
      %1035 = vmatprep.subr.mxu0 0.0
      %1036 = vmatpush1.msra.mxu0 0.0
      %1037 = vmatprep.subr.mxu0 0.0
      %1038 = vmatpush1.msra.mxu0 0.0
      %1039 = vmatprep.subr.mxu0 0.0
      %1040 = vmatpush1.msra.mxu0 0.0
      %1041 = vmatprep.subr.mxu0 0.0
      %1042 = vmatpush1.msra.mxu0 0.0
      %1043 = vmatprep.subr.mxu0 0.0
      %1044 = vmatpush1.msra.mxu0 0.0
      %1045 = vmatprep.subr.mxu0 0.0
      %1046 = vmatpush1.msra.mxu0 0.0
      %1047 = vmatprep.subr.mxu0 0.0
      %1048 = vmatpush1.msra.mxu0 0.0
      %1049 = vmatprep.subr.mxu0 0.0
      %1050 = vmatpush1.msra.mxu0 0.0
      %1051 = vmatprep.subr.mxu0 0.0
      %1052 = vmatpush1.msra.mxu0 0.0
      %1053 = vmatprep.subr.mxu0 0.0
      %1054 = vmatpush1.msra.mxu0 0.0
      %1055 = vmatprep.mubr.f32.mxu0 0.0
      %1056 = vmatmul.mubr.f32.gmra.mrb[0].mxu0 %v990
      %v1057 = vpop.f32.mrb[0].mxu0
      %v1058 = vadd.f32 0.0, %v1057
      %v1059 = vpop.f32.mrb[0].mxu0
      %1060 = vdwg.mxu0
      %v1061 = vmul.f32 %v1058, 1e-06
      %vm1062 = vcmp.le.f32.partialorder %v1058, %v1061
      %v1063 = vsel %vm1062, 1, 0
      %v1064 = vcvt.s32.f32 %v1063
      %vm1065 = vcmask 1040384
      %v1066 = vsel %vm1065, %v1064, inf
      %1067 = vmin.xlane.f32.xlu0 %v1066
      %v1068 = vpop.xlane.xlu0 %1067
      %v1069 = vrot.slane %v1068, 4
      %v1070 = vmin.f32 %v1068, %v1069
      %v1071 = vrot.slane %v1070, 2
      %v1072 = vmin.f32 %v1070, %v1071
      %v1073 = vrot.slane %v1072, 1
      %v1074 = vmin.f32 %v1072, %v1073
      %s1075 = vtos %v1074
      // While loop
      $region49: #{wiener_kpn_sa_forward.1} parent=47 // loop_pre_header
        _
      $region50: #{wiener_kpn_sa_forward.1} parent=47 // loop_header
        %s1077 = sphi 0, %s2830
        %s1078 = sphi 0, %s1954
        %s1079 = sphi %s1075, %s2840
        %v1080 = vphi 0.0, %v1949
        %v1081 = vphi 0.0, %v1950
        %v1082 = vphi 0.0, %v1951
        %v1083 = vphi %v975, %v2726
        %v1084 = vphi %v976, %v2727
        %v1085 = vphi %v977, %v2728
        %v1086 = vphi %v975, %v2827
        %v1087 = vphi %v976, %v2828
        %v1088 = vphi %v977, %v2829
        %v1089 = vphi %v1058, %v2808
        %v1090 = vphi %v1064, %v2814
        %p1091 = scmp.lt.s32.totalorder %s1077, 60
        %p1092 = scmp.lt.f32.partialorder %s1079, 0.5
        %p1093 = pnand %p1091, %p1092
        %p1094 = pneg %p1093
      $region51: #{wiener_kpn_sa_forward.1} parent=47 // loop_header_branch
        %1096 = sbr.rel (%p1093) target = $region55
      $region52: #{wiener_kpn_sa_forward.1} parent=47 // loop_body
        %1097 = vst [vmem:[#allocation2 + $0x8] sm:$0xff] %v1086
        %1098 = vst [vmem:[#allocation2 + $0x10] sm:$0xff] %v1087
        %1099 = vst [vmem:[#allocation2 + $0x18] sm:$0xf] %v1088
        %v1100 = vld [vmem:[#allocation2 + $0x7] sm:$0xff]
        %v1101 = vld [vmem:[#allocation2 + $0xf] sm:$0xff]
        %v1102 = vld [vmem:[#allocation2 + $0x17] sm:$0xf]
        %v1103 = vld [vmem:[#allocation2 + $0x8] sm:$0xff]
        %v1104 = vld [vmem:[#allocation2 + $0x10] sm:$0xff]
        %v1105 = vld [vmem:[#allocation2 + $0x18] sm:$0xf]
        %v1106 = vld [vmem:[#allocation2 + $0x9] sm:$0xff]
        %v1107 = vld [vmem:[#allocation2 + $0x11] sm:$0xff]
        %v1108 = vld [vmem:[#allocation2 + $0x19] sm:$0xf]
        %1109 = vrot.lane.b32.xlu0 %v1100, 1
        %v1110 = vpop.permute.xlu0 %1109
        %1111 = vrot.lane.b32.xlu0 %v1101, 1
        %v1112 = vpop.permute.xlu0 %1111
        %1113 = vrot.lane.b32.xlu0 %v1102, 1
        %v1114 = vpop.permute.xlu0 %1113
        %v1115 = vmul.f32 %v485, %v1110
        %v1116 = vmul.f32 %v486, %v1112
        %v1117 = vmul.f32 %v487, %v1114
        %v1118 = vmul.f32 %v489, %v1100
        %v1119 = vmul.f32 %v490, %v1101
        %v1120 = vmul.f32 %v491, %v1102
        %1121 = vrot.lane.b32.xlu0 %v1100, 127
        %v1122 = vpop.permute.xlu0 %1121
        %1123 = vrot.lane.b32.xlu0 %v1101, 127
        %v1124 = vpop.permute.xlu0 %1123
        %1125 = vrot.lane.b32.xlu0 %v1102, 127
        %v1126 = vpop.permute.xlu0 %1125
        %v1127 = vmul.f32 %v493, %v1122
        %v1128 = vmul.f32 %v494, %v1124
        %v1129 = vmul.f32 %v495, %v1126
        %1130 = vrot.lane.b32.xlu0 %v1103, 1
        %v1131 = vpop.permute.xlu0 %1130
        %1132 = vrot.lane.b32.xlu0 %v1104, 1
        %v1133 = vpop.permute.xlu0 %1132
        %1134 = vrot.lane.b32.xlu0 %v1105, 1
        %v1135 = vpop.permute.xlu0 %1134
        %v1136 = vmul.f32 %v497, %v1131
        %v1137 = vmul.f32 %v498, %v1133
        %v1138 = vmul.f32 %v499, %v1135
        %v1139 = vmul.f32 %v501, %v1103
        %v1140 = vmul.f32 %v502, %v1104
        %v1141 = vmul.f32 %v503, %v1105
        %1142 = vrot.lane.b32.xlu0 %v1103, 127
        %v1143 = vpop.permute.xlu0 %1142
        %1144 = vrot.lane.b32.xlu0 %v1104, 127
        %v1145 = vpop.permute.xlu0 %1144
        %1146 = vrot.lane.b32.xlu0 %v1105, 127
        %v1147 = vpop.permute.xlu0 %1146
        %v1148 = vmul.f32 %v505, %v1143
        %v1149 = vmul.f32 %v506, %v1145
        %v1150 = vmul.f32 %v507, %v1147
        %1151 = vrot.lane.b32.xlu0 %v1106, 1
        %v1152 = vpop.permute.xlu0 %1151
        %1153 = vrot.lane.b32.xlu0 %v1107, 1
        %v1154 = vpop.permute.xlu0 %1153
        %1155 = vrot.lane.b32.xlu0 %v1108, 1
        %v1156 = vpop.permute.xlu0 %1155
        %v1157 = vmul.f32 %v509, %v1152
        %v1158 = vmul.f32 %v510, %v1154
        %v1159 = vmul.f32 %v511, %v1156
        %v1160 = vmul.f32 %v513, %v1106
        %v1161 = vmul.f32 %v514, %v1107
        %v1162 = vmul.f32 %v515, %v1108
        %1163 = vrot.lane.b32.xlu0 %v1106, 127
        %v1164 = vpop.permute.xlu0 %1163
        %1165 = vrot.lane.b32.xlu0 %v1107, 127
        %v1166 = vpop.permute.xlu0 %1165
        %1167 = vrot.lane.b32.xlu0 %v1108, 127
        %v1168 = vpop.permute.xlu0 %1167
        %v1169 = vmul.f32 %v517, %v1164
        %v1170 = vmul.f32 %v518, %v1166
        %v1171 = vmul.f32 %v519, %v1168
        %v1172 = vadd.f32 %v1115, %v1118
        %v1173 = vadd.f32 %v1116, %v1119
        %v1174 = vadd.f32 %v1117, %v1120
        %v1175 = vadd.f32 %v1127, %v1136
        %v1176 = vadd.f32 %v1128, %v1137
        %v1177 = vadd.f32 %v1129, %v1138
        %v1178 = vadd.f32 %v1139, %v1148
        %v1179 = vadd.f32 %v1140, %v1149
        %v1180 = vadd.f32 %v1141, %v1150
        %v1181 = vadd.f32 %v1157, %v1160
        %v1182 = vadd.f32 %v1158, %v1161
        %v1183 = vadd.f32 %v1159, %v1162
        %v1184 = vadd.f32 %v1172, %v1175
        %v1185 = vadd.f32 %v1173, %v1176
        %v1186 = vadd.f32 %v1174, %v1177
        %v1187 = vadd.f32 %v1178, %v1181
        %v1188 = vadd.f32 %v1179, %v1182
        %v1189 = vadd.f32 %v1180, %v1183
        %v1190 = vadd.f32 %v1184, %v1187
        %v1191 = vadd.f32 %v1185, %v1188
        %v1192 = vadd.f32 %v1186, %v1189
        %v1193 = vadd.f32 %v1190, %v1169
        %v1194 = vadd.f32 %v1191, %v1170
        %v1195 = vadd.f32 %v1192, %v1171
        %v1196 = vmul.f32 %v610, %v1106
        %v1197 = vmul.f32 %v611, %v1107
        %v1198 = vmul.f32 %v612, %v1108
        %v1199 = vmul.f32 %v628, %v1100
        %v1200 = vmul.f32 %v629, %v1101
        %v1201 = vmul.f32 %v630, %v1102
        %v1202 = vld [vmem:[#allocation2 + $0xb] sm:$0xff]
        %v1203 = vld [vmem:[#allocation2 + $0x13] sm:$0xff]
        %v1204 = vld [vmem:[#allocation2 + $0x1b] sm:$0xf]
        %v1205 = vmul.f32 %v619, %v1202
        %v1206 = vmul.f32 %v620, %v1203
        %v1207 = vmul.f32 %v621, %v1204
        %v1208 = vld [vmem:[#allocation2 + $0x5] sm:$0xff]
        %v1209 = vld [vmem:[#allocation2 + $0xd] sm:$0xff]
        %v1210 = vld [vmem:[#allocation2 + $0x15] sm:$0xf]
        %v1211 = vmul.f32 %v637, %v1208
        %v1212 = vmul.f32 %v638, %v1209
        %v1213 = vmul.f32 %v639, %v1210
        %v1214 = vadd.f32 %v1086, %v1196
        %v1215 = vadd.f32 %v1087, %v1197
        %v1216 = vadd.f32 %v1088, %v1198
        %v1217 = vadd.f32 %v1199, %v1205
        %v1218 = vadd.f32 %v1200, %v1206
        %v1219 = vadd.f32 %v1201, %v1207
        %v1220 = vadd.f32 %v1214, %v1217
        %v1221 = vadd.f32 %v1215, %v1218
        %v1222 = vadd.f32 %v1216, %v1219
        %v1223 = vadd.f32 %v1220, %v1211
        %v1224 = vadd.f32 %v1221, %v1212
        %v1225 = vadd.f32 %v1222, %v1213
        %1226 = vrot.lane.b32.xlu0 %v1223, 127
        %v1227 = vpop.permute.xlu0 %1226
        %1228 = vrot.lane.b32.xlu0 %v1224, 127
        %v1229 = vpop.permute.xlu0 %1228
        %1230 = vrot.lane.b32.xlu0 %v1225, 127
        %v1231 = vpop.permute.xlu0 %1230
        %v1232 = vmul.f32 %v559, %v1227
        %v1233 = vmul.f32 %v559, %v1229
        %v1234 = vmul.f32 %v559, %v1231
        %1235 = vrot.lane.b32.xlu0 %v1223, 1
        %v1236 = vpop.permute.xlu0 %1235
        %1237 = vrot.lane.b32.xlu0 %v1224, 1
        %v1238 = vpop.permute.xlu0 %1237
        %1239 = vrot.lane.b32.xlu0 %v1225, 1
        %v1240 = vpop.permute.xlu0 %1239
        %v1241 = vmul.f32 %v589, %v1236
        %v1242 = vmul.f32 %v589, %v1238
        %v1243 = vmul.f32 %v589, %v1240
        %1244 = vrot.lane.b32.xlu0 %v1223, 125
        %v1245 = vpop.permute.xlu0 %1244
        %1246 = vrot.lane.b32.xlu0 %v1224, 125
        %v1247 = vpop.permute.xlu0 %1246
        %1248 = vrot.lane.b32.xlu0 %v1225, 125
        %v1249 = vpop.permute.xlu0 %1248
        %v1250 = vmul.f32 %v564, %v1245
        %v1251 = vmul.f32 %v564, %v1247
        %v1252 = vmul.f32 %v564, %v1249
        %1253 = vrot.lane.b32.xlu0 %v1223, 3
        %v1254 = vpop.permute.xlu0 %1253
        %1255 = vrot.lane.b32.xlu0 %v1224, 3
        %v1256 = vpop.permute.xlu0 %1255
        %1257 = vrot.lane.b32.xlu0 %v1225, 3
        %v1258 = vpop.permute.xlu0 %1257
        %v1259 = vmul.f32 %v594, %v1254
        %v1260 = vmul.f32 %v594, %v1256
        %v1261 = vmul.f32 %v594, %v1258
        %v1262 = vadd.f32 %v1223, %v1232
        %v1263 = vadd.f32 %v1224, %v1233
        %v1264 = vadd.f32 %v1225, %v1234
        %v1265 = vadd.f32 %v1241, %v1250
        %v1266 = vadd.f32 %v1242, %v1251
        %v1267 = vadd.f32 %v1243, %v1252
        %v1268 = vadd.f32 %v1262, %v1265
        %v1269 = vadd.f32 %v1263, %v1266
        %v1270 = vadd.f32 %v1264, %v1267
        %v1271 = vadd.f32 %v1268, %v1259
        %v1272 = vadd.f32 %v1269, %v1260
        %v1273 = vadd.f32 %v1270, %v1261
        %1274 = vst [vmem:[#allocation2 + $0x8] sm:$0xff] %v1271
        %1275 = vst [vmem:[#allocation2 + $0x10] sm:$0xff] %v1272
        %1276 = vst [vmem:[#allocation2 + $0x18] sm:$0xf] %v1273
        %v1277 = vld [vmem:[#allocation2 + $0x6] sm:$0xff]
        %v1278 = vld [vmem:[#allocation2 + $0xe] sm:$0xff]
        %v1279 = vld [vmem:[#allocation2 + $0x16] sm:$0xf]
        %v1280 = vld [vmem:[#allocation2 + $0x7] sm:$0xff]
        %v1281 = vld [vmem:[#allocation2 + $0xf] sm:$0xff]
        %v1282 = vld [vmem:[#allocation2 + $0x17] sm:$0xf]
        %v1283 = vld [vmem:[#allocation2 + $0x8] sm:$0xff]
        %v1284 = vld [vmem:[#allocation2 + $0x10] sm:$0xff]
        %v1285 = vld [vmem:[#allocation2 + $0x18] sm:$0xf]
        %v1286 = vld [vmem:[#allocation2 + $0x9] sm:$0xff]
        %v1287 = vld [vmem:[#allocation2 + $0x11] sm:$0xff]
        %v1288 = vld [vmem:[#allocation2 + $0x19] sm:$0xf]
        %v1289 = vld [vmem:[#allocation2 + $0xa] sm:$0xff]
        %v1290 = vld [vmem:[#allocation2 + $0x12] sm:$0xff]
        %v1291 = vld [vmem:[#allocation2 + $0x1a] sm:$0xf]
        %v1292 = vmul.f32 %v484, %v1277
        %v1293 = vmul.f32 %v484, %v1278
        %v1294 = vmul.f32 %v484, %v1279
        %v1295 = vmul.f32 %v459, %v1280
        %v1296 = vmul.f32 %v459, %v1281
        %v1297 = vmul.f32 %v459, %v1282
        %v1298 = vmul.f32 %v434, %v1283
        %v1299 = vmul.f32 %v434, %v1284
        %v1300 = vmul.f32 %v434, %v1285
        %v1301 = vmul.f32 %v409, %v1286
        %v1302 = vmul.f32 %v409, %v1287
        %v1303 = vmul.f32 %v409, %v1288
        %v1304 = vmul.f32 %v384, %v1289
        %v1305 = vmul.f32 %v384, %v1290
        %v1306 = vmul.f32 %v384, %v1291
        %v1307 = vadd.f32 %v1292, %v1295
        %v1308 = vadd.f32 %v1293, %v1296
        %v1309 = vadd.f32 %v1294, %v1297
        %v1310 = vadd.f32 %v1298, %v1301
        %v1311 = vadd.f32 %v1299, %v1302
        %v1312 = vadd.f32 %v1300, %v1303
        %v1313 = vadd.f32 %v1307, %v1310
        %v1314 = vadd.f32 %v1308, %v1311
        %v1315 = vadd.f32 %v1309, %v1312
        %v1316 = vadd.f32 %v1313, %v1304
        %v1317 = vadd.f32 %v1314, %v1305
        %v1318 = vadd.f32 %v1315, %v1306
        %1319 = vrot.lane.b32.xlu0 %v1316, 2
        %v1320 = vpop.permute.xlu0 %1319
        %1321 = vrot.lane.b32.xlu0 %v1317, 2
        %v1322 = vpop.permute.xlu0 %1321
        %1323 = vrot.lane.b32.xlu0 %v1318, 2
        %v1324 = vpop.permute.xlu0 %1323
        %v1325 = vmul.f32 %v479, %v1277
        %v1326 = vmul.f32 %v479, %v1278
        %v1327 = vmul.f32 %v479, %v1279
        %v1328 = vmul.f32 %v454, %v1280
        %v1329 = vmul.f32 %v454, %v1281
        %v1330 = vmul.f32 %v454, %v1282
        %v1331 = vmul.f32 %v429, %v1283
        %v1332 = vmul.f32 %v429, %v1284
        %v1333 = vmul.f32 %v429, %v1285
        %v1334 = vmul.f32 %v404, %v1286
        %v1335 = vmul.f32 %v404, %v1287
        %v1336 = vmul.f32 %v404, %v1288
        %v1337 = vmul.f32 %v379, %v1289
        %v1338 = vmul.f32 %v379, %v1290
        %v1339 = vmul.f32 %v379, %v1291
        %v1340 = vadd.f32 %v1325, %v1328
        %v1341 = vadd.f32 %v1326, %v1329
        %v1342 = vadd.f32 %v1327, %v1330
        %v1343 = vadd.f32 %v1331, %v1334
        %v1344 = vadd.f32 %v1332, %v1335
        %v1345 = vadd.f32 %v1333, %v1336
        %v1346 = vadd.f32 %v1340, %v1343
        %v1347 = vadd.f32 %v1341, %v1344
        %v1348 = vadd.f32 %v1342, %v1345
        %v1349 = vadd.f32 %v1346, %v1337
        %v1350 = vadd.f32 %v1347, %v1338
        %v1351 = vadd.f32 %v1348, %v1339
        %1352 = vrot.lane.b32.xlu0 %v1349, 1
        %v1353 = vpop.permute.xlu0 %1352
        %1354 = vrot.lane.b32.xlu0 %v1350, 1
        %v1355 = vpop.permute.xlu0 %1354
        %1356 = vrot.lane.b32.xlu0 %v1351, 1
        %v1357 = vpop.permute.xlu0 %1356
        %v1358 = vmul.f32 %v474, %v1277
        %v1359 = vmul.f32 %v474, %v1278
        %v1360 = vmul.f32 %v474, %v1279
        %v1361 = vmul.f32 %v449, %v1280
        %v1362 = vmul.f32 %v449, %v1281
        %v1363 = vmul.f32 %v449, %v1282
        %v1364 = vmul.f32 %v424, %v1283
        %v1365 = vmul.f32 %v424, %v1284
        %v1366 = vmul.f32 %v424, %v1285
        %v1367 = vmul.f32 %v399, %v1286
        %v1368 = vmul.f32 %v399, %v1287
        %v1369 = vmul.f32 %v399, %v1288
        %v1370 = vmul.f32 %v374, %v1289
        %v1371 = vmul.f32 %v374, %v1290
        %v1372 = vmul.f32 %v374, %v1291
        %v1373 = vadd.f32 %v1358, %v1361
        %v1374 = vadd.f32 %v1359, %v1362
        %v1375 = vadd.f32 %v1360, %v1363
        %v1376 = vadd.f32 %v1364, %v1367
        %v1377 = vadd.f32 %v1365, %v1368
        %v1378 = vadd.f32 %v1366, %v1369
        %v1379 = vadd.f32 %v1373, %v1376
        %v1380 = vadd.f32 %v1374, %v1377
        %v1381 = vadd.f32 %v1375, %v1378
        %v1382 = vadd.f32 %v1379, %v1370
        %v1383 = vadd.f32 %v1380, %v1371
        %v1384 = vadd.f32 %v1381, %v1372
        %v1385 = vmul.f32 %v469, %v1277
        %v1386 = vmul.f32 %v469, %v1278
        %v1387 = vmul.f32 %v469, %v1279
        %v1388 = vmul.f32 %v444, %v1280
        %v1389 = vmul.f32 %v444, %v1281
        %v1390 = vmul.f32 %v444, %v1282
        %v1391 = vmul.f32 %v419, %v1283
        %v1392 = vmul.f32 %v419, %v1284
        %v1393 = vmul.f32 %v419, %v1285
        %v1394 = vmul.f32 %v394, %v1286
        %v1395 = vmul.f32 %v394, %v1287
        %v1396 = vmul.f32 %v394, %v1288
        %v1397 = vmul.f32 %v369, %v1289
        %v1398 = vmul.f32 %v369, %v1290
        %v1399 = vmul.f32 %v369, %v1291
        %v1400 = vadd.f32 %v1385, %v1388
        %v1401 = vadd.f32 %v1386, %v1389
        %v1402 = vadd.f32 %v1387, %v1390
        %v1403 = vadd.f32 %v1391, %v1394
        %v1404 = vadd.f32 %v1392, %v1395
        %v1405 = vadd.f32 %v1393, %v1396
        %v1406 = vadd.f32 %v1400, %v1403
        %v1407 = vadd.f32 %v1401, %v1404
        %v1408 = vadd.f32 %v1402, %v1405
        %v1409 = vadd.f32 %v1406, %v1397
        %v1410 = vadd.f32 %v1407, %v1398
        %v1411 = vadd.f32 %v1408, %v1399
        %1412 = vrot.lane.b32.xlu0 %v1409, 127
        %v1413 = vpop.permute.xlu0 %1412
        %1414 = vrot.lane.b32.xlu0 %v1410, 127
        %v1415 = vpop.permute.xlu0 %1414
        %1416 = vrot.lane.b32.xlu0 %v1411, 127
        %v1417 = vpop.permute.xlu0 %1416
        %v1418 = vmul.f32 %v464, %v1277
        %v1419 = vmul.f32 %v464, %v1278
        %v1420 = vmul.f32 %v464, %v1279
        %v1421 = vmul.f32 %v439, %v1280
        %v1422 = vmul.f32 %v439, %v1281
        %v1423 = vmul.f32 %v439, %v1282
        %v1424 = vmul.f32 %v414, %v1283
        %v1425 = vmul.f32 %v414, %v1284
        %v1426 = vmul.f32 %v414, %v1285
        %v1427 = vmul.f32 %v389, %v1286
        %v1428 = vmul.f32 %v389, %v1287
        %v1429 = vmul.f32 %v389, %v1288
        %v1430 = vmul.f32 %v364, %v1289
        %v1431 = vmul.f32 %v364, %v1290
        %v1432 = vmul.f32 %v364, %v1291
        %v1433 = vadd.f32 %v1418, %v1421
        %v1434 = vadd.f32 %v1419, %v1422
        %v1435 = vadd.f32 %v1420, %v1423
        %v1436 = vadd.f32 %v1424, %v1427
        %v1437 = vadd.f32 %v1425, %v1428
        %v1438 = vadd.f32 %v1426, %v1429
        %v1439 = vadd.f32 %v1433, %v1436
        %v1440 = vadd.f32 %v1434, %v1437
        %v1441 = vadd.f32 %v1435, %v1438
        %v1442 = vadd.f32 %v1439, %v1430
        %v1443 = vadd.f32 %v1440, %v1431
        %v1444 = vadd.f32 %v1441, %v1432
        %1445 = vrot.lane.b32.xlu0 %v1442, 126
        %v1446 = vpop.permute.xlu0 %1445
        %1447 = vrot.lane.b32.xlu0 %v1443, 126
        %v1448 = vpop.permute.xlu0 %1447
        %1449 = vrot.lane.b32.xlu0 %v1444, 126
        %v1450 = vpop.permute.xlu0 %1449
        %v1451 = vadd.f32 %v1320, %v1353
        %v1452 = vadd.f32 %v1322, %v1355
        %v1453 = vadd.f32 %v1324, %v1357
        %v1454 = vadd.f32 %v1382, %v1413
        %v1455 = vadd.f32 %v1383, %v1415
        %v1456 = vadd.f32 %v1384, %v1417
        %v1457 = vadd.f32 %v1451, %v1454
        %v1458 = vadd.f32 %v1452, %v1455
        %v1459 = vadd.f32 %v1453, %v1456
        %v1460 = vadd.f32 %v1457, %v1446
        %v1461 = vadd.f32 %v1458, %v1448
        %v1462 = vadd.f32 %v1459, %v1450
        %v1463 = vmul.f32 %v691, %v1460
        %v1464 = vmul.f32 %v692, %v1461
        %v1465 = vmul.f32 %v693, %v1462
        %1466 = vst [vmem:[#allocation2 + $0x8] sm:$0xff] %v1463
        %1467 = vst [vmem:[#allocation2 + $0x10] sm:$0xff] %v1464
        %1468 = vst [vmem:[#allocation2 + $0x18] sm:$0xf] %v1465
        %v1469 = vld [vmem:[#allocation2 + $0x6] sm:$0xff]
        %v1470 = vld [vmem:[#allocation2 + $0xe] sm:$0xff]
        %v1471 = vld [vmem:[#allocation2 + $0x16] sm:$0xf]
        %v1472 = vld [vmem:[#allocation2 + $0x7] sm:$0xff]
        %v1473 = vld [vmem:[#allocation2 + $0xf] sm:$0xff]
        %v1474 = vld [vmem:[#allocation2 + $0x17] sm:$0xf]
        %v1475 = vld [vmem:[#allocation2 + $0x8] sm:$0xff]
        %v1476 = vld [vmem:[#allocation2 + $0x10] sm:$0xff]
        %v1477 = vld [vmem:[#allocation2 + $0x18] sm:$0xf]
        %v1478 = vld [vmem:[#allocation2 + $0x9] sm:$0xff]
        %v1479 = vld [vmem:[#allocation2 + $0x11] sm:$0xff]
        %v1480 = vld [vmem:[#allocation2 + $0x19] sm:$0xf]
        %v1481 = vld [vmem:[#allocation2 + $0xa] sm:$0xff]
        %v1482 = vld [vmem:[#allocation2 + $0x12] sm:$0xff]
        %v1483 = vld [vmem:[#allocation2 + $0x1a] sm:$0xf]
        %v1484 = vmul.f32 %v364, %v1469
        %v1485 = vmul.f32 %v364, %v1470
        %v1486 = vmul.f32 %v364, %v1471
        %v1487 = vmul.f32 %v389, %v1472
        %v1488 = vmul.f32 %v389, %v1473
        %v1489 = vmul.f32 %v389, %v1474
        %v1490 = vmul.f32 %v414, %v1475
        %v1491 = vmul.f32 %v414, %v1476
        %v1492 = vmul.f32 %v414, %v1477
        %v1493 = vmul.f32 %v439, %v1478
        %v1494 = vmul.f32 %v439, %v1479
        %v1495 = vmul.f32 %v439, %v1480
        %v1496 = vmul.f32 %v464, %v1481
        %v1497 = vmul.f32 %v464, %v1482
        %v1498 = vmul.f32 %v464, %v1483
        %v1499 = vadd.f32 %v1484, %v1487
        %v1500 = vadd.f32 %v1485, %v1488
        %v1501 = vadd.f32 %v1486, %v1489
        %v1502 = vadd.f32 %v1490, %v1493
        %v1503 = vadd.f32 %v1491, %v1494
        %v1504 = vadd.f32 %v1492, %v1495
        %v1505 = vadd.f32 %v1499, %v1502
        %v1506 = vadd.f32 %v1500, %v1503
        %v1507 = vadd.f32 %v1501, %v1504
        %v1508 = vadd.f32 %v1505, %v1496
        %v1509 = vadd.f32 %v1506, %v1497
        %v1510 = vadd.f32 %v1507, %v1498
        %1511 = vrot.lane.b32.xlu0 %v1508, 2
        %v1512 = vpop.permute.xlu0 %1511
        %1513 = vrot.lane.b32.xlu0 %v1509, 2
        %v1514 = vpop.permute.xlu0 %1513
        %1515 = vrot.lane.b32.xlu0 %v1510, 2
        %v1516 = vpop.permute.xlu0 %1515
        %v1517 = vmul.f32 %v369, %v1469
        %v1518 = vmul.f32 %v369, %v1470
        %v1519 = vmul.f32 %v369, %v1471
        %v1520 = vmul.f32 %v394, %v1472
        %v1521 = vmul.f32 %v394, %v1473
        %v1522 = vmul.f32 %v394, %v1474
        %v1523 = vmul.f32 %v419, %v1475
        %v1524 = vmul.f32 %v419, %v1476
        %v1525 = vmul.f32 %v419, %v1477
        %v1526 = vmul.f32 %v444, %v1478
        %v1527 = vmul.f32 %v444, %v1479
        %v1528 = vmul.f32 %v444, %v1480
        %v1529 = vmul.f32 %v469, %v1481
        %v1530 = vmul.f32 %v469, %v1482
        %v1531 = vmul.f32 %v469, %v1483
        %v1532 = vadd.f32 %v1517, %v1520
        %v1533 = vadd.f32 %v1518, %v1521
        %v1534 = vadd.f32 %v1519, %v1522
        %v1535 = vadd.f32 %v1523, %v1526
        %v1536 = vadd.f32 %v1524, %v1527
        %v1537 = vadd.f32 %v1525, %v1528
        %v1538 = vadd.f32 %v1532, %v1535
        %v1539 = vadd.f32 %v1533, %v1536
        %v1540 = vadd.f32 %v1534, %v1537
        %v1541 = vadd.f32 %v1538, %v1529
        %v1542 = vadd.f32 %v1539, %v1530
        %v1543 = vadd.f32 %v1540, %v1531
        %1544 = vrot.lane.b32.xlu0 %v1541, 1
        %v1545 = vpop.permute.xlu0 %1544
        %1546 = vrot.lane.b32.xlu0 %v1542, 1
        %v1547 = vpop.permute.xlu0 %1546
        %1548 = vrot.lane.b32.xlu0 %v1543, 1
        %v1549 = vpop.permute.xlu0 %1548
        %v1550 = vmul.f32 %v374, %v1469
        %v1551 = vmul.f32 %v374, %v1470
        %v1552 = vmul.f32 %v374, %v1471
        %v1553 = vmul.f32 %v399, %v1472
        %v1554 = vmul.f32 %v399, %v1473
        %v1555 = vmul.f32 %v399, %v1474
        %v1556 = vmul.f32 %v424, %v1475
        %v1557 = vmul.f32 %v424, %v1476
        %v1558 = vmul.f32 %v424, %v1477
        %v1559 = vmul.f32 %v449, %v1478
        %v1560 = vmul.f32 %v449, %v1479
        %v1561 = vmul.f32 %v449, %v1480
        %v1562 = vmul.f32 %v474, %v1481
        %v1563 = vmul.f32 %v474, %v1482
        %v1564 = vmul.f32 %v474, %v1483
        %v1565 = vadd.f32 %v1550, %v1553
        %v1566 = vadd.f32 %v1551, %v1554
        %v1567 = vadd.f32 %v1552, %v1555
        %v1568 = vadd.f32 %v1556, %v1559
        %v1569 = vadd.f32 %v1557, %v1560
        %v1570 = vadd.f32 %v1558, %v1561
        %v1571 = vadd.f32 %v1565, %v1568
        %v1572 = vadd.f32 %v1566, %v1569
        %v1573 = vadd.f32 %v1567, %v1570
        %v1574 = vadd.f32 %v1571, %v1562
        %v1575 = vadd.f32 %v1572, %v1563
        %v1576 = vadd.f32 %v1573, %v1564
        %v1577 = vmul.f32 %v379, %v1469
        %v1578 = vmul.f32 %v379, %v1470
        %v1579 = vmul.f32 %v379, %v1471
        %v1580 = vmul.f32 %v404, %v1472
        %v1581 = vmul.f32 %v404, %v1473
        %v1582 = vmul.f32 %v404, %v1474
        %v1583 = vmul.f32 %v429, %v1475
        %v1584 = vmul.f32 %v429, %v1476
        %v1585 = vmul.f32 %v429, %v1477
        %v1586 = vmul.f32 %v454, %v1478
        %v1587 = vmul.f32 %v454, %v1479
        %v1588 = vmul.f32 %v454, %v1480
        %v1589 = vmul.f32 %v479, %v1481
        %v1590 = vmul.f32 %v479, %v1482
        %v1591 = vmul.f32 %v479, %v1483
        %v1592 = vadd.f32 %v1577, %v1580
        %v1593 = vadd.f32 %v1578, %v1581
        %v1594 = vadd.f32 %v1579, %v1582
        %v1595 = vadd.f32 %v1583, %v1586
        %v1596 = vadd.f32 %v1584, %v1587
        %v1597 = vadd.f32 %v1585, %v1588
        %v1598 = vadd.f32 %v1592, %v1595
        %v1599 = vadd.f32 %v1593, %v1596
        %v1600 = vadd.f32 %v1594, %v1597
        %v1601 = vadd.f32 %v1598, %v1589
        %v1602 = vadd.f32 %v1599, %v1590
        %v1603 = vadd.f32 %v1600, %v1591
        %1604 = vrot.lane.b32.xlu0 %v1601, 127
        %v1605 = vpop.permute.xlu0 %1604
        %1606 = vrot.lane.b32.xlu0 %v1602, 127
        %v1607 = vpop.permute.xlu0 %1606
        %1608 = vrot.lane.b32.xlu0 %v1603, 127
        %v1609 = vpop.permute.xlu0 %1608
        %v1610 = vmul.f32 %v384, %v1469
        %v1611 = vmul.f32 %v384, %v1470
        %v1612 = vmul.f32 %v384, %v1471
        %v1613 = vmul.f32 %v409, %v1472
        %v1614 = vmul.f32 %v409, %v1473
        %v1615 = vmul.f32 %v409, %v1474
        %v1616 = vmul.f32 %v434, %v1475
        %v1617 = vmul.f32 %v434, %v1476
        %v1618 = vmul.f32 %v434, %v1477
        %v1619 = vmul.f32 %v459, %v1478
        %v1620 = vmul.f32 %v459, %v1479
        %v1621 = vmul.f32 %v459, %v1480
        %v1622 = vmul.f32 %v484, %v1481
        %v1623 = vmul.f32 %v484, %v1482
        %v1624 = vmul.f32 %v484, %v1483
        %v1625 = vadd.f32 %v1610, %v1613
        %v1626 = vadd.f32 %v1611, %v1614
        %v1627 = vadd.f32 %v1612, %v1615
        %v1628 = vadd.f32 %v1616, %v1619
        %v1629 = vadd.f32 %v1617, %v1620
        %v1630 = vadd.f32 %v1618, %v1621
        %v1631 = vadd.f32 %v1625, %v1628
        %v1632 = vadd.f32 %v1626, %v1629
        %v1633 = vadd.f32 %v1627, %v1630
        %v1634 = vadd.f32 %v1631, %v1622
        %v1635 = vadd.f32 %v1632, %v1623
        %v1636 = vadd.f32 %v1633, %v1624
        %1637 = vrot.lane.b32.xlu0 %v1634, 126
        %v1638 = vpop.permute.xlu0 %1637
        %1639 = vrot.lane.b32.xlu0 %v1635, 126
        %v1640 = vpop.permute.xlu0 %1639
        %1641 = vrot.lane.b32.xlu0 %v1636, 126
        %v1642 = vpop.permute.xlu0 %1641
        %v1643 = vadd.f32 %v1512, %v1545
        %v1644 = vadd.f32 %v1514, %v1547
        %v1645 = vadd.f32 %v1516, %v1549
        %v1646 = vadd.f32 %v1574, %v1605
        %v1647 = vadd.f32 %v1575, %v1607
        %v1648 = vadd.f32 %v1576, %v1609
        %v1649 = vadd.f32 %v1643, %v1646
        %v1650 = vadd.f32 %v1644, %v1647
        %v1651 = vadd.f32 %v1645, %v1648
        %v1652 = vadd.f32 %v1649, %v1638
        %v1653 = vadd.f32 %v1650, %v1640
        %v1654 = vadd.f32 %v1651, %v1642
        %1655 = vrot.lane.b32.xlu0 %v1652, 1
        %v1656 = vpop.permute.xlu0 %1655
        %1657 = vrot.lane.b32.xlu0 %v1653, 1
        %v1658 = vpop.permute.xlu0 %1657
        %1659 = vrot.lane.b32.xlu0 %v1654, 1
        %v1660 = vpop.permute.xlu0 %1659
        %v1661 = vmul.f32 %v569, %v1656
        %v1662 = vmul.f32 %v569, %v1658
        %v1663 = vmul.f32 %v569, %v1660
        %1664 = vrot.lane.b32.xlu0 %v1652, 127
        %v1665 = vpop.permute.xlu0 %1664
        %1666 = vrot.lane.b32.xlu0 %v1653, 127
        %v1667 = vpop.permute.xlu0 %1666
        %1668 = vrot.lane.b32.xlu0 %v1654, 127
        %v1669 = vpop.permute.xlu0 %1668
        %v1670 = vmul.f32 %v579, %v1665
        %v1671 = vmul.f32 %v579, %v1667
        %v1672 = vmul.f32 %v579, %v1669
        %1673 = vrot.lane.b32.xlu0 %v1652, 3
        %v1674 = vpop.permute.xlu0 %1673
        %1675 = vrot.lane.b32.xlu0 %v1653, 3
        %v1676 = vpop.permute.xlu0 %1675
        %1677 = vrot.lane.b32.xlu0 %v1654, 3
        %v1678 = vpop.permute.xlu0 %1677
        %v1679 = vmul.f32 %v574, %v1674
        %v1680 = vmul.f32 %v574, %v1676
        %v1681 = vmul.f32 %v574, %v1678
        %1682 = vrot.lane.b32.xlu0 %v1652, 125
        %v1683 = vpop.permute.xlu0 %1682
        %1684 = vrot.lane.b32.xlu0 %v1653, 125
        %v1685 = vpop.permute.xlu0 %1684
        %1686 = vrot.lane.b32.xlu0 %v1654, 125
        %v1687 = vpop.permute.xlu0 %1686
        %v1688 = vmul.f32 %v584, %v1683
        %v1689 = vmul.f32 %v584, %v1685
        %v1690 = vmul.f32 %v584, %v1687
        %v1691 = vadd.f32 %v1652, %v1661
        %v1692 = vadd.f32 %v1653, %v1662
        %v1693 = vadd.f32 %v1654, %v1663
        %v1694 = vadd.f32 %v1670, %v1679
        %v1695 = vadd.f32 %v1671, %v1680
        %v1696 = vadd.f32 %v1672, %v1681
        %v1697 = vadd.f32 %v1691, %v1694
        %v1698 = vadd.f32 %v1692, %v1695
        %v1699 = vadd.f32 %v1693, %v1696
        %v1700 = vadd.f32 %v1697, %v1688
        %v1701 = vadd.f32 %v1698, %v1689
        %v1702 = vadd.f32 %v1699, %v1690
        %1703 = vst [vmem:[#allocation2 + $0x8] sm:$0xff] %v1700
        %1704 = vst [vmem:[#allocation2 + $0x10] sm:$0xff] %v1701
        %1705 = vst [vmem:[#allocation2 + $0x18] sm:$0xf] %v1702
        %v1706 = vld [vmem:[#allocation2 + $0x7] sm:$0xff]
        %v1707 = vld [vmem:[#allocation2 + $0xf] sm:$0xff]
        %v1708 = vld [vmem:[#allocation2 + $0x17] sm:$0xf]
        %v1709 = vmul.f32 %v646, %v1706
        %v1710 = vmul.f32 %v647, %v1707
        %v1711 = vmul.f32 %v648, %v1708
        %v1712 = vld [vmem:[#allocation2 + $0x9] sm:$0xff]
        %v1713 = vld [vmem:[#allocation2 + $0x11] sm:$0xff]
        %v1714 = vld [vmem:[#allocation2 + $0x19] sm:$0xf]
        %v1715 = vmul.f32 %v664, %v1712
        %v1716 = vmul.f32 %v665, %v1713
        %v1717 = vmul.f32 %v666, %v1714
        %v1718 = vld [vmem:[#allocation2 + $0x5] sm:$0xff]
        %v1719 = vld [vmem:[#allocation2 + $0xd] sm:$0xff]
        %v1720 = vld [vmem:[#allocation2 + $0x15] sm:$0xf]
        %v1721 = vmul.f32 %v655, %v1718
        %v1722 = vmul.f32 %v656, %v1719
        %v1723 = vmul.f32 %v657, %v1720
        %v1724 = vld [vmem:[#allocation2 + $0xb] sm:$0xff]
        %v1725 = vld [vmem:[#allocation2 + $0x13] sm:$0xff]
        %v1726 = vld [vmem:[#allocation2 + $0x1b] sm:$0xf]
        %v1727 = vmul.f32 %v673, %v1724
        %v1728 = vmul.f32 %v674, %v1725
        %v1729 = vmul.f32 %v675, %v1726
        %v1730 = vadd.f32 %v1700, %v1709
        %v1731 = vadd.f32 %v1701, %v1710
        %v1732 = vadd.f32 %v1702, %v1711
        %v1733 = vadd.f32 %v1715, %v1721
        %v1734 = vadd.f32 %v1716, %v1722
        %v1735 = vadd.f32 %v1717, %v1723
        %v1736 = vadd.f32 %v1730, %v1733
        %v1737 = vadd.f32 %v1731, %v1734
        %v1738 = vadd.f32 %v1732, %v1735
        %v1739 = vadd.f32 %v1736, %v1727
        %v1740 = vadd.f32 %v1737, %v1728
        %v1741 = vadd.f32 %v1738, %v1729
        %1742 = vst [vmem:[#allocation2 + $0x8] sm:$0xff] %v1193
        %1743 = vst [vmem:[#allocation2 + $0x10] sm:$0xff] %v1194
        %1744 = vst [vmem:[#allocation2 + $0x18] sm:$0xf] %v1195
        %v1745 = vld [vmem:[#allocation2 + $0x7] sm:$0xff]
        %v1746 = vld [vmem:[#allocation2 + $0xf] sm:$0xff]
        %v1747 = vld [vmem:[#allocation2 + $0x17] sm:$0xf]
        %v1748 = vld [vmem:[#allocation2 + $0x8] sm:$0xff]
        %v1749 = vld [vmem:[#allocation2 + $0x10] sm:$0xff]
        %v1750 = vld [vmem:[#allocation2 + $0x18] sm:$0xf]
        %v1751 = vld [vmem:[#allocation2 + $0x9] sm:$0xff]
        %v1752 = vld [vmem:[#allocation2 + $0x11] sm:$0xff]
        %v1753 = vld [vmem:[#allocation2 + $0x19] sm:$0xf]
        %1754 = vrot.lane.b32.xlu0 %v1751, 127
        %v1755 = vpop.permute.xlu0 %1754
        %1756 = vrot.lane.b32.xlu0 %v1752, 127
        %v1757 = vpop.permute.xlu0 %1756
        %1758 = vrot.lane.b32.xlu0 %v1753, 127
        %v1759 = vpop.permute.xlu0 %1758
        %v1760 = vmul.f32 %v520, %v1755
        %v1761 = vmul.f32 %v521, %v1757
        %v1762 = vmul.f32 %v522, %v1759
        %v1763 = vmul.f32 %v524, %v1751
        %v1764 = vmul.f32 %v525, %v1752
        %v1765 = vmul.f32 %v526, %v1753
        %1766 = vrot.lane.b32.xlu0 %v1751, 1
        %v1767 = vpop.permute.xlu0 %1766
        %1768 = vrot.lane.b32.xlu0 %v1752, 1
        %v1769 = vpop.permute.xlu0 %1768
        %1770 = vrot.lane.b32.xlu0 %v1753, 1
        %v1771 = vpop.permute.xlu0 %1770
        %v1772 = vmul.f32 %v528, %v1767
        %v1773 = vmul.f32 %v529, %v1769
        %v1774 = vmul.f32 %v530, %v1771
        %1775 = vrot.lane.b32.xlu0 %v1748, 127
        %v1776 = vpop.permute.xlu0 %1775
        %1777 = vrot.lane.b32.xlu0 %v1749, 127
        %v1778 = vpop.permute.xlu0 %1777
        %1779 = vrot.lane.b32.xlu0 %v1750, 127
        %v1780 = vpop.permute.xlu0 %1779
        %v1781 = vmul.f32 %v532, %v1776
        %v1782 = vmul.f32 %v533, %v1778
        %v1783 = vmul.f32 %v534, %v1780
        %v1784 = vmul.f32 %v536, %v1748
        %v1785 = vmul.f32 %v537, %v1749
        %v1786 = vmul.f32 %v538, %v1750
        %1787 = vrot.lane.b32.xlu0 %v1748, 1
        %v1788 = vpop.permute.xlu0 %1787
        %1789 = vrot.lane.b32.xlu0 %v1749, 1
        %v1790 = vpop.permute.xlu0 %1789
        %1791 = vrot.lane.b32.xlu0 %v1750, 1
        %v1792 = vpop.permute.xlu0 %1791
        %v1793 = vmul.f32 %v540, %v1788
        %v1794 = vmul.f32 %v541, %v1790
        %v1795 = vmul.f32 %v542, %v1792
        %1796 = vrot.lane.b32.xlu0 %v1745, 127
        %v1797 = vpop.permute.xlu0 %1796
        %1798 = vrot.lane.b32.xlu0 %v1746, 127
        %v1799 = vpop.permute.xlu0 %1798
        %1800 = vrot.lane.b32.xlu0 %v1747, 127
        %v1801 = vpop.permute.xlu0 %1800
        %v1802 = vmul.f32 %v544, %v1797
        %v1803 = vmul.f32 %v545, %v1799
        %v1804 = vmul.f32 %v546, %v1801
        %v1805 = vmul.f32 %v548, %v1745
        %v1806 = vmul.f32 %v549, %v1746
        %v1807 = vmul.f32 %v550, %v1747
        %1808 = vrot.lane.b32.xlu0 %v1745, 1
        %v1809 = vpop.permute.xlu0 %1808
        %1810 = vrot.lane.b32.xlu0 %v1746, 1
        %v1811 = vpop.permute.xlu0 %1810
        %1812 = vrot.lane.b32.xlu0 %v1747, 1
        %v1813 = vpop.permute.xlu0 %1812
        %v1814 = vmul.f32 %v552, %v1809
        %v1815 = vmul.f32 %v553, %v1811
        %v1816 = vmul.f32 %v554, %v1813
        %v1817 = vadd.f32 %v1760, %v1763
        %v1818 = vadd.f32 %v1761, %v1764
        %v1819 = vadd.f32 %v1762, %v1765
        %v1820 = vadd.f32 %v1772, %v1781
        %v1821 = vadd.f32 %v1773, %v1782
        %v1822 = vadd.f32 %v1774, %v1783
        %v1823 = vadd.f32 %v1784, %v1793
        %v1824 = vadd.f32 %v1785, %v1794
        %v1825 = vadd.f32 %v1786, %v1795
        %v1826 = vadd.f32 %v1802, %v1805
        %v1827 = vadd.f32 %v1803, %v1806
        %v1828 = vadd.f32 %v1804, %v1807
        %v1829 = vadd.f32 %v1817, %v1820
        %v1830 = vadd.f32 %v1818, %v1821
        %v1831 = vadd.f32 %v1819, %v1822
        %v1832 = vadd.f32 %v1823, %v1826
        %v1833 = vadd.f32 %v1824, %v1827
        %v1834 = vadd.f32 %v1825, %v1828
        %v1835 = vadd.f32 %v1829, %v1832
        %v1836 = vadd.f32 %v1830, %v1833
        %v1837 = vadd.f32 %v1831, %v1834
        %v1838 = vadd.f32 %v1835, %v1814
        %v1839 = vadd.f32 %v1836, %v1815
        %v1840 = vadd.f32 %v1837, %v1816
        %v1841 = vstv %s340
        %v1842 = vmul.f32 %v1841, %v1838
        %v1843 = vmul.f32 %v1841, %v1839
        %v1844 = vmul.f32 %v1841, %v1840
        %v1845 = vadd.f32 %v1739, %v1842
        %v1846 = vadd.f32 %v1740, %v1843
        %v1847 = vadd.f32 %v1741, %v1844
        %v1848 = vmul.f32 %v691, %v1845
        %v1849 = vmul.f32 %v692, %v1846
        %v1850 = vmul.f32 %v693, %v1847
        %v1851 = vmul.f32 %v1086, %v1848
        %v1852 = vmul.f32 %v1087, %v1849
        %v1853 = vmul.f32 %v1088, %v1850
        %v1854 = vadd.f32 %v1851, %v1852
        %v1855 = vsel %vm982, %v1853, 0.0
        %v1856 = vadd.f32 %v1854, %v1855
        %v1857 = vrot.slane %v1856, 4
        %v1858 = vadd.f32 %v1856, %v1857
        %v1859 = vrot.slane %v1858, 2
        %v1860 = vadd.f32 %v1858, %v1859
        %v1861 = vrot.slane %v1860, 1
        %v1862 = vadd.f32 %v1860, %v1861
        %1863 = vmatprep.subr.mxu0 0.0
        %1864 = vmatpush1.msra.mxu0 %v344
        %1865 = vmatprep.subr.mxu0 0.0
        %1866 = vmatpush1.msra.mxu0 %v345
        %1867 = vmatprep.subr.mxu0 0.0
        %1868 = vmatpush1.msra.mxu0 %v346
        %1869 = vmatprep.subr.mxu0 0.0
        %1870 = vmatpush1.msra.mxu0 %v347
        %1871 = vmatprep.subr.mxu0 0.0
        %1872 = vmatpush1.msra.mxu0 %v348
        %1873 = vmatprep.subr.mxu0 0.0
        %1874 = vmatpush1.msra.mxu0 %v349
        %1875 = vmatprep.subr.mxu0 0.0
        %1876 = vmatpush1.msra.mxu0 %v350
        %1877 = vmatprep.subr.mxu0 0.0
        %1878 = vmatpush1.msra.mxu0 %v351
        %1879 = vmatprep.subr.mxu0 0.0
        %1880 = vmatpush1.msra.mxu0 %v352
        %1881 = vmatprep.subr.mxu0 0.0
        %1882 = vmatpush1.msra.mxu0 %v353
        %1883 = vmatprep.subr.mxu0 0.0
        %1884 = vmatpush1.msra.mxu0 %v354
        %1885 = vmatprep.subr.mxu0 0.0
        %1886 = vmatpush1.msra.mxu0 %v355
        %1887 = vmatprep.subr.mxu0 0.0
        %1888 = vmatpush1.msra.mxu0 %v356
        %1889 = vmatprep.subr.mxu0 0.0
        %1890 = vmatpush1.msra.mxu0 %v357
        %1891 = vmatprep.subr.mxu0 0.0
        %1892 = vmatpush1.msra.mxu0 %v358
        %1893 = vmatprep.subr.mxu0 0.0
        %1894 = vmatpush1.msra.mxu0 %v359
        %1895 = vmatprep.subr.mxu0 0.0
        %1896 = vmatpush1.msra.mxu0 0.0
        %1897 = vmatprep.subr.mxu0 0.0
        %1898 = vmatpush1.msra.mxu0 0.0
        %1899 = vmatprep.subr.mxu0 0.0
        %1900 = vmatpush1.msra.mxu0 0.0
        %1901 = vmatprep.subr.mxu0 0.0
        %1902 = vmatpush1.msra.mxu0 0.0
        %1903 = vmatprep.subr.mxu0 0.0
        %1904 = vmatpush1.msra.mxu0 0.0
        %1905 = vmatprep.subr.mxu0 0.0
        %1906 = vmatpush1.msra.mxu0 0.0
        %1907 = vmatprep.subr.mxu0 0.0
        %1908 = vmatpush1.msra.mxu0 0.0
        %1909 = vmatprep.subr.mxu0 0.0
        %1910 = vmatpush1.msra.mxu0 0.0
        %1911 = vmatprep.subr.mxu0 0.0
        %1912 = vmatpush1.msra.mxu0 0.0
        %1913 = vmatprep.subr.mxu0 0.0
        %1914 = vmatpush1.msra.mxu0 0.0
        %1915 = vmatprep.subr.mxu0 0.0
        %1916 = vmatpush1.msra.mxu0 0.0
        %1917 = vmatprep.subr.mxu0 0.0
        %1918 = vmatpush1.msra.mxu0 0.0
        %1919 = vmatprep.subr.mxu0 0.0
        %1920 = vmatpush1.msra.mxu0 0.0
        %1921 = vmatprep.subr.mxu0 0.0
        %1922 = vmatpush1.msra.mxu0 0.0
        %1923 = vmatprep.subr.mxu0 0.0
        %1924 = vmatpush1.msra.mxu0 0.0
        %1925 = vmatprep.subr.mxu0 0.0
        %1926 = vmatpush1.msra.mxu0 0.0
        %1927 = vmatprep.mubr.f32.mxu0 0.0
        %1928 = vmatmul.mubr.f32.gmra.mrb[0].mxu0 %v1862
        %v1929 = vpop.f32.mrb[0].mxu0
        %v1930 = vadd.f32 0.0, %v1929
        %v1931 = vpop.f32.mrb[0].mxu0
        %1932 = vdwg.mxu0
        %vm1933 = vcmp.eq.f32.partialorder %v1930, 0.0
        %v1934 = vsel %vm1933, 1, 0
        %v1935 = vcvt.s32.f32 %v1934
        %v1936 = vmax.f32 %v1090, %v1935
        %v1937 = vsel %vm1933, 1.0, %v1930
        %vm1938 = vcmp.gt.f32.partialorder %v1936, 0.5
        %v1939 = vrcp.pop %v1937
        %v1940 = vmul.f32 %v1089, %v1939
        %v1941 = vsel %vm1938, 0.0, %v1940
        %v1942 = vlaneseq
        %v1943 = vshrl.u32 %v1942, 7
        %v1944 = vsub.s32 0, %v1943
        %v1945 = vrot.slane %v1941, %v1944
        %v1946 = vmul.f32 %v1945, %v1086
        %v1947 = vmul.f32 %v1945, %v1087
        %v1948 = vmul.f32 %v1945, %v1088
        %v1949 = vadd.f32 %v1080, %v1946
        %v1950 = vadd.f32 %v1081, %v1947
        %v1951 = vadd.f32 %v1082, %v1948
        %s1952 = sadd.s32 %s1078, 1
        %p1953 = scmp.eq.s32.totalorder %s1952, 50
        %s1954 = scalar_select %p1953, 0, %s1952
        // Predicated region
        $region56: #{wiener_kpn_sa_forward.1} parent=52 // pred_check
          %p1955 = pneg %p1953
        $region57: #{wiener_kpn_sa_forward.1} parent=52 // pred_check_branch
          %1957 = sbr.rel (%p1955) target = $region59
        $region58: #{wiener_kpn_sa_forward.1} parent=52 // pred_region
          %1958 = vst [vmem:[#allocation2 + $0x8] sm:$0xff] %v1949
          %1959 = vst [vmem:[#allocation2 + $0x10] sm:$0xff] %v1950
          %1960 = vst [vmem:[#allocation2 + $0x18] sm:$0xf] %v1951
          %v1961 = vld [vmem:[#allocation2 + $0x7] sm:$0xff]
          %v1962 = vld [vmem:[#allocation2 + $0xf] sm:$0xff]
          %v1963 = vld [vmem:[#allocation2 + $0x17] sm:$0xf]
          %v1964 = vld [vmem:[#allocation2 + $0x8] sm:$0xff]
          %v1965 = vld [vmem:[#allocation2 + $0x10] sm:$0xff]
          %v1966 = vld [vmem:[#allocation2 + $0x18] sm:$0xf]
          %v1967 = vld [vmem:[#allocation2 + $0x9] sm:$0xff]
          %v1968 = vld [vmem:[#allocation2 + $0x11] sm:$0xff]
          %v1969 = vld [vmem:[#allocation2 + $0x19] sm:$0xf]
          %1970 = vrot.lane.b32.xlu0 %v1961, 1
          %v1971 = vpop.permute.xlu0 %1970
          %1972 = vrot.lane.b32.xlu0 %v1962, 1
          %v1973 = vpop.permute.xlu0 %1972
          %1974 = vrot.lane.b32.xlu0 %v1963, 1
          %v1975 = vpop.permute.xlu0 %1974
          %v1976 = vmul.f32 %v485, %v1971
          %v1977 = vmul.f32 %v486, %v1973
          %v1978 = vmul.f32 %v487, %v1975
          %v1979 = vmul.f32 %v489, %v1961
          %v1980 = vmul.f32 %v490, %v1962
          %v1981 = vmul.f32 %v491, %v1963
          %1982 = vrot.lane.b32.xlu0 %v1961, 127
          %v1983 = vpop.permute.xlu0 %1982
          %1984 = vrot.lane.b32.xlu0 %v1962, 127
          %v1985 = vpop.permute.xlu0 %1984
          %1986 = vrot.lane.b32.xlu0 %v1963, 127
          %v1987 = vpop.permute.xlu0 %1986
          %v1988 = vmul.f32 %v493, %v1983
          %v1989 = vmul.f32 %v494, %v1985
          %v1990 = vmul.f32 %v495, %v1987
          %1991 = vrot.lane.b32.xlu0 %v1964, 1
          %v1992 = vpop.permute.xlu0 %1991
          %1993 = vrot.lane.b32.xlu0 %v1965, 1
          %v1994 = vpop.permute.xlu0 %1993
          %1995 = vrot.lane.b32.xlu0 %v1966, 1
          %v1996 = vpop.permute.xlu0 %1995
          %v1997 = vmul.f32 %v497, %v1992
          %v1998 = vmul.f32 %v498, %v1994
          %v1999 = vmul.f32 %v499, %v1996
          %v2000 = vmul.f32 %v501, %v1964
          %v2001 = vmul.f32 %v502, %v1965
          %v2002 = vmul.f32 %v503, %v1966
          %2003 = vrot.lane.b32.xlu0 %v1964, 127
          %v2004 = vpop.permute.xlu0 %2003
          %2005 = vrot.lane.b32.xlu0 %v1965, 127
          %v2006 = vpop.permute.xlu0 %2005
          %2007 = vrot.lane.b32.xlu0 %v1966, 127
          %v2008 = vpop.permute.xlu0 %2007
          %v2009 = vmul.f32 %v505, %v2004
          %v2010 = vmul.f32 %v506, %v2006
          %v2011 = vmul.f32 %v507, %v2008
          %2012 = vrot.lane.b32.xlu0 %v1967, 1
          %v2013 = vpop.permute.xlu0 %2012
          %2014 = vrot.lane.b32.xlu0 %v1968, 1
          %v2015 = vpop.permute.xlu0 %2014
          %2016 = vrot.lane.b32.xlu0 %v1969, 1
          %v2017 = vpop.permute.xlu0 %2016
          %v2018 = vmul.f32 %v509, %v2013
          %v2019 = vmul.f32 %v510, %v2015
          %v2020 = vmul.f32 %v511, %v2017
          %v2021 = vmul.f32 %v513, %v1967
          %v2022 = vmul.f32 %v514, %v1968
          %v2023 = vmul.f32 %v515, %v1969
          %2024 = vrot.lane.b32.xlu0 %v1967, 127
          %v2025 = vpop.permute.xlu0 %2024
          %2026 = vrot.lane.b32.xlu0 %v1968, 127
          %v2027 = vpop.permute.xlu0 %2026
          %2028 = vrot.lane.b32.xlu0 %v1969, 127
          %v2029 = vpop.permute.xlu0 %2028
          %v2030 = vmul.f32 %v517, %v2025
          %v2031 = vmul.f32 %v518, %v2027
          %v2032 = vmul.f32 %v519, %v2029
          %v2033 = vadd.f32 %v1976, %v1979
          %v2034 = vadd.f32 %v1977, %v1980
          %v2035 = vadd.f32 %v1978, %v1981
          %v2036 = vadd.f32 %v1988, %v1997
          %v2037 = vadd.f32 %v1989, %v1998
          %v2038 = vadd.f32 %v1990, %v1999
          %v2039 = vadd.f32 %v2000, %v2009
          %v2040 = vadd.f32 %v2001, %v2010
          %v2041 = vadd.f32 %v2002, %v2011
          %v2042 = vadd.f32 %v2018, %v2021
          %v2043 = vadd.f32 %v2019, %v2022
          %v2044 = vadd.f32 %v2020, %v2023
          %v2045 = vadd.f32 %v2033, %v2036
          %v2046 = vadd.f32 %v2034, %v2037
          %v2047 = vadd.f32 %v2035, %v2038
          %v2048 = vadd.f32 %v2039, %v2042
          %v2049 = vadd.f32 %v2040, %v2043
          %v2050 = vadd.f32 %v2041, %v2044
          %v2051 = vadd.f32 %v2045, %v2048
          %v2052 = vadd.f32 %v2046, %v2049
          %v2053 = vadd.f32 %v2047, %v2050
          %v2054 = vadd.f32 %v2051, %v2030
          %v2055 = vadd.f32 %v2052, %v2031
          %v2056 = vadd.f32 %v2053, %v2032
          %v2057 = vmul.f32 %v610, %v1967
          %v2058 = vmul.f32 %v611, %v1968
          %v2059 = vmul.f32 %v612, %v1969
          %v2060 = vmul.f32 %v628, %v1961
          %v2061 = vmul.f32 %v629, %v1962
          %v2062 = vmul.f32 %v630, %v1963
          %v2063 = vld [vmem:[#allocation2 + $0xb] sm:$0xff]
          %v2064 = vld [vmem:[#allocation2 + $0x13] sm:$0xff]
          %v2065 = vld [vmem:[#allocation2 + $0x1b] sm:$0xf]
          %v2066 = vmul.f32 %v619, %v2063
          %v2067 = vmul.f32 %v620, %v2064
          %v2068 = vmul.f32 %v621, %v2065
          %v2069 = vld [vmem:[#allocation2 + $0x5] sm:$0xff]
          %v2070 = vld [vmem:[#allocation2 + $0xd] sm:$0xff]
          %v2071 = vld [vmem:[#allocation2 + $0x15] sm:$0xf]
          %v2072 = vmul.f32 %v637, %v2069
          %v2073 = vmul.f32 %v638, %v2070
          %v2074 = vmul.f32 %v639, %v2071
          %v2075 = vadd.f32 %v1949, %v2057
          %v2076 = vadd.f32 %v1950, %v2058
          %v2077 = vadd.f32 %v1951, %v2059
          %v2078 = vadd.f32 %v2060, %v2066
          %v2079 = vadd.f32 %v2061, %v2067
          %v2080 = vadd.f32 %v2062, %v2068
          %v2081 = vadd.f32 %v2075, %v2078
          %v2082 = vadd.f32 %v2076, %v2079
          %v2083 = vadd.f32 %v2077, %v2080
          %v2084 = vadd.f32 %v2081, %v2072
          %v2085 = vadd.f32 %v2082, %v2073
          %v2086 = vadd.f32 %v2083, %v2074
          %2087 = vrot.lane.b32.xlu0 %v2084, 127
          %v2088 = vpop.permute.xlu0 %2087
          %2089 = vrot.lane.b32.xlu0 %v2085, 127
          %v2090 = vpop.permute.xlu0 %2089
          %2091 = vrot.lane.b32.xlu0 %v2086, 127
          %v2092 = vpop.permute.xlu0 %2091
          %v2093 = vmul.f32 %v559, %v2088
          %v2094 = vmul.f32 %v559, %v2090
          %v2095 = vmul.f32 %v559, %v2092
          %2096 = vrot.lane.b32.xlu0 %v2084, 1
          %v2097 = vpop.permute.xlu0 %2096
          %2098 = vrot.lane.b32.xlu0 %v2085, 1
          %v2099 = vpop.permute.xlu0 %2098
          %2100 = vrot.lane.b32.xlu0 %v2086, 1
          %v2101 = vpop.permute.xlu0 %2100
          %v2102 = vmul.f32 %v589, %v2097
          %v2103 = vmul.f32 %v589, %v2099
          %v2104 = vmul.f32 %v589, %v2101
          %2105 = vrot.lane.b32.xlu0 %v2084, 125
          %v2106 = vpop.permute.xlu0 %2105
          %2107 = vrot.lane.b32.xlu0 %v2085, 125
          %v2108 = vpop.permute.xlu0 %2107
          %2109 = vrot.lane.b32.xlu0 %v2086, 125
          %v2110 = vpop.permute.xlu0 %2109
          %v2111 = vmul.f32 %v564, %v2106
          %v2112 = vmul.f32 %v564, %v2108
          %v2113 = vmul.f32 %v564, %v2110
          %2114 = vrot.lane.b32.xlu0 %v2084, 3
          %v2115 = vpop.permute.xlu0 %2114
          %2116 = vrot.lane.b32.xlu0 %v2085, 3
          %v2117 = vpop.permute.xlu0 %2116
          %2118 = vrot.lane.b32.xlu0 %v2086, 3
          %v2119 = vpop.permute.xlu0 %2118
          %v2120 = vmul.f32 %v594, %v2115
          %v2121 = vmul.f32 %v594, %v2117
          %v2122 = vmul.f32 %v594, %v2119
          %v2123 = vadd.f32 %v2084, %v2093
          %v2124 = vadd.f32 %v2085, %v2094
          %v2125 = vadd.f32 %v2086, %v2095
          %v2126 = vadd.f32 %v2102, %v2111
          %v2127 = vadd.f32 %v2103, %v2112
          %v2128 = vadd.f32 %v2104, %v2113
          %v2129 = vadd.f32 %v2123, %v2126
          %v2130 = vadd.f32 %v2124, %v2127
          %v2131 = vadd.f32 %v2125, %v2128
          %v2132 = vadd.f32 %v2129, %v2120
          %v2133 = vadd.f32 %v2130, %v2121
          %v2134 = vadd.f32 %v2131, %v2122
          %2135 = vst [vmem:[#allocation2 + $0x8] sm:$0xff] %v2132
          %2136 = vst [vmem:[#allocation2 + $0x10] sm:$0xff] %v2133
          %2137 = vst [vmem:[#allocation2 + $0x18] sm:$0xf] %v2134
          %v2138 = vld [vmem:[#allocation2 + $0x6] sm:$0xff]
          %v2139 = vld [vmem:[#allocation2 + $0xe] sm:$0xff]
          %v2140 = vld [vmem:[#allocation2 + $0x16] sm:$0xf]
          %v2141 = vld [vmem:[#allocation2 + $0x7] sm:$0xff]
          %v2142 = vld [vmem:[#allocation2 + $0xf] sm:$0xff]
          %v2143 = vld [vmem:[#allocation2 + $0x17] sm:$0xf]
          %v2144 = vld [vmem:[#allocation2 + $0x8] sm:$0xff]
          %v2145 = vld [vmem:[#allocation2 + $0x10] sm:$0xff]
          %v2146 = vld [vmem:[#allocation2 + $0x18] sm:$0xf]
          %v2147 = vld [vmem:[#allocation2 + $0x9] sm:$0xff]
          %v2148 = vld [vmem:[#allocation2 + $0x11] sm:$0xff]
          %v2149 = vld [vmem:[#allocation2 + $0x19] sm:$0xf]
          %v2150 = vld [vmem:[#allocation2 + $0xa] sm:$0xff]
          %v2151 = vld [vmem:[#allocation2 + $0x12] sm:$0xff]
          %v2152 = vld [vmem:[#allocation2 + $0x1a] sm:$0xf]
          %v2153 = vmul.f32 %v484, %v2138
          %v2154 = vmul.f32 %v484, %v2139
          %v2155 = vmul.f32 %v484, %v2140
          %v2156 = vmul.f32 %v459, %v2141
          %v2157 = vmul.f32 %v459, %v2142
          %v2158 = vmul.f32 %v459, %v2143
          %v2159 = vmul.f32 %v434, %v2144
          %v2160 = vmul.f32 %v434, %v2145
          %v2161 = vmul.f32 %v434, %v2146
          %v2162 = vmul.f32 %v409, %v2147
          %v2163 = vmul.f32 %v409, %v2148
          %v2164 = vmul.f32 %v409, %v2149
          %v2165 = vmul.f32 %v384, %v2150
          %v2166 = vmul.f32 %v384, %v2151
          %v2167 = vmul.f32 %v384, %v2152
          %v2168 = vadd.f32 %v2153, %v2156
          %v2169 = vadd.f32 %v2154, %v2157
          %v2170 = vadd.f32 %v2155, %v2158
          %v2171 = vadd.f32 %v2159, %v2162
          %v2172 = vadd.f32 %v2160, %v2163
          %v2173 = vadd.f32 %v2161, %v2164
          %v2174 = vadd.f32 %v2168, %v2171
          %v2175 = vadd.f32 %v2169, %v2172
          %v2176 = vadd.f32 %v2170, %v2173
          %v2177 = vadd.f32 %v2174, %v2165
          %v2178 = vadd.f32 %v2175, %v2166
          %v2179 = vadd.f32 %v2176, %v2167
          %2180 = vrot.lane.b32.xlu0 %v2177, 2
          %v2181 = vpop.permute.xlu0 %2180
          %2182 = vrot.lane.b32.xlu0 %v2178, 2
          %v2183 = vpop.permute.xlu0 %2182
          %2184 = vrot.lane.b32.xlu0 %v2179, 2
          %v2185 = vpop.permute.xlu0 %2184
          %v2186 = vmul.f32 %v479, %v2138
          %v2187 = vmul.f32 %v479, %v2139
          %v2188 = vmul.f32 %v479, %v2140
          %v2189 = vmul.f32 %v454, %v2141
          %v2190 = vmul.f32 %v454, %v2142
          %v2191 = vmul.f32 %v454, %v2143
          %v2192 = vmul.f32 %v429, %v2144
          %v2193 = vmul.f32 %v429, %v2145
          %v2194 = vmul.f32 %v429, %v2146
          %v2195 = vmul.f32 %v404, %v2147
          %v2196 = vmul.f32 %v404, %v2148
          %v2197 = vmul.f32 %v404, %v2149
          %v2198 = vmul.f32 %v379, %v2150
          %v2199 = vmul.f32 %v379, %v2151
          %v2200 = vmul.f32 %v379, %v2152
          %v2201 = vadd.f32 %v2186, %v2189
          %v2202 = vadd.f32 %v2187, %v2190
          %v2203 = vadd.f32 %v2188, %v2191
          %v2204 = vadd.f32 %v2192, %v2195
          %v2205 = vadd.f32 %v2193, %v2196
          %v2206 = vadd.f32 %v2194, %v2197
          %v2207 = vadd.f32 %v2201, %v2204
          %v2208 = vadd.f32 %v2202, %v2205
          %v2209 = vadd.f32 %v2203, %v2206
          %v2210 = vadd.f32 %v2207, %v2198
          %v2211 = vadd.f32 %v2208, %v2199
          %v2212 = vadd.f32 %v2209, %v2200
          %2213 = vrot.lane.b32.xlu0 %v2210, 1
          %v2214 = vpop.permute.xlu0 %2213
          %2215 = vrot.lane.b32.xlu0 %v2211, 1
          %v2216 = vpop.permute.xlu0 %2215
          %2217 = vrot.lane.b32.xlu0 %v2212, 1
          %v2218 = vpop.permute.xlu0 %2217
          %v2219 = vmul.f32 %v474, %v2138
          %v2220 = vmul.f32 %v474, %v2139
          %v2221 = vmul.f32 %v474, %v2140
          %v2222 = vmul.f32 %v449, %v2141
          %v2223 = vmul.f32 %v449, %v2142
          %v2224 = vmul.f32 %v449, %v2143
          %v2225 = vmul.f32 %v424, %v2144
          %v2226 = vmul.f32 %v424, %v2145
          %v2227 = vmul.f32 %v424, %v2146
          %v2228 = vmul.f32 %v399, %v2147
          %v2229 = vmul.f32 %v399, %v2148
          %v2230 = vmul.f32 %v399, %v2149
          %v2231 = vmul.f32 %v374, %v2150
          %v2232 = vmul.f32 %v374, %v2151
          %v2233 = vmul.f32 %v374, %v2152
          %v2234 = vadd.f32 %v2219, %v2222
          %v2235 = vadd.f32 %v2220, %v2223
          %v2236 = vadd.f32 %v2221, %v2224
          %v2237 = vadd.f32 %v2225, %v2228
          %v2238 = vadd.f32 %v2226, %v2229
          %v2239 = vadd.f32 %v2227, %v2230
          %v2240 = vadd.f32 %v2234, %v2237
          %v2241 = vadd.f32 %v2235, %v2238
          %v2242 = vadd.f32 %v2236, %v2239
          %v2243 = vadd.f32 %v2240, %v2231
          %v2244 = vadd.f32 %v2241, %v2232
          %v2245 = vadd.f32 %v2242, %v2233
          %v2246 = vmul.f32 %v469, %v2138
          %v2247 = vmul.f32 %v469, %v2139
          %v2248 = vmul.f32 %v469, %v2140
          %v2249 = vmul.f32 %v444, %v2141
          %v2250 = vmul.f32 %v444, %v2142
          %v2251 = vmul.f32 %v444, %v2143
          %v2252 = vmul.f32 %v419, %v2144
          %v2253 = vmul.f32 %v419, %v2145
          %v2254 = vmul.f32 %v419, %v2146
          %v2255 = vmul.f32 %v394, %v2147
          %v2256 = vmul.f32 %v394, %v2148
          %v2257 = vmul.f32 %v394, %v2149
          %v2258 = vmul.f32 %v369, %v2150
          %v2259 = vmul.f32 %v369, %v2151
          %v2260 = vmul.f32 %v369, %v2152
          %v2261 = vadd.f32 %v2246, %v2249
          %v2262 = vadd.f32 %v2247, %v2250
          %v2263 = vadd.f32 %v2248, %v2251
          %v2264 = vadd.f32 %v2252, %v2255
          %v2265 = vadd.f32 %v2253, %v2256
          %v2266 = vadd.f32 %v2254, %v2257
          %v2267 = vadd.f32 %v2261, %v2264
          %v2268 = vadd.f32 %v2262, %v2265
          %v2269 = vadd.f32 %v2263, %v2266
          %v2270 = vadd.f32 %v2267, %v2258
          %v2271 = vadd.f32 %v2268, %v2259
          %v2272 = vadd.f32 %v2269, %v2260
          %2273 = vrot.lane.b32.xlu0 %v2270, 127
          %v2274 = vpop.permute.xlu0 %2273
          %2275 = vrot.lane.b32.xlu0 %v2271, 127
          %v2276 = vpop.permute.xlu0 %2275
          %2277 = vrot.lane.b32.xlu0 %v2272, 127
          %v2278 = vpop.permute.xlu0 %2277
          %v2279 = vmul.f32 %v464, %v2138
          %v2280 = vmul.f32 %v464, %v2139
          %v2281 = vmul.f32 %v464, %v2140
          %v2282 = vmul.f32 %v439, %v2141
          %v2283 = vmul.f32 %v439, %v2142
          %v2284 = vmul.f32 %v439, %v2143
          %v2285 = vmul.f32 %v414, %v2144
          %v2286 = vmul.f32 %v414, %v2145
          %v2287 = vmul.f32 %v414, %v2146
          %v2288 = vmul.f32 %v389, %v2147
          %v2289 = vmul.f32 %v389, %v2148
          %v2290 = vmul.f32 %v389, %v2149
          %v2291 = vmul.f32 %v364, %v2150
          %v2292 = vmul.f32 %v364, %v2151
          %v2293 = vmul.f32 %v364, %v2152
          %v2294 = vadd.f32 %v2279, %v2282
          %v2295 = vadd.f32 %v2280, %v2283
          %v2296 = vadd.f32 %v2281, %v2284
          %v2297 = vadd.f32 %v2285, %v2288
          %v2298 = vadd.f32 %v2286, %v2289
          %v2299 = vadd.f32 %v2287, %v2290
          %v2300 = vadd.f32 %v2294, %v2297
          %v2301 = vadd.f32 %v2295, %v2298
          %v2302 = vadd.f32 %v2296, %v2299
          %v2303 = vadd.f32 %v2300, %v2291
          %v2304 = vadd.f32 %v2301, %v2292
          %v2305 = vadd.f32 %v2302, %v2293
          %2306 = vrot.lane.b32.xlu0 %v2303, 126
          %v2307 = vpop.permute.xlu0 %2306
          %2308 = vrot.lane.b32.xlu0 %v2304, 126
          %v2309 = vpop.permute.xlu0 %2308
          %2310 = vrot.lane.b32.xlu0 %v2305, 126
          %v2311 = vpop.permute.xlu0 %2310
          %v2312 = vadd.f32 %v2181, %v2214
          %v2313 = vadd.f32 %v2183, %v2216
          %v2314 = vadd.f32 %v2185, %v2218
          %v2315 = vadd.f32 %v2243, %v2274
          %v2316 = vadd.f32 %v2244, %v2276
          %v2317 = vadd.f32 %v2245, %v2278
          %v2318 = vadd.f32 %v2312, %v2315
          %v2319 = vadd.f32 %v2313, %v2316
          %v2320 = vadd.f32 %v2314, %v2317
          %v2321 = vadd.f32 %v2318, %v2307
          %v2322 = vadd.f32 %v2319, %v2309
          %v2323 = vadd.f32 %v2320, %v2311
          %v2324 = vmul.f32 %v691, %v2321
          %v2325 = vmul.f32 %v692, %v2322
          %v2326 = vmul.f32 %v693, %v2323
          %2327 = vst [vmem:[#allocation2 + $0x8] sm:$0xff] %v2324
          %2328 = vst [vmem:[#allocation2 + $0x10] sm:$0xff] %v2325
          %2329 = vst [vmem:[#allocation2 + $0x18] sm:$0xf] %v2326
          %v2330 = vld [vmem:[#allocation2 + $0x6] sm:$0xff]
          %v2331 = vld [vmem:[#allocation2 + $0xe] sm:$0xff]
          %v2332 = vld [vmem:[#allocation2 + $0x16] sm:$0xf]
          %v2333 = vld [vmem:[#allocation2 + $0x7] sm:$0xff]
          %v2334 = vld [vmem:[#allocation2 + $0xf] sm:$0xff]
          %v2335 = vld [vmem:[#allocation2 + $0x17] sm:$0xf]
          %v2336 = vld [vmem:[#allocation2 + $0x8] sm:$0xff]
          %v2337 = vld [vmem:[#allocation2 + $0x10] sm:$0xff]
          %v2338 = vld [vmem:[#allocation2 + $0x18] sm:$0xf]
          %v2339 = vld [vmem:[#allocation2 + $0x9] sm:$0xff]
          %v2340 = vld [vmem:[#allocation2 + $0x11] sm:$0xff]
          %v2341 = vld [vmem:[#allocation2 + $0x19] sm:$0xf]
          %v2342 = vld [vmem:[#allocation2 + $0xa] sm:$0xff]
          %v2343 = vld [vmem:[#allocation2 + $0x12] sm:$0xff]
          %v2344 = vld [vmem:[#allocation2 + $0x1a] sm:$0xf]
          %v2345 = vmul.f32 %v364, %v2330
          %v2346 = vmul.f32 %v364, %v2331
          %v2347 = vmul.f32 %v364, %v2332
          %v2348 = vmul.f32 %v389, %v2333
          %v2349 = vmul.f32 %v389, %v2334
          %v2350 = vmul.f32 %v389, %v2335
          %v2351 = vmul.f32 %v414, %v2336
          %v2352 = vmul.f32 %v414, %v2337
          %v2353 = vmul.f32 %v414, %v2338
          %v2354 = vmul.f32 %v439, %v2339
          %v2355 = vmul.f32 %v439, %v2340
          %v2356 = vmul.f32 %v439, %v2341
          %v2357 = vmul.f32 %v464, %v2342
          %v2358 = vmul.f32 %v464, %v2343
          %v2359 = vmul.f32 %v464, %v2344
          %v2360 = vadd.f32 %v2345, %v2348
          %v2361 = vadd.f32 %v2346, %v2349
          %v2362 = vadd.f32 %v2347, %v2350
          %v2363 = vadd.f32 %v2351, %v2354
          %v2364 = vadd.f32 %v2352, %v2355
          %v2365 = vadd.f32 %v2353, %v2356
          %v2366 = vadd.f32 %v2360, %v2363
          %v2367 = vadd.f32 %v2361, %v2364
          %v2368 = vadd.f32 %v2362, %v2365
          %v2369 = vadd.f32 %v2366, %v2357
          %v2370 = vadd.f32 %v2367, %v2358
          %v2371 = vadd.f32 %v2368, %v2359
          %2372 = vrot.lane.b32.xlu0 %v2369, 2
          %v2373 = vpop.permute.xlu0 %2372
          %2374 = vrot.lane.b32.xlu0 %v2370, 2
          %v2375 = vpop.permute.xlu0 %2374
          %2376 = vrot.lane.b32.xlu0 %v2371, 2
          %v2377 = vpop.permute.xlu0 %2376
          %v2378 = vmul.f32 %v369, %v2330
          %v2379 = vmul.f32 %v369, %v2331
          %v2380 = vmul.f32 %v369, %v2332
          %v2381 = vmul.f32 %v394, %v2333
          %v2382 = vmul.f32 %v394, %v2334
          %v2383 = vmul.f32 %v394, %v2335
          %v2384 = vmul.f32 %v419, %v2336
          %v2385 = vmul.f32 %v419, %v2337
          %v2386 = vmul.f32 %v419, %v2338
          %v2387 = vmul.f32 %v444, %v2339
          %v2388 = vmul.f32 %v444, %v2340
          %v2389 = vmul.f32 %v444, %v2341
          %v2390 = vmul.f32 %v469, %v2342
          %v2391 = vmul.f32 %v469, %v2343
          %v2392 = vmul.f32 %v469, %v2344
          %v2393 = vadd.f32 %v2378, %v2381
          %v2394 = vadd.f32 %v2379, %v2382
          %v2395 = vadd.f32 %v2380, %v2383
          %v2396 = vadd.f32 %v2384, %v2387
          %v2397 = vadd.f32 %v2385, %v2388
          %v2398 = vadd.f32 %v2386, %v2389
          %v2399 = vadd.f32 %v2393, %v2396
          %v2400 = vadd.f32 %v2394, %v2397
          %v2401 = vadd.f32 %v2395, %v2398
          %v2402 = vadd.f32 %v2399, %v2390
          %v2403 = vadd.f32 %v2400, %v2391
          %v2404 = vadd.f32 %v2401, %v2392
          %2405 = vrot.lane.b32.xlu0 %v2402, 1
          %v2406 = vpop.permute.xlu0 %2405
          %2407 = vrot.lane.b32.xlu0 %v2403, 1
          %v2408 = vpop.permute.xlu0 %2407
          %2409 = vrot.lane.b32.xlu0 %v2404, 1
          %v2410 = vpop.permute.xlu0 %2409
          %v2411 = vmul.f32 %v374, %v2330
          %v2412 = vmul.f32 %v374, %v2331
          %v2413 = vmul.f32 %v374, %v2332
          %v2414 = vmul.f32 %v399, %v2333
          %v2415 = vmul.f32 %v399, %v2334
          %v2416 = vmul.f32 %v399, %v2335
          %v2417 = vmul.f32 %v424, %v2336
          %v2418 = vmul.f32 %v424, %v2337
          %v2419 = vmul.f32 %v424, %v2338
          %v2420 = vmul.f32 %v449, %v2339
          %v2421 = vmul.f32 %v449, %v2340
          %v2422 = vmul.f32 %v449, %v2341
          %v2423 = vmul.f32 %v474, %v2342
          %v2424 = vmul.f32 %v474, %v2343
          %v2425 = vmul.f32 %v474, %v2344
          %v2426 = vadd.f32 %v2411, %v2414
          %v2427 = vadd.f32 %v2412, %v2415
          %v2428 = vadd.f32 %v2413, %v2416
          %v2429 = vadd.f32 %v2417, %v2420
          %v2430 = vadd.f32 %v2418, %v2421
          %v2431 = vadd.f32 %v2419, %v2422
          %v2432 = vadd.f32 %v2426, %v2429
          %v2433 = vadd.f32 %v2427, %v2430
          %v2434 = vadd.f32 %v2428, %v2431
          %v2435 = vadd.f32 %v2432, %v2423
          %v2436 = vadd.f32 %v2433, %v2424
          %v2437 = vadd.f32 %v2434, %v2425
          %v2438 = vmul.f32 %v379, %v2330
          %v2439 = vmul.f32 %v379, %v2331
          %v2440 = vmul.f32 %v379, %v2332
          %v2441 = vmul.f32 %v404, %v2333
          %v2442 = vmul.f32 %v404, %v2334
          %v2443 = vmul.f32 %v404, %v2335
          %v2444 = vmul.f32 %v429, %v2336
          %v2445 = vmul.f32 %v429, %v2337
          %v2446 = vmul.f32 %v429, %v2338
          %v2447 = vmul.f32 %v454, %v2339
          %v2448 = vmul.f32 %v454, %v2340
          %v2449 = vmul.f32 %v454, %v2341
          %v2450 = vmul.f32 %v479, %v2342
          %v2451 = vmul.f32 %v479, %v2343
          %v2452 = vmul.f32 %v479, %v2344
          %v2453 = vadd.f32 %v2438, %v2441
          %v2454 = vadd.f32 %v2439, %v2442
          %v2455 = vadd.f32 %v2440, %v2443
          %v2456 = vadd.f32 %v2444, %v2447
          %v2457 = vadd.f32 %v2445, %v2448
          %v2458 = vadd.f32 %v2446, %v2449
          %v2459 = vadd.f32 %v2453, %v2456
          %v2460 = vadd.f32 %v2454, %v2457
          %v2461 = vadd.f32 %v2455, %v2458
          %v2462 = vadd.f32 %v2459, %v2450
          %v2463 = vadd.f32 %v2460, %v2451
          %v2464 = vadd.f32 %v2461, %v2452
          %2465 = vrot.lane.b32.xlu0 %v2462, 127
          %v2466 = vpop.permute.xlu0 %2465
          %2467 = vrot.lane.b32.xlu0 %v2463, 127
          %v2468 = vpop.permute.xlu0 %2467
          %2469 = vrot.lane.b32.xlu0 %v2464, 127
          %v2470 = vpop.permute.xlu0 %2469
          %v2471 = vmul.f32 %v384, %v2330
          %v2472 = vmul.f32 %v384, %v2331
          %v2473 = vmul.f32 %v384, %v2332
          %v2474 = vmul.f32 %v409, %v2333
          %v2475 = vmul.f32 %v409, %v2334
          %v2476 = vmul.f32 %v409, %v2335
          %v2477 = vmul.f32 %v434, %v2336
          %v2478 = vmul.f32 %v434, %v2337
          %v2479 = vmul.f32 %v434, %v2338
          %v2480 = vmul.f32 %v459, %v2339
          %v2481 = vmul.f32 %v459, %v2340
          %v2482 = vmul.f32 %v459, %v2341
          %v2483 = vmul.f32 %v484, %v2342
          %v2484 = vmul.f32 %v484, %v2343
          %v2485 = vmul.f32 %v484, %v2344
          %v2486 = vadd.f32 %v2471, %v2474
          %v2487 = vadd.f32 %v2472, %v2475
          %v2488 = vadd.f32 %v2473, %v2476
          %v2489 = vadd.f32 %v2477, %v2480
          %v2490 = vadd.f32 %v2478, %v2481
          %v2491 = vadd.f32 %v2479, %v2482
          %v2492 = vadd.f32 %v2486, %v2489
          %v2493 = vadd.f32 %v2487, %v2490
          %v2494 = vadd.f32 %v2488, %v2491
          %v2495 = vadd.f32 %v2492, %v2483
          %v2496 = vadd.f32 %v2493, %v2484
          %v2497 = vadd.f32 %v2494, %v2485
          %2498 = vrot.lane.b32.xlu0 %v2495, 126
          %v2499 = vpop.permute.xlu0 %2498
          %2500 = vrot.lane.b32.xlu0 %v2496, 126
          %v2501 = vpop.permute.xlu0 %2500
          %2502 = vrot.lane.b32.xlu0 %v2497, 126
          %v2503 = vpop.permute.xlu0 %2502
          %v2504 = vadd.f32 %v2373, %v2406
          %v2505 = vadd.f32 %v2375, %v2408
          %v2506 = vadd.f32 %v2377, %v2410
          %v2507 = vadd.f32 %v2435, %v2466
          %v2508 = vadd.f32 %v2436, %v2468
          %v2509 = vadd.f32 %v2437, %v2470
          %v2510 = vadd.f32 %v2504, %v2507
          %v2511 = vadd.f32 %v2505, %v2508
          %v2512 = vadd.f32 %v2506, %v2509
          %v2513 = vadd.f32 %v2510, %v2499
          %v2514 = vadd.f32 %v2511, %v2501
          %v2515 = vadd.f32 %v2512, %v2503
          %2516 = vrot.lane.b32.xlu0 %v2513, 1
          %v2517 = vpop.permute.xlu0 %2516
          %2518 = vrot.lane.b32.xlu0 %v2514, 1
          %v2519 = vpop.permute.xlu0 %2518
          %2520 = vrot.lane.b32.xlu0 %v2515, 1
          %v2521 = vpop.permute.xlu0 %2520
          %v2522 = vmul.f32 %v569, %v2517
          %v2523 = vmul.f32 %v569, %v2519
          %v2524 = vmul.f32 %v569, %v2521
          %2525 = vrot.lane.b32.xlu0 %v2513, 127
          %v2526 = vpop.permute.xlu0 %2525
          %2527 = vrot.lane.b32.xlu0 %v2514, 127
          %v2528 = vpop.permute.xlu0 %2527
          %2529 = vrot.lane.b32.xlu0 %v2515, 127
          %v2530 = vpop.permute.xlu0 %2529
          %v2531 = vmul.f32 %v579, %v2526
          %v2532 = vmul.f32 %v579, %v2528
          %v2533 = vmul.f32 %v579, %v2530
          %2534 = vrot.lane.b32.xlu0 %v2513, 3
          %v2535 = vpop.permute.xlu0 %2534
          %2536 = vrot.lane.b32.xlu0 %v2514, 3
          %v2537 = vpop.permute.xlu0 %2536
          %2538 = vrot.lane.b32.xlu0 %v2515, 3
          %v2539 = vpop.permute.xlu0 %2538
          %v2540 = vmul.f32 %v574, %v2535
          %v2541 = vmul.f32 %v574, %v2537
          %v2542 = vmul.f32 %v574, %v2539
          %2543 = vrot.lane.b32.xlu0 %v2513, 125
          %v2544 = vpop.permute.xlu0 %2543
          %2545 = vrot.lane.b32.xlu0 %v2514, 125
          %v2546 = vpop.permute.xlu0 %2545
          %2547 = vrot.lane.b32.xlu0 %v2515, 125
          %v2548 = vpop.permute.xlu0 %2547
          %v2549 = vmul.f32 %v584, %v2544
          %v2550 = vmul.f32 %v584, %v2546
          %v2551 = vmul.f32 %v584, %v2548
          %v2552 = vadd.f32 %v2513, %v2522
          %v2553 = vadd.f32 %v2514, %v2523
          %v2554 = vadd.f32 %v2515, %v2524
          %v2555 = vadd.f32 %v2531, %v2540
          %v2556 = vadd.f32 %v2532, %v2541
          %v2557 = vadd.f32 %v2533, %v2542
          %v2558 = vadd.f32 %v2552, %v2555
          %v2559 = vadd.f32 %v2553, %v2556
          %v2560 = vadd.f32 %v2554, %v2557
          %v2561 = vadd.f32 %v2558, %v2549
          %v2562 = vadd.f32 %v2559, %v2550
          %v2563 = vadd.f32 %v2560, %v2551
          %2564 = vst [vmem:[#allocation2 + $0x8] sm:$0xff] %v2561
          %2565 = vst [vmem:[#allocation2 + $0x10] sm:$0xff] %v2562
          %2566 = vst [vmem:[#allocation2 + $0x18] sm:$0xf] %v2563
          %v2567 = vld [vmem:[#allocation2 + $0x7] sm:$0xff]
          %v2568 = vld [vmem:[#allocation2 + $0xf] sm:$0xff]
          %v2569 = vld [vmem:[#allocation2 + $0x17] sm:$0xf]
          %v2570 = vmul.f32 %v646, %v2567
          %v2571 = vmul.f32 %v647, %v2568
          %v2572 = vmul.f32 %v648, %v2569
          %v2573 = vld [vmem:[#allocation2 + $0x9] sm:$0xff]
          %v2574 = vld [vmem:[#allocation2 + $0x11] sm:$0xff]
          %v2575 = vld [vmem:[#allocation2 + $0x19] sm:$0xf]
          %v2576 = vmul.f32 %v664, %v2573
          %v2577 = vmul.f32 %v665, %v2574
          %v2578 = vmul.f32 %v666, %v2575
          %v2579 = vld [vmem:[#allocation2 + $0x5] sm:$0xff]
          %v2580 = vld [vmem:[#allocation2 + $0xd] sm:$0xff]
          %v2581 = vld [vmem:[#allocation2 + $0x15] sm:$0xf]
          %v2582 = vmul.f32 %v655, %v2579
          %v2583 = vmul.f32 %v656, %v2580
          %v2584 = vmul.f32 %v657, %v2581
          %v2585 = vld [vmem:[#allocation2 + $0xb] sm:$0xff]
          %v2586 = vld [vmem:[#allocation2 + $0x13] sm:$0xff]
          %v2587 = vld [vmem:[#allocation2 + $0x1b] sm:$0xf]
          %v2588 = vmul.f32 %v673, %v2585
          %v2589 = vmul.f32 %v674, %v2586
          %v2590 = vmul.f32 %v675, %v2587
          %v2591 = vadd.f32 %v2561, %v2570
          %v2592 = vadd.f32 %v2562, %v2571
          %v2593 = vadd.f32 %v2563, %v2572
          %v2594 = vadd.f32 %v2576, %v2582
          %v2595 = vadd.f32 %v2577, %v2583
          %v2596 = vadd.f32 %v2578, %v2584
          %v2597 = vadd.f32 %v2591, %v2594
          %v2598 = vadd.f32 %v2592, %v2595
          %v2599 = vadd.f32 %v2593, %v2596
          %v2600 = vadd.f32 %v2597, %v2588
          %v2601 = vadd.f32 %v2598, %v2589
          %v2602 = vadd.f32 %v2599, %v2590
          %2603 = vst [vmem:[#allocation2 + $0x8] sm:$0xff] %v2054
          %2604 = vst [vmem:[#allocation2 + $0x10] sm:$0xff] %v2055
          %2605 = vst [vmem:[#allocation2 + $0x18] sm:$0xf] %v2056
          %v2606 = vld [vmem:[#allocation2 + $0x7] sm:$0xff]
          %v2607 = vld [vmem:[#allocation2 + $0xf] sm:$0xff]
          %v2608 = vld [vmem:[#allocation2 + $0x17] sm:$0xf]
          %v2609 = vld [vmem:[#allocation2 + $0x8] sm:$0xff]
          %v2610 = vld [vmem:[#allocation2 + $0x10] sm:$0xff]
          %v2611 = vld [vmem:[#allocation2 + $0x18] sm:$0xf]
          %v2612 = vld [vmem:[#allocation2 + $0x9] sm:$0xff]
          %v2613 = vld [vmem:[#allocation2 + $0x11] sm:$0xff]
          %v2614 = vld [vmem:[#allocation2 + $0x19] sm:$0xf]
          %2615 = vrot.lane.b32.xlu0 %v2612, 127
          %v2616 = vpop.permute.xlu0 %2615
          %2617 = vrot.lane.b32.xlu0 %v2613, 127
          %v2618 = vpop.permute.xlu0 %2617
          %2619 = vrot.lane.b32.xlu0 %v2614, 127
          %v2620 = vpop.permute.xlu0 %2619
          %v2621 = vmul.f32 %v520, %v2616
          %v2622 = vmul.f32 %v521, %v2618
          %v2623 = vmul.f32 %v522, %v2620
          %v2624 = vmul.f32 %v524, %v2612
          %v2625 = vmul.f32 %v525, %v2613
          %v2626 = vmul.f32 %v526, %v2614
          %2627 = vrot.lane.b32.xlu0 %v2612, 1
          %v2628 = vpop.permute.xlu0 %2627
          %2629 = vrot.lane.b32.xlu0 %v2613, 1
          %v2630 = vpop.permute.xlu0 %2629
          %2631 = vrot.lane.b32.xlu0 %v2614, 1
          %v2632 = vpop.permute.xlu0 %2631
          %v2633 = vmul.f32 %v528, %v2628
          %v2634 = vmul.f32 %v529, %v2630
          %v2635 = vmul.f32 %v530, %v2632
          %2636 = vrot.lane.b32.xlu0 %v2609, 127
          %v2637 = vpop.permute.xlu0 %2636
          %2638 = vrot.lane.b32.xlu0 %v2610, 127
          %v2639 = vpop.permute.xlu0 %2638
          %2640 = vrot.lane.b32.xlu0 %v2611, 127
          %v2641 = vpop.permute.xlu0 %2640
          %v2642 = vmul.f32 %v532, %v2637
          %v2643 = vmul.f32 %v533, %v2639
          %v2644 = vmul.f32 %v534, %v2641
          %v2645 = vmul.f32 %v536, %v2609
          %v2646 = vmul.f32 %v537, %v2610
          %v2647 = vmul.f32 %v538, %v2611
          %2648 = vrot.lane.b32.xlu0 %v2609, 1
          %v2649 = vpop.permute.xlu0 %2648
          %2650 = vrot.lane.b32.xlu0 %v2610, 1
          %v2651 = vpop.permute.xlu0 %2650
          %2652 = vrot.lane.b32.xlu0 %v2611, 1
          %v2653 = vpop.permute.xlu0 %2652
          %v2654 = vmul.f32 %v540, %v2649
          %v2655 = vmul.f32 %v541, %v2651
          %v2656 = vmul.f32 %v542, %v2653
          %2657 = vrot.lane.b32.xlu0 %v2606, 127
          %v2658 = vpop.permute.xlu0 %2657
          %2659 = vrot.lane.b32.xlu0 %v2607, 127
          %v2660 = vpop.permute.xlu0 %2659
          %2661 = vrot.lane.b32.xlu0 %v2608, 127
          %v2662 = vpop.permute.xlu0 %2661
          %v2663 = vmul.f32 %v544, %v2658
          %v2664 = vmul.f32 %v545, %v2660
          %v2665 = vmul.f32 %v546, %v2662
          %v2666 = vmul.f32 %v548, %v2606
          %v2667 = vmul.f32 %v549, %v2607
          %v2668 = vmul.f32 %v550, %v2608
          %2669 = vrot.lane.b32.xlu0 %v2606, 1
          %v2670 = vpop.permute.xlu0 %2669
          %2671 = vrot.lane.b32.xlu0 %v2607, 1
          %v2672 = vpop.permute.xlu0 %2671
          %2673 = vrot.lane.b32.xlu0 %v2608, 1
          %v2674 = vpop.permute.xlu0 %2673
          %v2675 = vmul.f32 %v552, %v2670
          %v2676 = vmul.f32 %v553, %v2672
          %v2677 = vmul.f32 %v554, %v2674
          %v2678 = vadd.f32 %v2621, %v2624
          %v2679 = vadd.f32 %v2622, %v2625
          %v2680 = vadd.f32 %v2623, %v2626
          %v2681 = vadd.f32 %v2633, %v2642
          %v2682 = vadd.f32 %v2634, %v2643
          %v2683 = vadd.f32 %v2635, %v2644
          %v2684 = vadd.f32 %v2645, %v2654
          %v2685 = vadd.f32 %v2646, %v2655
          %v2686 = vadd.f32 %v2647, %v2656
          %v2687 = vadd.f32 %v2663, %v2666
          %v2688 = vadd.f32 %v2664, %v2667
          %v2689 = vadd.f32 %v2665, %v2668
          %v2690 = vadd.f32 %v2678, %v2681
          %v2691 = vadd.f32 %v2679, %v2682
          %v2692 = vadd.f32 %v2680, %v2683
          %v2693 = vadd.f32 %v2684, %v2687
          %v2694 = vadd.f32 %v2685, %v2688
          %v2695 = vadd.f32 %v2686, %v2689
          %v2696 = vadd.f32 %v2690, %v2693
          %v2697 = vadd.f32 %v2691, %v2694
          %v2698 = vadd.f32 %v2692, %v2695
          %v2699 = vadd.f32 %v2696, %v2675
          %v2700 = vadd.f32 %v2697, %v2676
          %v2701 = vadd.f32 %v2698, %v2677
          %v2702 = vmul.f32 %v1841, %v2699
          %v2703 = vmul.f32 %v1841, %v2700
          %v2704 = vmul.f32 %v1841, %v2701
          %v2705 = vadd.f32 %v2600, %v2702
          %v2706 = vadd.f32 %v2601, %v2703
          %v2707 = vadd.f32 %v2602, %v2704
          %v2708 = vmul.f32 %v691, %v2705
          %v2709 = vmul.f32 %v692, %v2706
          %v2710 = vmul.f32 %v693, %v2707
          %v2711 = vsub.f32 %v975, %v2708
          %v2712 = vsub.f32 %v976, %v2709
          %v2713 = vsub.f32 %v977, %v2710
        $region59: #{wiener_kpn_sa_forward.1} parent=52 // pred_fallthru
          %v2714 = vphi 0, %v2711
          %v2715 = vphi 0, %v2712
          %v2716 = vphi 0, %v2713
        %p2717 = pneg %p1953
        // Predicated region
        $region60: #{wiener_kpn_sa_forward.1} parent=52 // pred_check
          _
        $region61: #{wiener_kpn_sa_forward.1} parent=52 // pred_check_branch
          %2719 = sbr.rel (%p1953) target = $region63
        $region62: #{wiener_kpn_sa_forward.1} parent=52 // pred_region
          %v2720 = vmul.f32 %v1945, %v1848
          %v2721 = vmul.f32 %v1945, %v1849
          %v2722 = vmul.f32 %v1945, %v1850
          %v2723 = vsub.f32 %v1083, %v2720
          %v2724 = vsub.f32 %v1084, %v2721
          %v2725 = vsub.f32 %v1085, %v2722
        $region63: #{wiener_kpn_sa_forward.1} parent=52 // pred_fallthru
          %v2726 = vphi %v2714, %v2723
          %v2727 = vphi %v2715, %v2724
          %v2728 = vphi %v2716, %v2725
        %v2729 = vmul.f32 %v2726, %v2726
        %v2730 = vmul.f32 %v2727, %v2727
        %v2731 = vmul.f32 %v2728, %v2728
        %v2732 = vadd.f32 %v2729, %v2730
        %v2733 = vsel %vm982, %v2731, 0.0
        %v2734 = vadd.f32 %v2732, %v2733
        %v2735 = vrot.slane %v2734, 4
        %v2736 = vadd.f32 %v2734, %v2735
        %v2737 = vrot.slane %v2736, 2
        %v2738 = vadd.f32 %v2736, %v2737
        %v2739 = vrot.slane %v2738, 1
        %v2740 = vadd.f32 %v2738, %v2739
        %2741 = vmatprep.subr.mxu0 0.0
        %2742 = vmatpush1.msra.mxu0 %v344
        %2743 = vmatprep.subr.mxu0 0.0
        %2744 = vmatpush1.msra.mxu0 %v345
        %2745 = vmatprep.subr.mxu0 0.0
        %2746 = vmatpush1.msra.mxu0 %v346
        %2747 = vmatprep.subr.mxu0 0.0
        %2748 = vmatpush1.msra.mxu0 %v347
        %2749 = vmatprep.subr.mxu0 0.0
        %2750 = vmatpush1.msra.mxu0 %v348
        %2751 = vmatprep.subr.mxu0 0.0
        %2752 = vmatpush1.msra.mxu0 %v349
        %2753 = vmatprep.subr.mxu0 0.0
        %2754 = vmatpush1.msra.mxu0 %v350
        %2755 = vmatprep.subr.mxu0 0.0
        %2756 = vmatpush1.msra.mxu0 %v351
        %2757 = vmatprep.subr.mxu0 0.0
        %2758 = vmatpush1.msra.mxu0 %v352
        %2759 = vmatprep.subr.mxu0 0.0
        %2760 = vmatpush1.msra.mxu0 %v353
        %2761 = vmatprep.subr.mxu0 0.0
        %2762 = vmatpush1.msra.mxu0 %v354
        %2763 = vmatprep.subr.mxu0 0.0
        %2764 = vmatpush1.msra.mxu0 %v355
        %2765 = vmatprep.subr.mxu0 0.0
        %2766 = vmatpush1.msra.mxu0 %v356
        %2767 = vmatprep.subr.mxu0 0.0
        %2768 = vmatpush1.msra.mxu0 %v357
        %2769 = vmatprep.subr.mxu0 0.0
        %2770 = vmatpush1.msra.mxu0 %v358
        %2771 = vmatprep.subr.mxu0 0.0
        %2772 = vmatpush1.msra.mxu0 %v359
        %2773 = vmatprep.subr.mxu0 0.0
        %2774 = vmatpush1.msra.mxu0 0.0
        %2775 = vmatprep.subr.mxu0 0.0
        %2776 = vmatpush1.msra.mxu0 0.0
        %2777 = vmatprep.subr.mxu0 0.0
        %2778 = vmatpush1.msra.mxu0 0.0
        %2779 = vmatprep.subr.mxu0 0.0
        %2780 = vmatpush1.msra.mxu0 0.0
        %2781 = vmatprep.subr.mxu0 0.0
        %2782 = vmatpush1.msra.mxu0 0.0
        %2783 = vmatprep.subr.mxu0 0.0
        %2784 = vmatpush1.msra.mxu0 0.0
        %2785 = vmatprep.subr.mxu0 0.0
        %2786 = vmatpush1.msra.mxu0 0.0
        %2787 = vmatprep.subr.mxu0 0.0
        %2788 = vmatpush1.msra.mxu0 0.0
        %2789 = vmatprep.subr.mxu0 0.0
        %2790 = vmatpush1.msra.mxu0 0.0
        %2791 = vmatprep.subr.mxu0 0.0
        %2792 = vmatpush1.msra.mxu0 0.0
        %2793 = vmatprep.subr.mxu0 0.0
        %2794 = vmatpush1.msra.mxu0 0.0
        %2795 = vmatprep.subr.mxu0 0.0
        %2796 = vmatpush1.msra.mxu0 0.0
        %2797 = vmatprep.subr.mxu0 0.0
        %2798 = vmatpush1.msra.mxu0 0.0
        %2799 = vmatprep.subr.mxu0 0.0
        %2800 = vmatpush1.msra.mxu0 0.0
        %2801 = vmatprep.subr.mxu0 0.0
        %2802 = vmatpush1.msra.mxu0 0.0
        %2803 = vmatprep.subr.mxu0 0.0
        %2804 = vmatpush1.msra.mxu0 0.0
        %2805 = vmatprep.mubr.f32.mxu0 0.0
        %2806 = vmatmul.mubr.f32.gmra.mrb[0].mxu0 %v2740
        %v2807 = vpop.f32.mrb[0].mxu0
        %v2808 = vadd.f32 0.0, %v2807
        %v2809 = vpop.f32.mrb[0].mxu0
        %2810 = vdwg.mxu0
        %vm2811 = vcmp.le.f32.partialorder %v2808, %v1061
        %v2812 = vsel %vm2811, 1, 0
        %v2813 = vcvt.s32.f32 %v2812
        %v2814 = vmax.f32 %v1936, %v2813
        %vm2815 = vcmp.eq.f32.partialorder %v1089, 0.0
        %v2816 = vsel %vm2815, 1.0, %v1089
        %v2817 = vrcp.pop %v2816
        %v2818 = vmul.f32 %v2808, %v2817
        %v2819 = vsel %vm2815, 0.0, %v2818
        %v2820 = vlaneseq
        %v2821 = vshrl.u32 %v2820, 7
        %v2822 = vsub.s32 0, %v2821
        %v2823 = vrot.slane %v2819, %v2822
        %v2824 = vmul.f32 %v2823, %v1086
        %v2825 = vmul.f32 %v2823, %v1087
        %v2826 = vmul.f32 %v2823, %v1088
        %v2827 = vadd.f32 %v2726, %v2824
        %v2828 = vadd.f32 %v2727, %v2825
        %v2829 = vadd.f32 %v2728, %v2826
        %s2830 = sadd.s32 %s1077, 1
        %v2831 = vsel %vm1065, %v2814, inf
        %2832 = vmin.xlane.f32.xlu0 %v2831
        %v2833 = vpop.xlane.xlu0 %2832
        %v2834 = vrot.slane %v2833, 4
        %v2835 = vmin.f32 %v2833, %v2834
        %v2836 = vrot.slane %v2835, 2
        %v2837 = vmin.f32 %v2835, %v2836
        %v2838 = vrot.slane %v2837, 1
        %v2839 = vmin.f32 %v2837, %v2838
        %s2840 = vtos %v2839
      $region53: #{wiener_kpn_sa_forward.1} parent=47 // loop_footer
        _
      $region54: #{wiener_kpn_sa_forward.1} parent=47 // loop_footer_branch
        %1076 = sbr.rel target = $region50
      $region55: #{wiener_kpn_sa_forward.1} parent=47 // loop_exit
        _
      %2841 = vst [vmem:[%s339] sm:$0xff] %v1080
      %2842 = vst [vmem:[%s339 + $0x8] sm:$0xff] %v1081
      %2843 = vst [vmem:[%s339 + $0x10] sm:$0xf] %v1082
      %p2844 = scmp.lt.s32.totalorder %s19, 1
      %s2845 = scalar_select %p2844, %s19, 1
      %s2846 = smul.addr %s2845, 3
      %s2847 = smul.addr %s2846, 8
      %s2848 = scalar_lea.vmem %s7, %s2847
      // Predicated region
      $region64: #{wiener_kpn_sa_forward.1} parent=47 // pred_check
        %p2849 = pneg %p204
      $region65: #{wiener_kpn_sa_forward.1} parent=47 // pred_check_branch
        %2851 = sbr.rel (%p2849) target = $region67
      $region66: #{wiener_kpn_sa_forward.1} parent=47 // pred_region
        _
      $region67: #{wiener_kpn_sa_forward.1} parent=47 // pred_fallthru
        _
    $region48: #{wiener_kpn_sa_forward.1} parent=5 // pred_fallthru
      _
    %p2852 = scmp.le.s32.totalorder 2, %s14
    // Predicated region
    $region68: #{wiener_kpn_sa_forward.1} parent=5 // pred_check
      %p2853 = pneg %p2852
    $region69: #{wiener_kpn_sa_forward.1} parent=5 // pred_check_branch
      %2855 = sbr.rel (%p2853) target = $region71
    $region70: #{wiener_kpn_sa_forward.1} parent=5 // pred_region
      %s2856 = ssub.s32 %s14, 2
      // Predicated region
      $region72: #{wiener_kpn_sa_forward.1} parent=70 // pred_check
        %p2857 = pneg %p210
      $region73: #{wiener_kpn_sa_forward.1} parent=70 // pred_check_branch
        %2859 = sbr.rel (%p2857) target = $region75
      $region74: #{wiener_kpn_sa_forward.1} parent=70 // pred_region
        %p2860 = scmp.lt.s32.totalorder %s20, 1
        %s2861 = scalar_select %p2860, %s20, 1
        %s2862 = smul.addr %s2861, 3
        %s2863 = smul.addr %s2862, 8
        %s2864 = scalar_lea.vmem %s7, %s2863
      $region75: #{wiener_kpn_sa_forward.1} parent=70 // pred_fallthru
        _
    $region71: #{wiener_kpn_sa_forward.1} parent=5 // pred_fallthru
      _
  $region6: #{wiener_kpn_sa_forward.1} parent=0 // loop_footer
    %s18 = sadd.s32 1, %s14
  $region7: #{wiener_kpn_sa_forward.1} parent=0 // loop_footer_branch
    %13 = sbr.rel target = $region3
  $region8: #{wiener_kpn_sa_forward.1} parent=0 // loop_exit
    _

</llo_original>
